<compile_context>
chip_gen: v7x
topology: tpu7x:2x2x1
jax: 0.10.0
libtpu: 0.0.40
codegen_flags: <defaults>
</compile_context>

<pallas_src>
import jax
import jax.numpy as jnp
from jax.experimental import pallas as pl
from jax.experimental.pallas import tpu as pltpu


def _round_up(x, m):
    return (x + m - 1) // m * m


def generator_kernel(noise_ref, cond_ref,
                     w1_ref, b1_ref,
                     w2_ref, b2_ref,
                     w3a_ref, w3b_ref, b3_ref,
                     w4_ref, b4_ref,
                     out_ref):
    bf16 = jnp.bfloat16

    # noise branch: Linear(noise_size, 200) + ReLU   (bf16 MXU, f32 accumulate)
    h_n = jnp.dot(noise_ref[...].astype(bf16), w1_ref[...],
                  preferred_element_type=jnp.float32) + b1_ref[...]
    h_n = jnp.maximum(h_n, 0.0)

    # condition branch: Linear(condition_size, 1000) + ReLU
    h_c = jnp.dot(cond_ref[...].astype(bf16), w2_ref[...],
                  preferred_element_type=jnp.float32) + b2_ref[...]
    h_c = jnp.maximum(h_c, 0.0)

    # concat + Linear(1200, 1200) + ReLU   (concat folded into split matmul)
    h = (jnp.dot(h_n.astype(bf16), w3a_ref[...],
                 preferred_element_type=jnp.float32)
         + jnp.dot(h_c.astype(bf16), w3b_ref[...],
                   preferred_element_type=jnp.float32)
         + b3_ref[...])
    h = jnp.maximum(h, 0.0)

    # Linear(1200, out_size) + Sigmoid
    logits = jnp.dot(h.astype(bf16), w4_ref[...],
                     preferred_element_type=jnp.float32) + b4_ref[...]
    out_ref[...] = jax.nn.sigmoid(logits)


def generator_forward(noise, condition, params, out_size):
    """noise/condition: f32 [B, *]. params: padded bf16 weights + f32 biases."""
    B = noise.shape[0]
    out_pad = params["w4"].shape[1]

    # Batch tile: fill MXU rows for large batches; one aligned tile otherwise.
    bm = 128 if B >= 128 else _round_up(B, 8)
    B_pad = _round_up(B, bm)
    if B_pad != B:
        noise = jnp.pad(noise, ((0, B_pad - B), (0, 0)))
        condition = jnp.pad(condition, ((0, B_pad - B), (0, 0)))

    weights = (params["w1"], params["b1"],
               params["w2"], params["b2"],
               params["w3a"], params["w3b"], params["b3"],
               params["w4"], params["b4"])

    def resident(shape):
        # Constant index_map: weight block never changes -> stays in VMEM.
        return pl.BlockSpec(shape, lambda i, s=len(shape): (0,) * s)

    in_specs = ([pl.BlockSpec((bm, noise.shape[1]), lambda i: (i, 0)),
                 pl.BlockSpec((bm, condition.shape[1]), lambda i: (i, 0))]
                + [resident(w.shape) for w in weights])
    out_specs = pl.BlockSpec((bm, out_pad), lambda i: (i, 0))

    out = pl.pallas_call(
        generator_kernel,
        out_shape=jax.ShapeDtypeStruct((B_pad, out_pad), jnp.float32),
        grid=(B_pad // bm,),
        in_specs=in_specs,
        out_specs=out_specs,
        compiler_params=pltpu.CompilerParams(
            dimension_semantics=("parallel",),
            vmem_limit_bytes=24 << 20),
    )(noise, condition, *weights)

    return out[:B, :out_size]


def init_params(key, noise_size, condition_size, out_size):
    """Synthetic PyTorch-Linear-style params, transposed to [in, out],
    zero-padded to lane-friendly shapes, weights cast to bfloat16."""
    ks = jax.random.split(key, 8)

    def linear(kw, kb, fan_in, fan_out):
        bound = 1.0 / jnp.sqrt(fan_in)
        w = jax.random.uniform(kw, (fan_in, fan_out), jnp.float32, -bound, bound)
        b = jax.random.uniform(kb, (1, fan_out), jnp.float32, -bound, bound)
        return w, b

    w1, b1 = linear(ks[0], ks[1], noise_size, 200)
    w2, b2 = linear(ks[2], ks[3], condition_size, 1000)
    w3, b3 = linear(ks[4], ks[5], 1200, 1200)
    w4, b4 = linear(ks[6], ks[7], 1200, out_size)

    H1, H2, H3 = 256, 1024, 1280          # 200 / 1000 / 1200 lane-padded
    OUT_P = _round_up(out_size, 128)

    def pad_w(w, rows, cols):
        w = jnp.pad(w, ((0, rows - w.shape[0]), (0, cols - w.shape[1])))
        return w.astype(jnp.bfloat16)

    def pad_b(b, cols):
        return jnp.pad(b, ((0, 0), (0, cols - b.shape[1])))

    return {
        "w1": pad_w(w1, noise_size, H1), "b1": pad_b(b1, H1),
        "w2": pad_w(w2, condition_size, H2), "b2": pad_b(b2, H2),
        "w3a": pad_w(w3[:200, :], H1, H3),   # rows multiplying the noise branch
        "w3b": pad_w(w3[200:, :], H2, H3),   # rows multiplying the cond branch
        "b3": pad_b(b3, H3),
        "w4": pad_w(w4, H3, OUT_P), "b4": pad_b(b4, OUT_P),
    }


def reference_forward(noise, condition, params, out_size):
    """Pure-JAX reference (eval-mode dropout = identity), f32 math on the
    same bf16-rounded weights the kernel consumes."""
    f32 = lambda w: w.astype(jnp.float32)
    h_n = jnp.maximum(noise @ f32(params["w1"]) + params["b1"], 0.0)
    h_c = jnp.maximum(condition @ f32(params["w2"]) + params["b2"], 0.0)
    h = jnp.maximum(h_n @ f32(params["w3a"]) + h_c @ f32(params["w3b"])
                    + params["b3"], 0.0)
    out = jax.nn.sigmoid(h @ f32(params["w4"]) + params["b4"])
    return out[:, :out_size]


if __name__ == "__main__":
    B = 8
    noise_size, condition_size, out_size = 32, 16, 64

    key = jax.random.PRNGKey(0)
    k_noise, k_cond, k_params = jax.random.split(key, 3)

    noise = jax.random.normal(k_noise, (B, noise_size), jnp.float32)
    condition = jax.random.normal(k_cond, (B, condition_size), jnp.float32)
    params = init_params(k_params, noise_size, condition_size, out_size)

    out = generator_forward(noise, condition, params, out_size)
    out = jax.block_until_ready(out)

    ref = reference_forward(noise, condition, params, out_size)
    assert out.shape == (B, out_size)
    # bf16 weights + bf16 matmul operands vs f32 reference: loosened tolerance.
    assert jnp.allclose(out, ref, atol=2e-2), float(jnp.max(jnp.abs(out - ref)))

    print("KERNEL_OK")
</pallas_src>

<mosaic_0001>
module attributes {stable_mosaic.version = 11 : i64} {
  func.func @generator_kernel(%arg0: i32, %arg1: memref<8x32xf32, #tpu.memory_space<vmem>>, %arg2: memref<8x16xf32, #tpu.memory_space<vmem>>, %arg3: memref<32x256xbf16, #tpu.memory_space<vmem>>, %arg4: memref<1x256xf32, #tpu.memory_space<vmem>>, %arg5: memref<16x1024xbf16, #tpu.memory_space<vmem>>, %arg6: memref<1x1024xf32, #tpu.memory_space<vmem>>, %arg7: memref<256x1280xbf16, #tpu.memory_space<vmem>>, %arg8: memref<1024x1280xbf16, #tpu.memory_space<vmem>>, %arg9: memref<1x1280xf32, #tpu.memory_space<vmem>>, %arg10: memref<1280x128xbf16, #tpu.memory_space<vmem>>, %arg11: memref<1x128xf32, #tpu.memory_space<vmem>>, %arg12: memref<8x128xf32, #tpu.memory_space<vmem>>) attributes {dimension_semantics = [#tpu.dimension_semantics<parallel>], iteration_bounds = array<i64: 1>, scalar_prefetch = 0 : i64, scratch_operands = 0 : i64, tpu.core_type = #tpu.core_type<tc>, window_params = [{transform_indices = @transform_0, window_bounds = array<i64: 8, 32>}, {transform_indices = @transform_1, window_bounds = array<i64: 8, 16>}, {pipeline_mode = #tpu.pipeline_mode<synchronous>, transform_indices = @transform_2, window_bounds = array<i64: 32, 256>}, {pipeline_mode = #tpu.pipeline_mode<synchronous>, transform_indices = @transform_3, window_bounds = array<i64: 1, 256>}, {pipeline_mode = #tpu.pipeline_mode<synchronous>, transform_indices = @transform_4, window_bounds = array<i64: 16, 1024>}, {pipeline_mode = #tpu.pipeline_mode<synchronous>, transform_indices = @transform_5, window_bounds = array<i64: 1, 1024>}, {pipeline_mode = #tpu.pipeline_mode<synchronous>, transform_indices = @transform_6, window_bounds = array<i64: 256, 1280>}, {pipeline_mode = #tpu.pipeline_mode<synchronous>, transform_indices = @transform_7, window_bounds = array<i64: 1024, 1280>}, {pipeline_mode = #tpu.pipeline_mode<synchronous>, transform_indices = @transform_8, window_bounds = array<i64: 1, 1280>}, {pipeline_mode = #tpu.pipeline_mode<synchronous>, transform_indices = @transform_9, window_bounds = array<i64: 1280, 128>}, {pipeline_mode = #tpu.pipeline_mode<synchronous>, transform_indices = @transform_10, window_bounds = array<i64: 1, 128>}, {transform_indices = @transform_11, window_bounds = array<i64: 8, 128>}]} {
    %c0 = arith.constant 0 : index
    %c0_0 = arith.constant 0 : index
    %0 = vector.load %arg1[%c0, %c0_0] : memref<8x32xf32, #tpu.memory_space<vmem>>, vector<8x32xf32>
    %1 = arith.truncf %0 : vector<8x32xf32> to vector<8x32xbf16>
    %c0_1 = arith.constant 0 : index
    %c0_2 = arith.constant 0 : index
    %2 = vector.load %arg3[%c0_1, %c0_2] : memref<32x256xbf16, #tpu.memory_space<vmem>>, vector<32x256xbf16>
    %cst = arith.constant dense<0.000000e+00> : vector<8x256xf32>
    %3 = tpu.matmul %1, %2, %cst {dimension_numbers = #tpu.dot_dimension_numbers<[1], [0], [0], [1], [0, 0, 1, 1], [], []>} : vector<8x32xbf16>, vector<32x256xbf16>, vector<8x256xf32> -> vector<8x256xf32>
    %c0_3 = arith.constant 0 : index
    %c0_4 = arith.constant 0 : index
    %4 = vector.load %arg4[%c0_3, %c0_4] : memref<1x256xf32, #tpu.memory_space<vmem>>, vector<1x256xf32>
    %5 = vector.broadcast %4 : vector<1x256xf32> to vector<8x256xf32>
    %6 = arith.addf %3, %5 : vector<8x256xf32>
    %cst_5 = arith.constant 0.000000e+00 : f32
    %7 = vector.broadcast %cst_5 : f32 to vector<8x256xf32>
    %8 = arith.maximumf %6, %7 : vector<8x256xf32>
    %c0_6 = arith.constant 0 : index
    %c0_7 = arith.constant 0 : index
    %9 = vector.load %arg2[%c0_6, %c0_7] : memref<8x16xf32, #tpu.memory_space<vmem>>, vector<8x16xf32>
    %10 = arith.truncf %9 : vector<8x16xf32> to vector<8x16xbf16>
    %c0_8 = arith.constant 0 : index
    %c0_9 = arith.constant 0 : index
    %11 = vector.load %arg5[%c0_8, %c0_9] : memref<16x1024xbf16, #tpu.memory_space<vmem>>, vector<16x1024xbf16>
    %cst_10 = arith.constant dense<0.000000e+00> : vector<8x1024xf32>
    %12 = tpu.matmul %10, %11, %cst_10 {dimension_numbers = #tpu.dot_dimension_numbers<[1], [0], [0], [1], [0, 0, 1, 1], [], []>} : vector<8x16xbf16>, vector<16x1024xbf16>, vector<8x1024xf32> -> vector<8x1024xf32>
    %c0_11 = arith.constant 0 : index
    %c0_12 = arith.constant 0 : index
    %13 = vector.load %arg6[%c0_11, %c0_12] : memref<1x1024xf32, #tpu.memory_space<vmem>>, vector<1x1024xf32>
    %14 = vector.broadcast %13 : vector<1x1024xf32> to vector<8x1024xf32>
    %15 = arith.addf %12, %14 : vector<8x1024xf32>
    %cst_13 = arith.constant 0.000000e+00 : f32
    %16 = vector.broadcast %cst_13 : f32 to vector<8x1024xf32>
    %17 = arith.maximumf %15, %16 : vector<8x1024xf32>
    %18 = arith.truncf %8 : vector<8x256xf32> to vector<8x256xbf16>
    %c0_14 = arith.constant 0 : index
    %c0_15 = arith.constant 0 : index
    %19 = vector.load %arg7[%c0_14, %c0_15] : memref<256x1280xbf16, #tpu.memory_space<vmem>>, vector<256x1280xbf16>
    %cst_16 = arith.constant dense<0.000000e+00> : vector<8x1280xf32>
    %20 = tpu.matmul %18, %19, %cst_16 {dimension_numbers = #tpu.dot_dimension_numbers<[1], [0], [0], [1], [0, 0, 1, 1], [], []>} : vector<8x256xbf16>, vector<256x1280xbf16>, vector<8x1280xf32> -> vector<8x1280xf32>
    %21 = arith.truncf %17 : vector<8x1024xf32> to vector<8x1024xbf16>
    %c0_17 = arith.constant 0 : index
    %c0_18 = arith.constant 0 : index
    %22 = vector.load %arg8[%c0_17, %c0_18] : memref<1024x1280xbf16, #tpu.memory_space<vmem>>, vector<1024x1280xbf16>
    %cst_19 = arith.constant dense<0.000000e+00> : vector<8x1280xf32>
    %23 = tpu.matmul %21, %22, %cst_19 {dimension_numbers = #tpu.dot_dimension_numbers<[1], [0], [0], [1], [0, 0, 1, 1], [], []>} : vector<8x1024xbf16>, vector<1024x1280xbf16>, vector<8x1280xf32> -> vector<8x1280xf32>
    %24 = arith.addf %20, %23 : vector<8x1280xf32>
    %c0_20 = arith.constant 0 : index
    %c0_21 = arith.constant 0 : index
    %25 = vector.load %arg9[%c0_20, %c0_21] : memref<1x1280xf32, #tpu.memory_space<vmem>>, vector<1x1280xf32>
    %26 = vector.broadcast %25 : vector<1x1280xf32> to vector<8x1280xf32>
    %27 = arith.addf %24, %26 : vector<8x1280xf32>
    %cst_22 = arith.constant 0.000000e+00 : f32
    %28 = vector.broadcast %cst_22 : f32 to vector<8x1280xf32>
    %29 = arith.maximumf %27, %28 : vector<8x1280xf32>
    %30 = arith.truncf %29 : vector<8x1280xf32> to vector<8x1280xbf16>
    %c0_23 = arith.constant 0 : index
    %c0_24 = arith.constant 0 : index
    %31 = vector.load %arg10[%c0_23, %c0_24] : memref<1280x128xbf16, #tpu.memory_space<vmem>>, vector<1280x128xbf16>
    %cst_25 = arith.constant dense<0.000000e+00> : vector<8x128xf32>
    %32 = tpu.matmul %30, %31, %cst_25 {dimension_numbers = #tpu.dot_dimension_numbers<[1], [0], [0], [1], [0, 0, 1, 1], [], []>} : vector<8x1280xbf16>, vector<1280x128xbf16>, vector<8x128xf32> -> vector<8x128xf32>
    %c0_26 = arith.constant 0 : index
    %c0_27 = arith.constant 0 : index
    %33 = vector.load %arg11[%c0_26, %c0_27] : memref<1x128xf32, #tpu.memory_space<vmem>>, vector<1x128xf32>
    %34 = vector.broadcast %33 : vector<1x128xf32> to vector<8x128xf32>
    %35 = arith.addf %32, %34 : vector<8x128xf32>
    %36 = arith.negf %35 : vector<8x128xf32>
    %37 = math.exp %36 : vector<8x128xf32>
    %cst_28 = arith.constant 1.000000e+00 : f32
    %38 = vector.broadcast %cst_28 : f32 to vector<8x128xf32>
    %39 = arith.addf %38, %37 : vector<8x128xf32>
    %40 = arith.divf %38, %39 : vector<8x128xf32>
    %c0_29 = arith.constant 0 : index
    %c0_30 = arith.constant 0 : index
    %41 = vector.load %arg12[%c0_29, %c0_30] : memref<8x128xf32, #tpu.memory_space<vmem>>, vector<8x128xf32>
    tpu.vector_store %arg12[%c0_29, %c0_30], %40 {strides = array<i32>} : memref<8x128xf32, #tpu.memory_space<vmem>>, vector<8x128xf32>,
    return
  }
  func.func @transform_0(%arg0: i32) -> (i32, i32) {
    %c0_i32 = arith.constant 0 : i32
    %c0_i32_0 = arith.constant 0 : i32
    return %arg0, %c0_i32 : i32, i32
  }
  func.func @transform_1(%arg0: i32) -> (i32, i32) {
    %c0_i32 = arith.constant 0 : i32
    %c0_i32_0 = arith.constant 0 : i32
    return %arg0, %c0_i32 : i32, i32
  }
  func.func @transform_2(%arg0: i32) -> (i32, i32) {
    %c0_i32 = arith.constant 0 : i32
    %c0_i32_0 = arith.constant 0 : i32
    %c0_i32_1 = arith.constant 0 : i32
    return %c0_i32, %c0_i32_0 : i32, i32
  }
  func.func @transform_3(%arg0: i32) -> (i32, i32) {
    %c0_i32 = arith.constant 0 : i32
    %c0_i32_0 = arith.constant 0 : i32
    %c0_i32_1 = arith.constant 0 : i32
    return %c0_i32, %c0_i32_0 : i32, i32
  }
  func.func @transform_4(%arg0: i32) -> (i32, i32) {
    %c0_i32 = arith.constant 0 : i32
    %c0_i32_0 = arith.constant 0 : i32
    %c0_i32_1 = arith.constant 0 : i32
    return %c0_i32, %c0_i32_0 : i32, i32
  }
  func.func @transform_5(%arg0: i32) -> (i32, i32) {
    %c0_i32 = arith.constant 0 : i32
    %c0_i32_0 = arith.constant 0 : i32
    %c0_i32_1 = arith.constant 0 : i32
    return %c0_i32, %c0_i32_0 : i32, i32
  }
  func.func @transform_6(%arg0: i32) -> (i32, i32) {
    %c0_i32 = arith.constant 0 : i32
    %c0_i32_0 = arith.constant 0 : i32
    %c0_i32_1 = arith.constant 0 : i32
    return %c0_i32, %c0_i32_0 : i32, i32
  }
  func.func @transform_7(%arg0: i32) -> (i32, i32) {
    %c0_i32 = arith.constant 0 : i32
    %c0_i32_0 = arith.constant 0 : i32
    %c0_i32_1 = arith.constant 0 : i32
    return %c0_i32, %c0_i32_0 : i32, i32
  }
  func.func @transform_8(%arg0: i32) -> (i32, i32) {
    %c0_i32 = arith.constant 0 : i32
    %c0_i32_0 = arith.constant 0 : i32
    %c0_i32_1 = arith.constant 0 : i32
    return %c0_i32, %c0_i32_0 : i32, i32
  }
  func.func @transform_9(%arg0: i32) -> (i32, i32) {
    %c0_i32 = arith.constant 0 : i32
    %c0_i32_0 = arith.constant 0 : i32
    %c0_i32_1 = arith.constant 0 : i32
    return %c0_i32, %c0_i32_0 : i32, i32
  }
  func.func @transform_10(%arg0: i32) -> (i32, i32) {
    %c0_i32 = arith.constant 0 : i32
    %c0_i32_0 = arith.constant 0 : i32
    %c0_i32_1 = arith.constant 0 : i32
    return %c0_i32, %c0_i32_0 : i32, i32
  }
  func.func @transform_11(%arg0: i32) -> (i32, i32) {
    %c0_i32 = arith.constant 0 : i32
    %c0_i32_0 = arith.constant 0 : i32
    return %arg0, %c0_i32 : i32, i32
  }
}

</mosaic_0001>

<llo_original>
// kernel: tpu_custom_call.1
$region0: #{tpu_custom_call.1}
  #allocation0 [shape = 'u32[]', space=smem, size = 0x4, offset = 0x4, fixed_abs, tag = 'smem constant byte address 0x4 - core index']
  #allocation1 [shape = 'u32[144,128]{1,0:T(1,128)}', space=vmem, size = 0x12000, scoped, tag = 'internal scratch']
  %s0 = inlined_call_operand.hbm [shape: f32[8,32], index: 0, kind: input, shape index: {}]
  %s1 = inlined_call_operand.hbm [shape: f32[8,16], index: 1, kind: input, shape index: {}]
  %s2 = inlined_call_operand.hbm [shape: bf16[32,256], index: 2, kind: input, shape index: {}]
  %s3 = inlined_call_operand.hbm [shape: f32[1,256], index: 3, kind: input, shape index: {}]
  %s4 = inlined_call_operand.hbm [shape: bf16[16,1024], index: 4, kind: input, shape index: {}]
  %s5 = inlined_call_operand.hbm [shape: f32[1,1024], index: 5, kind: input, shape index: {}]
  %s6 = inlined_call_operand.hbm [shape: bf16[256,1280], index: 6, kind: input, shape index: {}]
  %s7 = inlined_call_operand.hbm [shape: bf16[1024,1280], index: 7, kind: input, shape index: {}]
  %s8 = inlined_call_operand.hbm [shape: f32[1,1280], index: 8, kind: input, shape index: {}]
  %s9 = inlined_call_operand.hbm [shape: bf16[1280,128], index: 9, kind: input, shape index: {}]
  %s10 = inlined_call_operand.hbm [shape: f32[1,128], index: 10, kind: input, shape index: {}]
  %s11 = inlined_call_operand.hbm [shape: f32[8,128], index: 11, kind: output, shape index: {}]
  %s12 = sld [smem:[#allocation0]]
  $region98: #{tpu_custom_call.1} parent=0
    _
  %s14 = ssub.s32 1, %s12
  %s15 = scalar_select 0, %s14, %s12
  $region1: #{tpu_custom_call.1} parent=0
    #allocation2 [shape = 'u8[4096]{0}', space=vmem, size = 0x1000, scoped, tag = 'input window, operand 0, single buffered']
    #allocation3 [shape = 's32[1]{0}', space=sflag, size = 0x4, scoped, tag = 'scoped memory for tpu_custom_call.1']
    #allocation4 [shape = 's32[1]{0}', space=sflag, size = 0x4, scoped, tag = 'scoped memory for tpu_custom_call.1']
    #allocation5 [shape = 'u8[4096]{0}', space=vmem, size = 0x1000, scoped, tag = 'input window, operand 1, single buffered']
    #allocation6 [shape = 's32[1]{0}', space=sflag, size = 0x4, scoped, tag = 'scoped memory for tpu_custom_call.1']
    #allocation7 [shape = 'u8[16384]{0}', space=vmem, size = 0x4000, scoped, tag = 'input window, operand 2, single buffered']
    #allocation8 [shape = 'u8[1024]{0}', space=vmem, size = 0x400, scoped, tag = 'input window, operand 3, single buffered']
    #allocation9 [shape = 's32[1]{0}', space=sflag, size = 0x4, scoped, tag = 'scoped memory for tpu_custom_call.1']
    #allocation10 [shape = 'u8[32768]{0}', space=vmem, size = 0x8000, scoped, tag = 'input window, operand 4, single buffered']
    #allocation11 [shape = 'u8[4096]{0}', space=vmem, size = 0x1000, scoped, tag = 'input window, operand 5, single buffered']
    #allocation12 [shape = 's32[1]{0}', space=sflag, size = 0x4, scoped, tag = 'scoped memory for tpu_custom_call.1']
    #allocation13 [shape = 'u8[655360]{0}', space=vmem, size = 0xa0000, scoped, tag = 'input window, operand 6, single buffered']
    #allocation14 [shape = 'u8[2621440]{0}', space=vmem, size = 0x280000, scoped, tag = 'input window, operand 7, single buffered']
    #allocation15 [shape = 's32[1]{0}', space=sflag, size = 0x4, scoped, tag = 'scoped memory for tpu_custom_call.1']
    #allocation16 [shape = 'u8[5120]{0}', space=vmem, size = 0x1400, scoped, tag = 'input window, operand 8, single buffered']
    #allocation17 [shape = 'u8[327680]{0}', space=vmem, size = 0x50000, scoped, tag = 'input window, operand 9, single buffered']
    #allocation18 [shape = 's32[1]{0}', space=sflag, size = 0x4, scoped, tag = 'scoped memory for tpu_custom_call.1']
    #allocation19 [shape = 'u8[512]{0}', space=vmem, size = 0x400, scoped, tag = 'input window, operand 10, single buffered']
    #allocation20 [shape = 'u8[4096]{0}', space=vmem, size = 0x1000, scoped, tag = 'output window, operand 0, single buffered']
    %16 = vsyncpa [#allocation3], 0
    %17 = vsyncpa [#allocation6], 0
    %18 = vsyncpa [#allocation9], 0
    %19 = vsyncpa [#allocation12], 0
    %20 = vsyncpa [#allocation15], 0
    %21 = vsyncpa [#allocation18], 0
    %22 = vsyncpa [#allocation4], 0
    // Predicated region
    $region2: #{tpu_custom_call.1} parent=1 // pred_check
      _
    $region3: #{tpu_custom_call.1} parent=1 // pred_check_branch
      %24 = sbr.rel (0) target = $region5
    $region4: #{tpu_custom_call.1} parent=1 // pred_region
      %s26 = ssub.s32 128, 128
      %27 = vsyncadd [#allocation3], %s26
      %s29 = sshll.u32 [#allocation2], 4
      %s30 = int_to_ptr.vmem [resolvable:$true] %s29
      %32 = dma.hbm_to_vmem [thread:$0]  %s0, 128, %s30, [#allocation3]
    $region5: #{tpu_custom_call.1} parent=1 // pred_fallthru
      _
    // Predicated region
    $region6: #{tpu_custom_call.1} parent=1 // pred_check
      _
    $region7: #{tpu_custom_call.1} parent=1 // pred_check_branch
      %34 = sbr.rel (0) target = $region9
    $region8: #{tpu_custom_call.1} parent=1 // pred_region
      %s36 = ssub.s32 128, 128
      %37 = vsyncadd [#allocation6], %s36
      %s39 = sshll.u32 [#allocation5], 4
      %s40 = int_to_ptr.vmem [resolvable:$true] %s39
      %42 = dma.hbm_to_vmem [thread:$0]  %s1, 128, %s40, [#allocation6]
    $region9: #{tpu_custom_call.1} parent=1 // pred_fallthru
      _
    // Predicated region
    $region10: #{tpu_custom_call.1} parent=1 // pred_check
      _
    $region11: #{tpu_custom_call.1} parent=1 // pred_check_branch
      %44 = sbr.rel (0) target = $region13
    $region12: #{tpu_custom_call.1} parent=1 // pred_region
      %s46 = ssub.s32 512, 512
      %47 = vsyncadd [#allocation6], %s46
      %s48 = sshll.u32 [#allocation7], 4
      %s49 = int_to_ptr.vmem [resolvable:$true] %s48
      %54 = dma.hbm_to_vmem [thread:$0]  %s2, 512, %s49, [#allocation6], 128, 128, 8
    $region13: #{tpu_custom_call.1} parent=1 // pred_fallthru
      _
    // Predicated region
    $region14: #{tpu_custom_call.1} parent=1 // pred_check
      _
    $region15: #{tpu_custom_call.1} parent=1 // pred_check_branch
      %56 = sbr.rel (0) target = $region17
    $region16: #{tpu_custom_call.1} parent=1 // pred_region
      %s58 = ssub.s32 32, 32
      %59 = vsyncadd [#allocation9], %s58
      %s61 = sshll.u32 [#allocation8], 4
      %s62 = int_to_ptr.vmem [resolvable:$true] %s61
      %64 = dma.hbm_to_vmem [thread:$0]  %s3, 32, %s62, [#allocation9]
    $region17: #{tpu_custom_call.1} parent=1 // pred_fallthru
      _
    // Predicated region
    $region18: #{tpu_custom_call.1} parent=1 // pred_check
      _
    $region19: #{tpu_custom_call.1} parent=1 // pred_check_branch
      %66 = sbr.rel (0) target = $region21
    $region20: #{tpu_custom_call.1} parent=1 // pred_region
      %s68 = ssub.s32 1024, 1024
      %69 = vsyncadd [#allocation9], %s68
      %s70 = sshll.u32 [#allocation10], 4
      %s71 = int_to_ptr.vmem [resolvable:$true] %s70
      %76 = dma.hbm_to_vmem [thread:$0]  %s4, 1024, %s71, [#allocation9], 512, 512, 32
    $region21: #{tpu_custom_call.1} parent=1 // pred_fallthru
      _
    // Predicated region
    $region22: #{tpu_custom_call.1} parent=1 // pred_check
      _
    $region23: #{tpu_custom_call.1} parent=1 // pred_check_branch
      %78 = sbr.rel (0) target = $region25
    $region24: #{tpu_custom_call.1} parent=1 // pred_region
      %s80 = ssub.s32 128, 128
      %81 = vsyncadd [#allocation12], %s80
      %s83 = sshll.u32 [#allocation11], 4
      %s84 = int_to_ptr.vmem [resolvable:$true] %s83
      %86 = dma.hbm_to_vmem [thread:$0]  %s5, 128, %s84, [#allocation12]
    $region25: #{tpu_custom_call.1} parent=1 // pred_fallthru
      _
    // Predicated region
    $region26: #{tpu_custom_call.1} parent=1 // pred_check
      _
    $region27: #{tpu_custom_call.1} parent=1 // pred_check_branch
      %88 = sbr.rel (0) target = $region29
    $region28: #{tpu_custom_call.1} parent=1 // pred_region
      %s90 = ssub.s32 20480, 20480
      %91 = vsyncadd [#allocation12], %s90
      %s92 = sshll.u32 [#allocation13], 4
      %s93 = int_to_ptr.vmem [resolvable:$true] %s92
      %98 = dma.hbm_to_vmem [thread:$0]  %s6, 20480, %s93, [#allocation12], 640, 640, 40
    $region29: #{tpu_custom_call.1} parent=1 // pred_fallthru
      _
    // Predicated region
    $region30: #{tpu_custom_call.1} parent=1 // pred_check
      _
    $region31: #{tpu_custom_call.1} parent=1 // pred_check_branch
      %100 = sbr.rel (0) target = $region33
    $region32: #{tpu_custom_call.1} parent=1 // pred_region
      %s102 = ssub.s32 81920, 81920
      %103 = vsyncadd [#allocation15], %s102
      %s104 = sshll.u32 [#allocation14], 4
      %s105 = int_to_ptr.vmem [resolvable:$true] %s104
      %110 = dma.hbm_to_vmem [thread:$0]  %s7, 81920, %s105, [#allocation15], 640, 640, 40
    $region33: #{tpu_custom_call.1} parent=1 // pred_fallthru
      _
    // Predicated region
    $region34: #{tpu_custom_call.1} parent=1 // pred_check
      _
    $region35: #{tpu_custom_call.1} parent=1 // pred_check_branch
      %112 = sbr.rel (0) target = $region37
    $region36: #{tpu_custom_call.1} parent=1 // pred_region
      %s114 = ssub.s32 160, 160
      %115 = vsyncadd [#allocation15], %s114
      %s117 = sshll.u32 [#allocation16], 4
      %s118 = int_to_ptr.vmem [resolvable:$true] %s117
      %120 = dma.hbm_to_vmem [thread:$0]  %s8, 160, %s118, [#allocation15]
    $region37: #{tpu_custom_call.1} parent=1 // pred_fallthru
      _
    // Predicated region
    $region38: #{tpu_custom_call.1} parent=1 // pred_check
      _
    $region39: #{tpu_custom_call.1} parent=1 // pred_check_branch
      %122 = sbr.rel (0) target = $region41
    $region40: #{tpu_custom_call.1} parent=1 // pred_region
      %s124 = ssub.s32 10240, 10240
      %125 = vsyncadd [#allocation18], %s124
      %s126 = sshll.u32 [#allocation17], 4
      %s127 = int_to_ptr.vmem [resolvable:$true] %s126
      %132 = dma.hbm_to_vmem [thread:$0]  %s9, 10240, %s127, [#allocation18], 64, 64, 4
    $region41: #{tpu_custom_call.1} parent=1 // pred_fallthru
      _
    // Predicated region
    $region42: #{tpu_custom_call.1} parent=1 // pred_check
      _
    $region43: #{tpu_custom_call.1} parent=1 // pred_check_branch
      %134 = sbr.rel (0) target = $region45
    $region44: #{tpu_custom_call.1} parent=1 // pred_region
      %s136 = ssub.s32 16, 16
      %137 = vsyncadd [#allocation18], %s136
      %s139 = sshll.u32 [#allocation19], 4
      %s140 = int_to_ptr.vmem [resolvable:$true] %s139
      %142 = dma.hbm_to_vmem [thread:$0]  %s10, 16, %s140, [#allocation18]
    $region45: #{tpu_custom_call.1} parent=1 // pred_fallthru
      _
    // Predicated region
    $region46: #{tpu_custom_call.1} parent=1 // pred_check
      _
    $region47: #{tpu_custom_call.1} parent=1 // pred_check_branch
      %144 = sbr.rel (0) target = $region49
    $region48: #{tpu_custom_call.1} parent=1 // pred_region
      %145 = dma.done [#allocation3], 128
    $region49: #{tpu_custom_call.1} parent=1 // pred_fallthru
      _
    // Predicated region
    $region50: #{tpu_custom_call.1} parent=1 // pred_check
      _
    $region51: #{tpu_custom_call.1} parent=1 // pred_check_branch
      %147 = sbr.rel (0) target = $region53
    $region52: #{tpu_custom_call.1} parent=1 // pred_region
      %148 = dma.done [#allocation6], 128
    $region53: #{tpu_custom_call.1} parent=1 // pred_fallthru
      _
    // Predicated region
    $region54: #{tpu_custom_call.1} parent=1 // pred_check
      _
    $region55: #{tpu_custom_call.1} parent=1 // pred_check_branch
      %150 = sbr.rel (0) target = $region57
    $region56: #{tpu_custom_call.1} parent=1 // pred_region
      %151 = dma.done [#allocation6], 512
    $region57: #{tpu_custom_call.1} parent=1 // pred_fallthru
      _
    // Predicated region
    $region58: #{tpu_custom_call.1} parent=1 // pred_check
      _
    $region59: #{tpu_custom_call.1} parent=1 // pred_check_branch
      %153 = sbr.rel (0) target = $region61
    $region60: #{tpu_custom_call.1} parent=1 // pred_region
      %154 = dma.done [#allocation9], 32
    $region61: #{tpu_custom_call.1} parent=1 // pred_fallthru
      _
    // Predicated region
    $region62: #{tpu_custom_call.1} parent=1 // pred_check
      _
    $region63: #{tpu_custom_call.1} parent=1 // pred_check_branch
      %156 = sbr.rel (0) target = $region65
    $region64: #{tpu_custom_call.1} parent=1 // pred_region
      %157 = dma.done [#allocation9], 1024
    $region65: #{tpu_custom_call.1} parent=1 // pred_fallthru
      _
    // Predicated region
    $region66: #{tpu_custom_call.1} parent=1 // pred_check
      _
    $region67: #{tpu_custom_call.1} parent=1 // pred_check_branch
      %159 = sbr.rel (0) target = $region69
    $region68: #{tpu_custom_call.1} parent=1 // pred_region
      %160 = dma.done [#allocation12], 128
    $region69: #{tpu_custom_call.1} parent=1 // pred_fallthru
      _
    // Predicated region
    $region70: #{tpu_custom_call.1} parent=1 // pred_check
      _
    $region71: #{tpu_custom_call.1} parent=1 // pred_check_branch
      %162 = sbr.rel (0) target = $region73
    $region72: #{tpu_custom_call.1} parent=1 // pred_region
      %163 = dma.done [#allocation12], 20480
    $region73: #{tpu_custom_call.1} parent=1 // pred_fallthru
      _
    // Predicated region
    $region74: #{tpu_custom_call.1} parent=1 // pred_check
      _
    $region75: #{tpu_custom_call.1} parent=1 // pred_check_branch
      %165 = sbr.rel (0) target = $region77
    $region76: #{tpu_custom_call.1} parent=1 // pred_region
      %166 = dma.done [#allocation15], 81920
    $region77: #{tpu_custom_call.1} parent=1 // pred_fallthru
      _
    // Predicated region
    $region78: #{tpu_custom_call.1} parent=1 // pred_check
      _
    $region79: #{tpu_custom_call.1} parent=1 // pred_check_branch
      %168 = sbr.rel (0) target = $region81
    $region80: #{tpu_custom_call.1} parent=1 // pred_region
      %169 = dma.done [#allocation15], 160
    $region81: #{tpu_custom_call.1} parent=1 // pred_fallthru
      _
    // Predicated region
    $region82: #{tpu_custom_call.1} parent=1 // pred_check
      _
    $region83: #{tpu_custom_call.1} parent=1 // pred_check_branch
      %171 = sbr.rel (0) target = $region85
    $region84: #{tpu_custom_call.1} parent=1 // pred_region
      %172 = dma.done [#allocation18], 10240
    $region85: #{tpu_custom_call.1} parent=1 // pred_fallthru
      _
    // Predicated region
    $region86: #{tpu_custom_call.1} parent=1 // pred_check
      _
    $region87: #{tpu_custom_call.1} parent=1 // pred_check_branch
      %174 = sbr.rel (0) target = $region89
    $region88: #{tpu_custom_call.1} parent=1 // pred_region
      %175 = dma.done [#allocation18], 16
    $region89: #{tpu_custom_call.1} parent=1 // pred_fallthru
      _
    %v177 = vld [vmem:[#allocation2] sm:$0xff]
    %v178 = vpack.c.bf16 %v177, %v177
    %v179 = vld [vmem:[#allocation7] sm:$0xff]
    %v180 = vld [vmem:[#allocation7 + $0x8] sm:$0xff]
    %v181 = vld [vmem:[#allocation7 + $0x10] sm:$0xff]
    %v182 = vld [vmem:[#allocation7 + $0x18] sm:$0xff]
    %v183 = vld [vmem:[#allocation8] sm:$0x3]
    %v185 = vlaneseq
    %v186 = vshrl.u32 %v185, 7
    %v187 = vsub.s32 0, %v186
    %v188 = vrot.slane %v183, %v187
    %v189 = vlaneseq
    %v190 = vshrl.u32 %v189, 7
    %v191 = vsub.s32 1, %v190
    %v192 = vrot.slane %v183, %v191
    %v199 = vunpack.c.l.b16 %v179
    %v200 = vunpack.c.h.b16 %v179
    %v201 = vunpack.c.l.b16 %v180
    %v202 = vunpack.c.h.b16 %v180
    %v203 = vunpack.c.l.b16 %v181
    %v204 = vunpack.c.h.b16 %v181
    %v205 = vunpack.c.l.b16 %v182
    %v206 = vunpack.c.h.b16 %v182
    %v207 = vpack.c.b16 %v201, %v199
    %v208 = vpack.c.b16 %v202, %v200
    %v209 = vpack.c.b16 %v205, %v203
    %v210 = vpack.c.b16 %v206, %v204
    %vm215 = vcmask 261120
    %v217 = vsel %vm215, %v178, 0
    %219 = vmatprep.subr.bf16.mxu0 %v208
    %220 = vmatpush1.bf16.msra.mxu0 %v207
    %221 = vmatprep.subr.bf16.mxu0 %v210
    %222 = vmatpush1.bf16.msra.mxu0 %v209
    %223 = vmatprep.subr.bf16.mxu0 0
    %224 = vmatpush1.bf16.msra.mxu0 0
    %225 = vmatprep.subr.bf16.mxu0 0
    %226 = vmatpush1.bf16.msra.mxu0 0
    %227 = vmatprep.subr.bf16.mxu0 0
    %228 = vmatpush1.bf16.msra.mxu0 0
    %229 = vmatprep.subr.bf16.mxu0 0
    %230 = vmatpush1.bf16.msra.mxu0 0
    %231 = vmatprep.subr.bf16.mxu0 0
    %232 = vmatpush1.bf16.msra.mxu0 0
    %233 = vmatprep.subr.bf16.mxu0 0
    %234 = vmatpush1.bf16.msra.mxu0 0
    %235 = vmatprep.subr.bf16.mxu0 0
    %236 = vmatpush1.bf16.msra.mxu0 0
    %237 = vmatprep.subr.bf16.mxu0 0
    %238 = vmatpush1.bf16.msra.mxu0 0
    %239 = vmatprep.subr.bf16.mxu0 0
    %240 = vmatpush1.bf16.msra.mxu0 0
    %241 = vmatprep.subr.bf16.mxu0 0
    %242 = vmatpush1.bf16.msra.mxu0 0
    %243 = vmatprep.subr.bf16.mxu0 0
    %244 = vmatpush1.bf16.msra.mxu0 0
    %245 = vmatprep.subr.bf16.mxu0 0
    %246 = vmatpush1.bf16.msra.mxu0 0
    %247 = vmatprep.subr.bf16.mxu0 0
    %248 = vmatpush1.bf16.msra.mxu0 0
    %249 = vmatprep.subr.bf16.mxu0 0
    %250 = vmatpush1.bf16.msra.mxu0 0
    %251 = vmatprep.mubr.bf16.mxu0 0
    %252 = vmatmul.mubr.bf16.gmra.mrb[0].mxu0 %v217
    %v253 = vpop.f32.mrb[0].mxu0
    %v254 = vadd.f32 %v188, %v253
    %v255 = vpop.f32.mrb[0].mxu0
    %v256 = vadd.f32 %v192, %v255
    %v257 = vpop.f32.mrb[0].mxu0
    %v258 = vpop.f32.mrb[0].mxu0
    %259 = vdwg.mxu0
    %v260 = vmax.f32 %v254, 0.0
    %v261 = vmax.f32 %v256, 0.0
    %v262 = vld [vmem:[#allocation5] sm:$0xff]
    %v263 = vpack.c.bf16 %v262, %v262
    %v264 = vld [vmem:[#allocation10] sm:$0xff]
    %v265 = vld [vmem:[#allocation10 + $0x8] sm:$0xff]
    %v266 = vld [vmem:[#allocation10 + $0x10] sm:$0xff]
    %v267 = vld [vmem:[#allocation10 + $0x18] sm:$0xff]
    %v268 = vld [vmem:[#allocation10 + $0x20] sm:$0xff]
    %v269 = vld [vmem:[#allocation10 + $0x28] sm:$0xff]
    %v270 = vld [vmem:[#allocation10 + $0x30] sm:$0xff]
    %v271 = vld [vmem:[#allocation10 + $0x38] sm:$0xff]
    %v272 = vld [vmem:[#allocation11] sm:$0xff]
    %v274 = vlaneseq
    %v275 = vshrl.u32 %v274, 7
    %v276 = vsub.s32 0, %v275
    %v277 = vrot.slane %v272, %v276
    %v278 = vlaneseq
    %v279 = vshrl.u32 %v278, 7
    %v280 = vsub.s32 1, %v279
    %v281 = vrot.slane %v272, %v280
    %v282 = vlaneseq
    %v283 = vshrl.u32 %v282, 7
    %v284 = vsub.s32 2, %v283
    %v285 = vrot.slane %v272, %v284
    %v286 = vlaneseq
    %v287 = vshrl.u32 %v286, 7
    %v288 = vsub.s32 3, %v287
    %v289 = vrot.slane %v272, %v288
    %v290 = vlaneseq
    %v291 = vshrl.u32 %v290, 7
    %v292 = vsub.s32 4, %v291
    %v293 = vrot.slane %v272, %v292
    %v294 = vlaneseq
    %v295 = vshrl.u32 %v294, 7
    %v296 = vsub.s32 5, %v295
    %v297 = vrot.slane %v272, %v296
    %v298 = vlaneseq
    %v299 = vshrl.u32 %v298, 7
    %v300 = vsub.s32 6, %v299
    %v301 = vrot.slane %v272, %v300
    %v302 = vlaneseq
    %v303 = vshrl.u32 %v302, 7
    %v304 = vsub.s32 7, %v303
    %v305 = vrot.slane %v272, %v304
    %v322 = vunpack.c.l.b16 %v264
    %v323 = vunpack.c.h.b16 %v264
    %v324 = vunpack.c.l.b16 %v265
    %v325 = vunpack.c.h.b16 %v265
    %v326 = vunpack.c.l.b16 %v266
    %v327 = vunpack.c.h.b16 %v266
    %v328 = vunpack.c.l.b16 %v267
    %v329 = vunpack.c.h.b16 %v267
    %v330 = vunpack.c.l.b16 %v268
    %v331 = vunpack.c.h.b16 %v268
    %v332 = vunpack.c.l.b16 %v269
    %v333 = vunpack.c.h.b16 %v269
    %v334 = vunpack.c.l.b16 %v270
    %v335 = vunpack.c.h.b16 %v270
    %v336 = vunpack.c.l.b16 %v271
    %v337 = vunpack.c.h.b16 %v271
    %v338 = vpack.c.b16 %v330, %v322
    %v339 = vpack.c.b16 %v331, %v323
    %v340 = vpack.c.b16 %v332, %v324
    %v341 = vpack.c.b16 %v333, %v325
    %v342 = vpack.c.b16 %v334, %v326
    %v343 = vpack.c.b16 %v335, %v327
    %v344 = vpack.c.b16 %v336, %v328
    %v345 = vpack.c.b16 %v337, %v329
    %vm354 = vcmask 130048
    %v356 = vsel %vm354, %v263, 0
    %358 = vmatprep.subr.bf16.mxu0 %v339
    %359 = vmatpush1.bf16.msra.mxu0 %v338
    %360 = vmatprep.subr.bf16.mxu0 0
    %361 = vmatpush1.bf16.msra.mxu0 0
    %362 = vmatprep.subr.bf16.mxu0 0
    %363 = vmatpush1.bf16.msra.mxu0 0
    %364 = vmatprep.subr.bf16.mxu0 0
    %365 = vmatpush1.bf16.msra.mxu0 0
    %366 = vmatprep.subr.bf16.mxu0 0
    %367 = vmatpush1.bf16.msra.mxu0 0
    %368 = vmatprep.subr.bf16.mxu0 0
    %369 = vmatpush1.bf16.msra.mxu0 0
    %370 = vmatprep.subr.bf16.mxu0 0
    %371 = vmatpush1.bf16.msra.mxu0 0
    %372 = vmatprep.subr.bf16.mxu0 0
    %373 = vmatpush1.bf16.msra.mxu0 0
    %374 = vmatprep.subr.bf16.mxu0 0
    %375 = vmatpush1.bf16.msra.mxu0 0
    %376 = vmatprep.subr.bf16.mxu0 0
    %377 = vmatpush1.bf16.msra.mxu0 0
    %378 = vmatprep.subr.bf16.mxu0 0
    %379 = vmatpush1.bf16.msra.mxu0 0
    %380 = vmatprep.subr.bf16.mxu0 0
    %381 = vmatpush1.bf16.msra.mxu0 0
    %382 = vmatprep.subr.bf16.mxu0 0
    %383 = vmatpush1.bf16.msra.mxu0 0
    %384 = vmatprep.subr.bf16.mxu0 0
    %385 = vmatpush1.bf16.msra.mxu0 0
    %386 = vmatprep.subr.bf16.mxu0 0
    %387 = vmatpush1.bf16.msra.mxu0 0
    %388 = vmatprep.subr.bf16.mxu0 0
    %389 = vmatpush1.bf16.msra.mxu0 0
    %390 = vmatprep.mubr.bf16.mxu0 0
    %391 = vmatmul.mubr.bf16.gmra.mrb[0].mxu0 %v356
    %v392 = vpop.f32.mrb[0].mxu0
    %v393 = vadd.f32 %v277, %v392
    %v394 = vpop.f32.mrb[0].mxu0
    %v395 = vadd.f32 %v281, %v394
    %v396 = vpop.f32.mrb[0].mxu0
    %v397 = vpop.f32.mrb[0].mxu0
    %398 = vdwg.mxu0
    %399 = vmatprep.subr.bf16.mxu0 %v341
    %400 = vmatpush1.bf16.msra.mxu0 %v340
    %401 = vmatprep.subr.bf16.mxu0 0
    %402 = vmatpush1.bf16.msra.mxu0 0
    %403 = vmatprep.subr.bf16.mxu0 0
    %404 = vmatpush1.bf16.msra.mxu0 0
    %405 = vmatprep.subr.bf16.mxu0 0
    %406 = vmatpush1.bf16.msra.mxu0 0
    %407 = vmatprep.subr.bf16.mxu0 0
    %408 = vmatpush1.bf16.msra.mxu0 0
    %409 = vmatprep.subr.bf16.mxu0 0
    %410 = vmatpush1.bf16.msra.mxu0 0
    %411 = vmatprep.subr.bf16.mxu0 0
    %412 = vmatpush1.bf16.msra.mxu0 0
    %413 = vmatprep.subr.bf16.mxu0 0
    %414 = vmatpush1.bf16.msra.mxu0 0
    %415 = vmatprep.subr.bf16.mxu0 0
    %416 = vmatpush1.bf16.msra.mxu0 0
    %417 = vmatprep.subr.bf16.mxu0 0
    %418 = vmatpush1.bf16.msra.mxu0 0
    %419 = vmatprep.subr.bf16.mxu0 0
    %420 = vmatpush1.bf16.msra.mxu0 0
    %421 = vmatprep.subr.bf16.mxu0 0
    %422 = vmatpush1.bf16.msra.mxu0 0
    %423 = vmatprep.subr.bf16.mxu0 0
    %424 = vmatpush1.bf16.msra.mxu0 0
    %425 = vmatprep.subr.bf16.mxu0 0
    %426 = vmatpush1.bf16.msra.mxu0 0
    %427 = vmatprep.subr.bf16.mxu0 0
    %428 = vmatpush1.bf16.msra.mxu0 0
    %429 = vmatprep.subr.bf16.mxu0 0
    %430 = vmatpush1.bf16.msra.mxu0 0
    %431 = vmatprep.mubr.bf16.mxu0 0
    %432 = vmatmul.mubr.bf16.gmra.mrb[0].mxu0 %v356
    %v433 = vpop.f32.mrb[0].mxu0
    %v434 = vadd.f32 %v285, %v433
    %v435 = vpop.f32.mrb[0].mxu0
    %v436 = vadd.f32 %v289, %v435
    %v437 = vpop.f32.mrb[0].mxu0
    %v438 = vpop.f32.mrb[0].mxu0
    %439 = vdwg.mxu0
    %440 = vmatprep.subr.bf16.mxu0 %v343
    %441 = vmatpush1.bf16.msra.mxu0 %v342
    %442 = vmatprep.subr.bf16.mxu0 0
    %443 = vmatpush1.bf16.msra.mxu0 0
    %444 = vmatprep.subr.bf16.mxu0 0
    %445 = vmatpush1.bf16.msra.mxu0 0
    %446 = vmatprep.subr.bf16.mxu0 0
    %447 = vmatpush1.bf16.msra.mxu0 0
    %448 = vmatprep.subr.bf16.mxu0 0
    %449 = vmatpush1.bf16.msra.mxu0 0
    %450 = vmatprep.subr.bf16.mxu0 0
    %451 = vmatpush1.bf16.msra.mxu0 0
    %452 = vmatprep.subr.bf16.mxu0 0
    %453 = vmatpush1.bf16.msra.mxu0 0
    %454 = vmatprep.subr.bf16.mxu0 0
    %455 = vmatpush1.bf16.msra.mxu0 0
    %456 = vmatprep.subr.bf16.mxu0 0
    %457 = vmatpush1.bf16.msra.mxu0 0
    %458 = vmatprep.subr.bf16.mxu0 0
    %459 = vmatpush1.bf16.msra.mxu0 0
    %460 = vmatprep.subr.bf16.mxu0 0
    %461 = vmatpush1.bf16.msra.mxu0 0
    %462 = vmatprep.subr.bf16.mxu0 0
    %463 = vmatpush1.bf16.msra.mxu0 0
    %464 = vmatprep.subr.bf16.mxu0 0
    %465 = vmatpush1.bf16.msra.mxu0 0
    %466 = vmatprep.subr.bf16.mxu0 0
    %467 = vmatpush1.bf16.msra.mxu0 0
    %468 = vmatprep.subr.bf16.mxu0 0
    %469 = vmatpush1.bf16.msra.mxu0 0
    %470 = vmatprep.subr.bf16.mxu0 0
    %471 = vmatpush1.bf16.msra.mxu0 0
    %472 = vmatprep.mubr.bf16.mxu0 0
    %473 = vmatmul.mubr.bf16.gmra.mrb[0].mxu0 %v356
    %v474 = vpop.f32.mrb[0].mxu0
    %v475 = vadd.f32 %v293, %v474
    %v476 = vpop.f32.mrb[0].mxu0
    %v477 = vadd.f32 %v297, %v476
    %v478 = vpop.f32.mrb[0].mxu0
    %v479 = vpop.f32.mrb[0].mxu0
    %480 = vdwg.mxu0
    %481 = vmatprep.subr.bf16.mxu0 %v345
    %482 = vmatpush1.bf16.msra.mxu0 %v344
    %483 = vmatprep.subr.bf16.mxu0 0
    %484 = vmatpush1.bf16.msra.mxu0 0
    %485 = vmatprep.subr.bf16.mxu0 0
    %486 = vmatpush1.bf16.msra.mxu0 0
    %487 = vmatprep.subr.bf16.mxu0 0
    %488 = vmatpush1.bf16.msra.mxu0 0
    %489 = vmatprep.subr.bf16.mxu0 0
    %490 = vmatpush1.bf16.msra.mxu0 0
    %491 = vmatprep.subr.bf16.mxu0 0
    %492 = vmatpush1.bf16.msra.mxu0 0
    %493 = vmatprep.subr.bf16.mxu0 0
    %494 = vmatpush1.bf16.msra.mxu0 0
    %495 = vmatprep.subr.bf16.mxu0 0
    %496 = vmatpush1.bf16.msra.mxu0 0
    %497 = vmatprep.subr.bf16.mxu0 0
    %498 = vmatpush1.bf16.msra.mxu0 0
    %499 = vmatprep.subr.bf16.mxu0 0
    %500 = vmatpush1.bf16.msra.mxu0 0
    %501 = vmatprep.subr.bf16.mxu0 0
    %502 = vmatpush1.bf16.msra.mxu0 0
    %503 = vmatprep.subr.bf16.mxu0 0
    %504 = vmatpush1.bf16.msra.mxu0 0
    %505 = vmatprep.subr.bf16.mxu0 0
    %506 = vmatpush1.bf16.msra.mxu0 0
    %507 = vmatprep.subr.bf16.mxu0 0
    %508 = vmatpush1.bf16.msra.mxu0 0
    %509 = vmatprep.subr.bf16.mxu0 0
    %510 = vmatpush1.bf16.msra.mxu0 0
    %511 = vmatprep.subr.bf16.mxu0 0
    %512 = vmatpush1.bf16.msra.mxu0 0
    %513 = vmatprep.mubr.bf16.mxu0 0
    %514 = vmatmul.mubr.bf16.gmra.mrb[0].mxu0 %v356
    %v515 = vpop.f32.mrb[0].mxu0
    %v516 = vadd.f32 %v301, %v515
    %v517 = vpop.f32.mrb[0].mxu0
    %v518 = vadd.f32 %v305, %v517
    %v519 = vpop.f32.mrb[0].mxu0
    %v520 = vpop.f32.mrb[0].mxu0
    %521 = vdwg.mxu0
    %v522 = vmax.f32 %v393, 0.0
    %v523 = vmax.f32 %v395, 0.0
    %v524 = vmax.f32 %v434, 0.0
    %v525 = vmax.f32 %v436, 0.0
    %v526 = vmax.f32 %v475, 0.0
    %v527 = vmax.f32 %v477, 0.0
    %v528 = vmax.f32 %v516, 0.0
    %v529 = vmax.f32 %v518, 0.0
    %v530 = vpack.c.bf16 %v260, %v260
    %v531 = vpack.c.bf16 %v261, %v261
    %v532 = vld [vmem:[#allocation13] sm:$0xff]
    %v533 = vld [vmem:[#allocation13 + $0x8] sm:$0xff]
    %v534 = vld [vmem:[#allocation13 + $0x10] sm:$0xff]
    %v535 = vld [vmem:[#allocation13 + $0x18] sm:$0xff]
    %v536 = vld [vmem:[#allocation13 + $0x20] sm:$0xff]
    %v537 = vld [vmem:[#allocation13 + $0x28] sm:$0xff]
    %v538 = vld [vmem:[#allocation13 + $0x30] sm:$0xff]
    %v539 = vld [vmem:[#allocation13 + $0x38] sm:$0xff]
    %v540 = vld [vmem:[#allocation13 + $0x40] sm:$0xff]
    %v541 = vld [vmem:[#allocation13 + $0x48] sm:$0xff]
    %v542 = vld [vmem:[#allocation13 + $0x50] sm:$0xff]
    %v543 = vld [vmem:[#allocation13 + $0x58] sm:$0xff]
    %v544 = vld [vmem:[#allocation13 + $0x60] sm:$0xff]
    %v545 = vld [vmem:[#allocation13 + $0x68] sm:$0xff]
    %v546 = vld [vmem:[#allocation13 + $0x70] sm:$0xff]
    %v547 = vld [vmem:[#allocation13 + $0x78] sm:$0xff]
    %v548 = vld [vmem:[#allocation13 + $0x80] sm:$0xff]
    %v549 = vld [vmem:[#allocation13 + $0x88] sm:$0xff]
    %v550 = vld [vmem:[#allocation13 + $0x90] sm:$0xff]
    %v551 = vld [vmem:[#allocation13 + $0x98] sm:$0xff]
    %v552 = vld [vmem:[#allocation13 + $0xa0] sm:$0xff]
    %v553 = vld [vmem:[#allocation13 + $0xa8] sm:$0xff]
    %v554 = vld [vmem:[#allocation13 + $0xb0] sm:$0xff]
    %v555 = vld [vmem:[#allocation13 + $0xb8] sm:$0xff]
    %v556 = vld [vmem:[#allocation13 + $0xc0] sm:$0xff]
    %v557 = vld [vmem:[#allocation13 + $0xc8] sm:$0xff]
    %v558 = vld [vmem:[#allocation13 + $0xd0] sm:$0xff]
    %v559 = vld [vmem:[#allocation13 + $0xd8] sm:$0xff]
    %v560 = vld [vmem:[#allocation13 + $0xe0] sm:$0xff]
    %v561 = vld [vmem:[#allocation13 + $0xe8] sm:$0xff]
    %v562 = vld [vmem:[#allocation13 + $0xf0] sm:$0xff]
    %v563 = vld [vmem:[#allocation13 + $0xf8] sm:$0xff]
    %v564 = vld [vmem:[#allocation13 + $0x100] sm:$0xff]
    %v565 = vld [vmem:[#allocation13 + $0x108] sm:$0xff]
    %v566 = vld [vmem:[#allocation13 + $0x110] sm:$0xff]
    %v567 = vld [vmem:[#allocation13 + $0x118] sm:$0xff]
    %v568 = vld [vmem:[#allocation13 + $0x120] sm:$0xff]
    %v569 = vld [vmem:[#allocation13 + $0x128] sm:$0xff]
    %v570 = vld [vmem:[#allocation13 + $0x130] sm:$0xff]
    %v571 = vld [vmem:[#allocation13 + $0x138] sm:$0xff]
    %v572 = vld [vmem:[#allocation13 + $0x140] sm:$0xff]
    %v573 = vld [vmem:[#allocation13 + $0x148] sm:$0xff]
    %v574 = vld [vmem:[#allocation13 + $0x150] sm:$0xff]
    %v575 = vld [vmem:[#allocation13 + $0x158] sm:$0xff]
    %v576 = vld [vmem:[#allocation13 + $0x160] sm:$0xff]
    %v577 = vld [vmem:[#allocation13 + $0x168] sm:$0xff]
    %v578 = vld [vmem:[#allocation13 + $0x170] sm:$0xff]
    %v579 = vld [vmem:[#allocation13 + $0x178] sm:$0xff]
    %v580 = vld [vmem:[#allocation13 + $0x180] sm:$0xff]
    %v581 = vld [vmem:[#allocation13 + $0x188] sm:$0xff]
    %v582 = vld [vmem:[#allocation13 + $0x190] sm:$0xff]
    %v583 = vld [vmem:[#allocation13 + $0x198] sm:$0xff]
    %v584 = vld [vmem:[#allocation13 + $0x1a0] sm:$0xff]
    %v585 = vld [vmem:[#allocation13 + $0x1a8] sm:$0xff]
    %v586 = vld [vmem:[#allocation13 + $0x1b0] sm:$0xff]
    %v587 = vld [vmem:[#allocation13 + $0x1b8] sm:$0xff]
    %v588 = vld [vmem:[#allocation13 + $0x1c0] sm:$0xff]
    %v589 = vld [vmem:[#allocation13 + $0x1c8] sm:$0xff]
    %v590 = vld [vmem:[#allocation13 + $0x1d0] sm:$0xff]
    %v591 = vld [vmem:[#allocation13 + $0x1d8] sm:$0xff]
    %v592 = vld [vmem:[#allocation13 + $0x1e0] sm:$0xff]
    %v593 = vld [vmem:[#allocation13 + $0x1e8] sm:$0xff]
    %v594 = vld [vmem:[#allocation13 + $0x1f0] sm:$0xff]
    %v595 = vld [vmem:[#allocation13 + $0x1f8] sm:$0xff]
    %v596 = vld [vmem:[#allocation13 + $0x200] sm:$0xff]
    %v597 = vld [vmem:[#allocation13 + $0x208] sm:$0xff]
    %v598 = vld [vmem:[#allocation13 + $0x210] sm:$0xff]
    %v599 = vld [vmem:[#allocation13 + $0x218] sm:$0xff]
    %v600 = vld [vmem:[#allocation13 + $0x220] sm:$0xff]
    %v601 = vld [vmem:[#allocation13 + $0x228] sm:$0xff]
    %v602 = vld [vmem:[#allocation13 + $0x230] sm:$0xff]
    %v603 = vld [vmem:[#allocation13 + $0x238] sm:$0xff]
    %v604 = vld [vmem:[#allocation13 + $0x240] sm:$0xff]
    %v605 = vld [vmem:[#allocation13 + $0x248] sm:$0xff]
    %v606 = vld [vmem:[#allocation13 + $0x250] sm:$0xff]
    %v607 = vld [vmem:[#allocation13 + $0x258] sm:$0xff]
    %v608 = vld [vmem:[#allocation13 + $0x260] sm:$0xff]
    %v609 = vld [vmem:[#allocation13 + $0x268] sm:$0xff]
    %v610 = vld [vmem:[#allocation13 + $0x270] sm:$0xff]
    %v611 = vld [vmem:[#allocation13 + $0x278] sm:$0xff]
    %v612 = vld [vmem:[#allocation13 + $0x280] sm:$0xff]
    %v613 = vld [vmem:[#allocation13 + $0x288] sm:$0xff]
    %v614 = vld [vmem:[#allocation13 + $0x290] sm:$0xff]
    %v615 = vld [vmem:[#allocation13 + $0x298] sm:$0xff]
    %v616 = vld [vmem:[#allocation13 + $0x2a0] sm:$0xff]
    %v617 = vld [vmem:[#allocation13 + $0x2a8] sm:$0xff]
    %v618 = vld [vmem:[#allocation13 + $0x2b0] sm:$0xff]
    %v619 = vld [vmem:[#allocation13 + $0x2b8] sm:$0xff]
    %v620 = vld [vmem:[#allocation13 + $0x2c0] sm:$0xff]
    %v621 = vld [vmem:[#allocation13 + $0x2c8] sm:$0xff]
    %v622 = vld [vmem:[#allocation13 + $0x2d0] sm:$0xff]
    %v623 = vld [vmem:[#allocation13 + $0x2d8] sm:$0xff]
    %v624 = vld [vmem:[#allocation13 + $0x2e0] sm:$0xff]
    %v625 = vld [vmem:[#allocation13 + $0x2e8] sm:$0xff]
    %v626 = vld [vmem:[#allocation13 + $0x2f0] sm:$0xff]
    %v627 = vld [vmem:[#allocation13 + $0x2f8] sm:$0xff]
    %v628 = vld [vmem:[#allocation13 + $0x300] sm:$0xff]
    %v629 = vld [vmem:[#allocation13 + $0x308] sm:$0xff]
    %v630 = vld [vmem:[#allocation13 + $0x310] sm:$0xff]
    %v631 = vld [vmem:[#allocation13 + $0x318] sm:$0xff]
    %v632 = vld [vmem:[#allocation13 + $0x320] sm:$0xff]
    %v633 = vld [vmem:[#allocation13 + $0x328] sm:$0xff]
    %v634 = vld [vmem:[#allocation13 + $0x330] sm:$0xff]
    %v635 = vld [vmem:[#allocation13 + $0x338] sm:$0xff]
    %v636 = vld [vmem:[#allocation13 + $0x340] sm:$0xff]
    %v637 = vld [vmem:[#allocation13 + $0x348] sm:$0xff]
    %v638 = vld [vmem:[#allocation13 + $0x350] sm:$0xff]
    %v639 = vld [vmem:[#allocation13 + $0x358] sm:$0xff]
    %v640 = vld [vmem:[#allocation13 + $0x360] sm:$0xff]
    %v641 = vld [vmem:[#allocation13 + $0x368] sm:$0xff]
    %v642 = vld [vmem:[#allocation13 + $0x370] sm:$0xff]
    %v643 = vld [vmem:[#allocation13 + $0x378] sm:$0xff]
    %v644 = vld [vmem:[#allocation13 + $0x380] sm:$0xff]
    %v645 = vld [vmem:[#allocation13 + $0x388] sm:$0xff]
    %v646 = vld [vmem:[#allocation13 + $0x390] sm:$0xff]
    %v647 = vld [vmem:[#allocation13 + $0x398] sm:$0xff]
    %v648 = vld [vmem:[#allocation13 + $0x3a0] sm:$0xff]
    %v649 = vld [vmem:[#allocation13 + $0x3a8] sm:$0xff]
    %v650 = vld [vmem:[#allocation13 + $0x3b0] sm:$0xff]
    %v651 = vld [vmem:[#allocation13 + $0x3b8] sm:$0xff]
    %v652 = vld [vmem:[#allocation13 + $0x3c0] sm:$0xff]
    %v653 = vld [vmem:[#allocation13 + $0x3c8] sm:$0xff]
    %v654 = vld [vmem:[#allocation13 + $0x3d0] sm:$0xff]
    %v655 = vld [vmem:[#allocation13 + $0x3d8] sm:$0xff]
    %v656 = vld [vmem:[#allocation13 + $0x3e0] sm:$0xff]
    %v657 = vld [vmem:[#allocation13 + $0x3e8] sm:$0xff]
    %v658 = vld [vmem:[#allocation13 + $0x3f0] sm:$0xff]
    %v659 = vld [vmem:[#allocation13 + $0x3f8] sm:$0xff]
    %v660 = vld [vmem:[#allocation13 + $0x400] sm:$0xff]
    %v661 = vld [vmem:[#allocation13 + $0x408] sm:$0xff]
    %v662 = vld [vmem:[#allocation13 + $0x410] sm:$0xff]
    %v663 = vld [vmem:[#allocation13 + $0x418] sm:$0xff]
    %v664 = vld [vmem:[#allocation13 + $0x420] sm:$0xff]
    %v665 = vld [vmem:[#allocation13 + $0x428] sm:$0xff]
    %v666 = vld [vmem:[#allocation13 + $0x430] sm:$0xff]
    %v667 = vld [vmem:[#allocation13 + $0x438] sm:$0xff]
    %v668 = vld [vmem:[#allocation13 + $0x440] sm:$0xff]
    %v669 = vld [vmem:[#allocation13 + $0x448] sm:$0xff]
    %v670 = vld [vmem:[#allocation13 + $0x450] sm:$0xff]
    %v671 = vld [vmem:[#allocation13 + $0x458] sm:$0xff]
    %v672 = vld [vmem:[#allocation13 + $0x460] sm:$0xff]
    %v673 = vld [vmem:[#allocation13 + $0x468] sm:$0xff]
    %v674 = vld [vmem:[#allocation13 + $0x470] sm:$0xff]
    %v675 = vld [vmem:[#allocation13 + $0x478] sm:$0xff]
    %v676 = vld [vmem:[#allocation13 + $0x480] sm:$0xff]
    %v677 = vld [vmem:[#allocation13 + $0x488] sm:$0xff]
    %v678 = vld [vmem:[#allocation13 + $0x490] sm:$0xff]
    %v679 = vld [vmem:[#allocation13 + $0x498] sm:$0xff]
    %v680 = vld [vmem:[#allocation13 + $0x4a0] sm:$0xff]
    %v681 = vld [vmem:[#allocation13 + $0x4a8] sm:$0xff]
    %v682 = vld [vmem:[#allocation13 + $0x4b0] sm:$0xff]
    %v683 = vld [vmem:[#allocation13 + $0x4b8] sm:$0xff]
    %v684 = vld [vmem:[#allocation13 + $0x4c0] sm:$0xff]
    %v685 = vld [vmem:[#allocation13 + $0x4c8] sm:$0xff]
    %v686 = vld [vmem:[#allocation13 + $0x4d0] sm:$0xff]
    %v687 = vld [vmem:[#allocation13 + $0x4d8] sm:$0xff]
    %v688 = vld [vmem:[#allocation13 + $0x4e0] sm:$0xff]
    %v689 = vld [vmem:[#allocation13 + $0x4e8] sm:$0xff]
    %v690 = vld [vmem:[#allocation13 + $0x4f0] sm:$0xff]
    %v691 = vld [vmem:[#allocation13 + $0x4f8] sm:$0xff]
    %v692 = vpack.c.bf16 %v522, %v522
    %v693 = vpack.c.bf16 %v523, %v523
    %v694 = vpack.c.bf16 %v524, %v524
    %v695 = vpack.c.bf16 %v525, %v525
    %v696 = vpack.c.bf16 %v526, %v526
    %v697 = vpack.c.bf16 %v527, %v527
    %v698 = vpack.c.bf16 %v528, %v528
    %v699 = vpack.c.bf16 %v529, %v529
    %v700 = vld [vmem:[#allocation14] sm:$0xff]
    %v701 = vld [vmem:[#allocation14 + $0x8] sm:$0xff]
    %v702 = vld [vmem:[#allocation14 + $0x10] sm:$0xff]
    %v703 = vld [vmem:[#allocation14 + $0x18] sm:$0xff]
    %v704 = vld [vmem:[#allocation14 + $0x20] sm:$0xff]
    %v705 = vld [vmem:[#allocation14 + $0x28] sm:$0xff]
    %v706 = vld [vmem:[#allocation14 + $0x30] sm:$0xff]
    %v707 = vld [vmem:[#allocation14 + $0x38] sm:$0xff]
    %v708 = vld [vmem:[#allocation14 + $0x40] sm:$0xff]
    %v709 = vld [vmem:[#allocation14 + $0x48] sm:$0xff]
    %v710 = vld [vmem:[#allocation14 + $0x50] sm:$0xff]
    %v711 = vld [vmem:[#allocation14 + $0x58] sm:$0xff]
    %v712 = vld [vmem:[#allocation14 + $0x60] sm:$0xff]
    %v713 = vld [vmem:[#allocation14 + $0x68] sm:$0xff]
    %v714 = vld [vmem:[#allocation14 + $0x70] sm:$0xff]
    %v715 = vld [vmem:[#allocation14 + $0x78] sm:$0xff]
    %v716 = vld [vmem:[#allocation14 + $0x80] sm:$0xff]
    %v717 = vld [vmem:[#allocation14 + $0x88] sm:$0xff]
    %v718 = vld [vmem:[#allocation14 + $0x90] sm:$0xff]
    %v719 = vld [vmem:[#allocation14 + $0x98] sm:$0xff]
    %v720 = vld [vmem:[#allocation14 + $0xa0] sm:$0xff]
    %v721 = vld [vmem:[#allocation14 + $0xa8] sm:$0xff]
    %v722 = vld [vmem:[#allocation14 + $0xb0] sm:$0xff]
    %v723 = vld [vmem:[#allocation14 + $0xb8] sm:$0xff]
    %v724 = vld [vmem:[#allocation14 + $0xc0] sm:$0xff]
    %v725 = vld [vmem:[#allocation14 + $0xc8] sm:$0xff]
    %v726 = vld [vmem:[#allocation14 + $0xd0] sm:$0xff]
    %v727 = vld [vmem:[#allocation14 + $0xd8] sm:$0xff]
    %v728 = vld [vmem:[#allocation14 + $0xe0] sm:$0xff]
    %v729 = vld [vmem:[#allocation14 + $0xe8] sm:$0xff]
    %v730 = vld [vmem:[#allocation14 + $0xf0] sm:$0xff]
    %v731 = vld [vmem:[#allocation14 + $0xf8] sm:$0xff]
    %v732 = vld [vmem:[#allocation14 + $0x100] sm:$0xff]
    %v733 = vld [vmem:[#allocation14 + $0x108] sm:$0xff]
    %v734 = vld [vmem:[#allocation14 + $0x110] sm:$0xff]
    %v735 = vld [vmem:[#allocation14 + $0x118] sm:$0xff]
    %v736 = vld [vmem:[#allocation14 + $0x120] sm:$0xff]
    %v737 = vld [vmem:[#allocation14 + $0x128] sm:$0xff]
    %v738 = vld [vmem:[#allocation14 + $0x130] sm:$0xff]
    %v739 = vld [vmem:[#allocation14 + $0x138] sm:$0xff]
    %v740 = vld [vmem:[#allocation14 + $0x140] sm:$0xff]
    %v741 = vld [vmem:[#allocation14 + $0x148] sm:$0xff]
    %v742 = vld [vmem:[#allocation14 + $0x150] sm:$0xff]
    %v743 = vld [vmem:[#allocation14 + $0x158] sm:$0xff]
    %v744 = vld [vmem:[#allocation14 + $0x160] sm:$0xff]
    %v745 = vld [vmem:[#allocation14 + $0x168] sm:$0xff]
    %v746 = vld [vmem:[#allocation14 + $0x170] sm:$0xff]
    %v747 = vld [vmem:[#allocation14 + $0x178] sm:$0xff]
    %v748 = vld [vmem:[#allocation14 + $0x180] sm:$0xff]
    %v749 = vld [vmem:[#allocation14 + $0x188] sm:$0xff]
    %v750 = vld [vmem:[#allocation14 + $0x190] sm:$0xff]
    %v751 = vld [vmem:[#allocation14 + $0x198] sm:$0xff]
    %v752 = vld [vmem:[#allocation14 + $0x1a0] sm:$0xff]
    %v753 = vld [vmem:[#allocation14 + $0x1a8] sm:$0xff]
    %v754 = vld [vmem:[#allocation14 + $0x1b0] sm:$0xff]
    %v755 = vld [vmem:[#allocation14 + $0x1b8] sm:$0xff]
    %v756 = vld [vmem:[#allocation14 + $0x1c0] sm:$0xff]
    %v757 = vld [vmem:[#allocation14 + $0x1c8] sm:$0xff]
    %v758 = vld [vmem:[#allocation14 + $0x1d0] sm:$0xff]
    %v759 = vld [vmem:[#allocation14 + $0x1d8] sm:$0xff]
    %v760 = vld [vmem:[#allocation14 + $0x1e0] sm:$0xff]
    %v761 = vld [vmem:[#allocation14 + $0x1e8] sm:$0xff]
    %v762 = vld [vmem:[#allocation14 + $0x1f0] sm:$0xff]
    %v763 = vld [vmem:[#allocation14 + $0x1f8] sm:$0xff]
    %v764 = vld [vmem:[#allocation14 + $0x200] sm:$0xff]
    %v765 = vld [vmem:[#allocation14 + $0x208] sm:$0xff]
    %v766 = vld [vmem:[#allocation14 + $0x210] sm:$0xff]
    %v767 = vld [vmem:[#allocation14 + $0x218] sm:$0xff]
    %v768 = vld [vmem:[#allocation14 + $0x220] sm:$0xff]
    %v769 = vld [vmem:[#allocation14 + $0x228] sm:$0xff]
    %v770 = vld [vmem:[#allocation14 + $0x230] sm:$0xff]
    %v771 = vld [vmem:[#allocation14 + $0x238] sm:$0xff]
    %v772 = vld [vmem:[#allocation14 + $0x240] sm:$0xff]
    %v773 = vld [vmem:[#allocation14 + $0x248] sm:$0xff]
    %v774 = vld [vmem:[#allocation14 + $0x250] sm:$0xff]
    %v775 = vld [vmem:[#allocation14 + $0x258] sm:$0xff]
    %v776 = vld [vmem:[#allocation14 + $0x260] sm:$0xff]
    %v777 = vld [vmem:[#allocation14 + $0x268] sm:$0xff]
    %v778 = vld [vmem:[#allocation14 + $0x270] sm:$0xff]
    %v779 = vld [vmem:[#allocation14 + $0x278] sm:$0xff]
    %v780 = vld [vmem:[#allocation14 + $0x280] sm:$0xff]
    %v781 = vld [vmem:[#allocation14 + $0x288] sm:$0xff]
    %v782 = vld [vmem:[#allocation14 + $0x290] sm:$0xff]
    %v783 = vld [vmem:[#allocation14 + $0x298] sm:$0xff]
    %v784 = vld [vmem:[#allocation14 + $0x2a0] sm:$0xff]
    %v785 = vld [vmem:[#allocation14 + $0x2a8] sm:$0xff]
    %v786 = vld [vmem:[#allocation14 + $0x2b0] sm:$0xff]
    %v787 = vld [vmem:[#allocation14 + $0x2b8] sm:$0xff]
    %v788 = vld [vmem:[#allocation14 + $0x2c0] sm:$0xff]
    %v789 = vld [vmem:[#allocation14 + $0x2c8] sm:$0xff]
    %v790 = vld [vmem:[#allocation14 + $0x2d0] sm:$0xff]
    %v791 = vld [vmem:[#allocation14 + $0x2d8] sm:$0xff]
    %v792 = vld [vmem:[#allocation14 + $0x2e0] sm:$0xff]
    %v793 = vld [vmem:[#allocation14 + $0x2e8] sm:$0xff]
    %v794 = vld [vmem:[#allocation14 + $0x2f0] sm:$0xff]
    %v795 = vld [vmem:[#allocation14 + $0x2f8] sm:$0xff]
    %v796 = vld [vmem:[#allocation14 + $0x300] sm:$0xff]
    %v797 = vld [vmem:[#allocation14 + $0x308] sm:$0xff]
    %v798 = vld [vmem:[#allocation14 + $0x310] sm:$0xff]
    %v799 = vld [vmem:[#allocation14 + $0x318] sm:$0xff]
    %v800 = vld [vmem:[#allocation14 + $0x320] sm:$0xff]
    %v801 = vld [vmem:[#allocation14 + $0x328] sm:$0xff]
    %v802 = vld [vmem:[#allocation14 + $0x330] sm:$0xff]
    %v803 = vld [vmem:[#allocation14 + $0x338] sm:$0xff]
    %v804 = vld [vmem:[#allocation14 + $0x340] sm:$0xff]
    %v805 = vld [vmem:[#allocation14 + $0x348] sm:$0xff]
    %v806 = vld [vmem:[#allocation14 + $0x350] sm:$0xff]
    %v807 = vld [vmem:[#allocation14 + $0x358] sm:$0xff]
    %v808 = vld [vmem:[#allocation14 + $0x360] sm:$0xff]
    %v809 = vld [vmem:[#allocation14 + $0x368] sm:$0xff]
    %v810 = vld [vmem:[#allocation14 + $0x370] sm:$0xff]
    %v811 = vld [vmem:[#allocation14 + $0x378] sm:$0xff]
    %v812 = vld [vmem:[#allocation14 + $0x380] sm:$0xff]
    %v813 = vld [vmem:[#allocation14 + $0x388] sm:$0xff]
    %v814 = vld [vmem:[#allocation14 + $0x390] sm:$0xff]
    %v815 = vld [vmem:[#allocation14 + $0x398] sm:$0xff]
    %v816 = vld [vmem:[#allocation14 + $0x3a0] sm:$0xff]
    %v817 = vld [vmem:[#allocation14 + $0x3a8] sm:$0xff]
    %v818 = vld [vmem:[#allocation14 + $0x3b0] sm:$0xff]
    %v819 = vld [vmem:[#allocation14 + $0x3b8] sm:$0xff]
    %v820 = vld [vmem:[#allocation14 + $0x3c0] sm:$0xff]
    %v821 = vld [vmem:[#allocation14 + $0x3c8] sm:$0xff]
    %v822 = vld [vmem:[#allocation14 + $0x3d0] sm:$0xff]
    %v823 = vld [vmem:[#allocation14 + $0x3d8] sm:$0xff]
    %v824 = vld [vmem:[#allocation14 + $0x3e0] sm:$0xff]
    %v825 = vld [vmem:[#allocation14 + $0x3e8] sm:$0xff]
    %v826 = vld [vmem:[#allocation14 + $0x3f0] sm:$0xff]
    %v827 = vld [vmem:[#allocation14 + $0x3f8] sm:$0xff]
    %v828 = vld [vmem:[#allocation14 + $0x400] sm:$0xff]
    %v829 = vld [vmem:[#allocation14 + $0x408] sm:$0xff]
    %v830 = vld [vmem:[#allocation14 + $0x410] sm:$0xff]
    %v831 = vld [vmem:[#allocation14 + $0x418] sm:$0xff]
    %v832 = vld [vmem:[#allocation14 + $0x420] sm:$0xff]
    %v833 = vld [vmem:[#allocation14 + $0x428] sm:$0xff]
    %v834 = vld [vmem:[#allocation14 + $0x430] sm:$0xff]
    %v835 = vld [vmem:[#allocation14 + $0x438] sm:$0xff]
    %v836 = vld [vmem:[#allocation14 + $0x440] sm:$0xff]
    %v837 = vld [vmem:[#allocation14 + $0x448] sm:$0xff]
    %v838 = vld [vmem:[#allocation14 + $0x450] sm:$0xff]
    %v839 = vld [vmem:[#allocation14 + $0x458] sm:$0xff]
    %v840 = vld [vmem:[#allocation14 + $0x460] sm:$0xff]
    %v841 = vld [vmem:[#allocation14 + $0x468] sm:$0xff]
    %v842 = vld [vmem:[#allocation14 + $0x470] sm:$0xff]
    %v843 = vld [vmem:[#allocation14 + $0x478] sm:$0xff]
    %v844 = vld [vmem:[#allocation14 + $0x480] sm:$0xff]
    %v845 = vld [vmem:[#allocation14 + $0x488] sm:$0xff]
    %v846 = vld [vmem:[#allocation14 + $0x490] sm:$0xff]
    %v847 = vld [vmem:[#allocation14 + $0x498] sm:$0xff]
    %v848 = vld [vmem:[#allocation14 + $0x4a0] sm:$0xff]
    %v849 = vld [vmem:[#allocation14 + $0x4a8] sm:$0xff]
    %v850 = vld [vmem:[#allocation14 + $0x4b0] sm:$0xff]
    %v851 = vld [vmem:[#allocation14 + $0x4b8] sm:$0xff]
    %v852 = vld [vmem:[#allocation14 + $0x4c0] sm:$0xff]
    %v853 = vld [vmem:[#allocation14 + $0x4c8] sm:$0xff]
    %v854 = vld [vmem:[#allocation14 + $0x4d0] sm:$0xff]
    %v855 = vld [vmem:[#allocation14 + $0x4d8] sm:$0xff]
    %v856 = vld [vmem:[#allocation14 + $0x4e0] sm:$0xff]
    %v857 = vld [vmem:[#allocation14 + $0x4e8] sm:$0xff]
    %v858 = vld [vmem:[#allocation14 + $0x4f0] sm:$0xff]
    %v859 = vld [vmem:[#allocation14 + $0x4f8] sm:$0xff]
    %v860 = vld [vmem:[#allocation14 + $0x500] sm:$0xff]
    %v861 = vld [vmem:[#allocation14 + $0x508] sm:$0xff]
    %v862 = vld [vmem:[#allocation14 + $0x510] sm:$0xff]
    %v863 = vld [vmem:[#allocation14 + $0x518] sm:$0xff]
    %v864 = vld [vmem:[#allocation14 + $0x520] sm:$0xff]
    %v865 = vld [vmem:[#allocation14 + $0x528] sm:$0xff]
    %v866 = vld [vmem:[#allocation14 + $0x530] sm:$0xff]
    %v867 = vld [vmem:[#allocation14 + $0x538] sm:$0xff]
    %v868 = vld [vmem:[#allocation14 + $0x540] sm:$0xff]
    %v869 = vld [vmem:[#allocation14 + $0x548] sm:$0xff]
    %v870 = vld [vmem:[#allocation14 + $0x550] sm:$0xff]
    %v871 = vld [vmem:[#allocation14 + $0x558] sm:$0xff]
    %v872 = vld [vmem:[#allocation14 + $0x560] sm:$0xff]
    %v873 = vld [vmem:[#allocation14 + $0x568] sm:$0xff]
    %v874 = vld [vmem:[#allocation14 + $0x570] sm:$0xff]
    %v875 = vld [vmem:[#allocation14 + $0x578] sm:$0xff]
    %v876 = vld [vmem:[#allocation14 + $0x580] sm:$0xff]
    %v877 = vld [vmem:[#allocation14 + $0x588] sm:$0xff]
    %v878 = vld [vmem:[#allocation14 + $0x590] sm:$0xff]
    %v879 = vld [vmem:[#allocation14 + $0x598] sm:$0xff]
    %v880 = vld [vmem:[#allocation14 + $0x5a0] sm:$0xff]
    %v881 = vld [vmem:[#allocation14 + $0x5a8] sm:$0xff]
    %v882 = vld [vmem:[#allocation14 + $0x5b0] sm:$0xff]
    %v883 = vld [vmem:[#allocation14 + $0x5b8] sm:$0xff]
    %v884 = vld [vmem:[#allocation14 + $0x5c0] sm:$0xff]
    %v885 = vld [vmem:[#allocation14 + $0x5c8] sm:$0xff]
    %v886 = vld [vmem:[#allocation14 + $0x5d0] sm:$0xff]
    %v887 = vld [vmem:[#allocation14 + $0x5d8] sm:$0xff]
    %v888 = vld [vmem:[#allocation14 + $0x5e0] sm:$0xff]
    %v889 = vld [vmem:[#allocation14 + $0x5e8] sm:$0xff]
    %v890 = vld [vmem:[#allocation14 + $0x5f0] sm:$0xff]
    %v891 = vld [vmem:[#allocation14 + $0x5f8] sm:$0xff]
    %v892 = vld [vmem:[#allocation14 + $0x600] sm:$0xff]
    %v893 = vld [vmem:[#allocation14 + $0x608] sm:$0xff]
    %v894 = vld [vmem:[#allocation14 + $0x610] sm:$0xff]
    %v895 = vld [vmem:[#allocation14 + $0x618] sm:$0xff]
    %v896 = vld [vmem:[#allocation14 + $0x620] sm:$0xff]
    %v897 = vld [vmem:[#allocation14 + $0x628] sm:$0xff]
    %v898 = vld [vmem:[#allocation14 + $0x630] sm:$0xff]
    %v899 = vld [vmem:[#allocation14 + $0x638] sm:$0xff]
    %v900 = vld [vmem:[#allocation14 + $0x640] sm:$0xff]
    %v901 = vld [vmem:[#allocation14 + $0x648] sm:$0xff]
    %v902 = vld [vmem:[#allocation14 + $0x650] sm:$0xff]
    %v903 = vld [vmem:[#allocation14 + $0x658] sm:$0xff]
    %v904 = vld [vmem:[#allocation14 + $0x660] sm:$0xff]
    %v905 = vld [vmem:[#allocation14 + $0x668] sm:$0xff]
    %v906 = vld [vmem:[#allocation14 + $0x670] sm:$0xff]
    %v907 = vld [vmem:[#allocation14 + $0x678] sm:$0xff]
    %v908 = vld [vmem:[#allocation14 + $0x680] sm:$0xff]
    %v909 = vld [vmem:[#allocation14 + $0x688] sm:$0xff]
    %v910 = vld [vmem:[#allocation14 + $0x690] sm:$0xff]
    %v911 = vld [vmem:[#allocation14 + $0x698] sm:$0xff]
    %v912 = vld [vmem:[#allocation14 + $0x6a0] sm:$0xff]
    %v913 = vld [vmem:[#allocation14 + $0x6a8] sm:$0xff]
    %v914 = vld [vmem:[#allocation14 + $0x6b0] sm:$0xff]
    %v915 = vld [vmem:[#allocation14 + $0x6b8] sm:$0xff]
    %v916 = vld [vmem:[#allocation14 + $0x6c0] sm:$0xff]
    %v917 = vld [vmem:[#allocation14 + $0x6c8] sm:$0xff]
    %v918 = vld [vmem:[#allocation14 + $0x6d0] sm:$0xff]
    %v919 = vld [vmem:[#allocation14 + $0x6d8] sm:$0xff]
    %v920 = vld [vmem:[#allocation14 + $0x6e0] sm:$0xff]
    %v921 = vld [vmem:[#allocation14 + $0x6e8] sm:$0xff]
    %v922 = vld [vmem:[#allocation14 + $0x6f0] sm:$0xff]
    %v923 = vld [vmem:[#allocation14 + $0x6f8] sm:$0xff]
    %v924 = vld [vmem:[#allocation14 + $0x700] sm:$0xff]
    %v925 = vld [vmem:[#allocation14 + $0x708] sm:$0xff]
    %v926 = vld [vmem:[#allocation14 + $0x710] sm:$0xff]
    %v927 = vld [vmem:[#allocation14 + $0x718] sm:$0xff]
    %v928 = vld [vmem:[#allocation14 + $0x720] sm:$0xff]
    %v929 = vld [vmem:[#allocation14 + $0x728] sm:$0xff]
    %v930 = vld [vmem:[#allocation14 + $0x730] sm:$0xff]
    %v931 = vld [vmem:[#allocation14 + $0x738] sm:$0xff]
    %v932 = vld [vmem:[#allocation14 + $0x740] sm:$0xff]
    %v933 = vld [vmem:[#allocation14 + $0x748] sm:$0xff]
    %v934 = vld [vmem:[#allocation14 + $0x750] sm:$0xff]
    %v935 = vld [vmem:[#allocation14 + $0x758] sm:$0xff]
    %v936 = vld [vmem:[#allocation14 + $0x760] sm:$0xff]
    %v937 = vld [vmem:[#allocation14 + $0x768] sm:$0xff]
    %v938 = vld [vmem:[#allocation14 + $0x770] sm:$0xff]
    %v939 = vld [vmem:[#allocation14 + $0x778] sm:$0xff]
    %v940 = vld [vmem:[#allocation14 + $0x780] sm:$0xff]
    %v941 = vld [vmem:[#allocation14 + $0x788] sm:$0xff]
    %v942 = vld [vmem:[#allocation14 + $0x790] sm:$0xff]
    %v943 = vld [vmem:[#allocation14 + $0x798] sm:$0xff]
    %v944 = vld [vmem:[#allocation14 + $0x7a0] sm:$0xff]
    %v945 = vld [vmem:[#allocation14 + $0x7a8] sm:$0xff]
    %v946 = vld [vmem:[#allocation14 + $0x7b0] sm:$0xff]
    %v947 = vld [vmem:[#allocation14 + $0x7b8] sm:$0xff]
    %v948 = vld [vmem:[#allocation14 + $0x7c0] sm:$0xff]
    %v949 = vld [vmem:[#allocation14 + $0x7c8] sm:$0xff]
    %v950 = vld [vmem:[#allocation14 + $0x7d0] sm:$0xff]
    %v951 = vld [vmem:[#allocation14 + $0x7d8] sm:$0xff]
    %v952 = vld [vmem:[#allocation14 + $0x7e0] sm:$0xff]
    %v953 = vld [vmem:[#allocation14 + $0x7e8] sm:$0xff]
    %v954 = vld [vmem:[#allocation14 + $0x7f0] sm:$0xff]
    %v955 = vld [vmem:[#allocation14 + $0x7f8] sm:$0xff]
    %v956 = vld [vmem:[#allocation14 + $0x800] sm:$0xff]
    %v957 = vld [vmem:[#allocation14 + $0x808] sm:$0xff]
    %v958 = vld [vmem:[#allocation14 + $0x810] sm:$0xff]
    %v959 = vld [vmem:[#allocation14 + $0x818] sm:$0xff]
    %v960 = vld [vmem:[#allocation14 + $0x820] sm:$0xff]
    %v961 = vld [vmem:[#allocation14 + $0x828] sm:$0xff]
    %v962 = vld [vmem:[#allocation14 + $0x830] sm:$0xff]
    %v963 = vld [vmem:[#allocation14 + $0x838] sm:$0xff]
    %v964 = vld [vmem:[#allocation14 + $0x840] sm:$0xff]
    %v965 = vld [vmem:[#allocation14 + $0x848] sm:$0xff]
    %v966 = vld [vmem:[#allocation14 + $0x850] sm:$0xff]
    %v967 = vld [vmem:[#allocation14 + $0x858] sm:$0xff]
    %v968 = vld [vmem:[#allocation14 + $0x860] sm:$0xff]
    %v969 = vld [vmem:[#allocation14 + $0x868] sm:$0xff]
    %v970 = vld [vmem:[#allocation14 + $0x870] sm:$0xff]
    %v971 = vld [vmem:[#allocation14 + $0x878] sm:$0xff]
    %v972 = vld [vmem:[#allocation14 + $0x880] sm:$0xff]
    %v973 = vld [vmem:[#allocation14 + $0x888] sm:$0xff]
    %v974 = vld [vmem:[#allocation14 + $0x890] sm:$0xff]
    %v975 = vld [vmem:[#allocation14 + $0x898] sm:$0xff]
    %v976 = vld [vmem:[#allocation14 + $0x8a0] sm:$0xff]
    %v977 = vld [vmem:[#allocation14 + $0x8a8] sm:$0xff]
    %v978 = vld [vmem:[#allocation14 + $0x8b0] sm:$0xff]
    %v979 = vld [vmem:[#allocation14 + $0x8b8] sm:$0xff]
    %v980 = vld [vmem:[#allocation14 + $0x8c0] sm:$0xff]
    %v981 = vld [vmem:[#allocation14 + $0x8c8] sm:$0xff]
    %v982 = vld [vmem:[#allocation14 + $0x8d0] sm:$0xff]
    %v983 = vld [vmem:[#allocation14 + $0x8d8] sm:$0xff]
    %v984 = vld [vmem:[#allocation14 + $0x8e0] sm:$0xff]
    %v985 = vld [vmem:[#allocation14 + $0x8e8] sm:$0xff]
    %v986 = vld [vmem:[#allocation14 + $0x8f0] sm:$0xff]
    %v987 = vld [vmem:[#allocation14 + $0x8f8] sm:$0xff]
    %v988 = vld [vmem:[#allocation14 + $0x900] sm:$0xff]
    %v989 = vld [vmem:[#allocation14 + $0x908] sm:$0xff]
    %v990 = vld [vmem:[#allocation14 + $0x910] sm:$0xff]
    %v991 = vld [vmem:[#allocation14 + $0x918] sm:$0xff]
    %v992 = vld [vmem:[#allocation14 + $0x920] sm:$0xff]
    %v993 = vld [vmem:[#allocation14 + $0x928] sm:$0xff]
    %v994 = vld [vmem:[#allocation14 + $0x930] sm:$0xff]
    %v995 = vld [vmem:[#allocation14 + $0x938] sm:$0xff]
    %v996 = vld [vmem:[#allocation14 + $0x940] sm:$0xff]
    %v997 = vld [vmem:[#allocation14 + $0x948] sm:$0xff]
    %v998 = vld [vmem:[#allocation14 + $0x950] sm:$0xff]
    %v999 = vld [vmem:[#allocation14 + $0x958] sm:$0xff]
    %v1000 = vld [vmem:[#allocation14 + $0x960] sm:$0xff]
    %v1001 = vld [vmem:[#allocation14 + $0x968] sm:$0xff]
    %v1002 = vld [vmem:[#allocation14 + $0x970] sm:$0xff]
    %v1003 = vld [vmem:[#allocation14 + $0x978] sm:$0xff]
    %v1004 = vld [vmem:[#allocation14 + $0x980] sm:$0xff]
    %v1005 = vld [vmem:[#allocation14 + $0x988] sm:$0xff]
    %v1006 = vld [vmem:[#allocation14 + $0x990] sm:$0xff]
    %v1007 = vld [vmem:[#allocation14 + $0x998] sm:$0xff]
    %v1008 = vld [vmem:[#allocation14 + $0x9a0] sm:$0xff]
    %v1009 = vld [vmem:[#allocation14 + $0x9a8] sm:$0xff]
    %v1010 = vld [vmem:[#allocation14 + $0x9b0] sm:$0xff]
    %v1011 = vld [vmem:[#allocation14 + $0x9b8] sm:$0xff]
    %v1012 = vld [vmem:[#allocation14 + $0x9c0] sm:$0xff]
    %v1013 = vld [vmem:[#allocation14 + $0x9c8] sm:$0xff]
    %v1014 = vld [vmem:[#allocation14 + $0x9d0] sm:$0xff]
    %v1015 = vld [vmem:[#allocation14 + $0x9d8] sm:$0xff]
    %v1016 = vld [vmem:[#allocation14 + $0x9e0] sm:$0xff]
    %v1017 = vld [vmem:[#allocation14 + $0x9e8] sm:$0xff]
    %v1018 = vld [vmem:[#allocation14 + $0x9f0] sm:$0xff]
    %v1019 = vld [vmem:[#allocation14 + $0x9f8] sm:$0xff]
    %v1020 = vld [vmem:[#allocation14 + $0xa00] sm:$0xff]
    %v1021 = vld [vmem:[#allocation14 + $0xa08] sm:$0xff]
    %v1022 = vld [vmem:[#allocation14 + $0xa10] sm:$0xff]
    %v1023 = vld [vmem:[#allocation14 + $0xa18] sm:$0xff]
    %v1024 = vld [vmem:[#allocation14 + $0xa20] sm:$0xff]
    %v1025 = vld [vmem:[#allocation14 + $0xa28] sm:$0xff]
    %v1026 = vld [vmem:[#allocation14 + $0xa30] sm:$0xff]
    %v1027 = vld [vmem:[#allocation14 + $0xa38] sm:$0xff]
    %v1028 = vld [vmem:[#allocation14 + $0xa40] sm:$0xff]
    %v1029 = vld [vmem:[#allocation14 + $0xa48] sm:$0xff]
    %v1030 = vld [vmem:[#allocation14 + $0xa50] sm:$0xff]
    %v1031 = vld [vmem:[#allocation14 + $0xa58] sm:$0xff]
    %v1032 = vld [vmem:[#allocation14 + $0xa60] sm:$0xff]
    %v1033 = vld [vmem:[#allocation14 + $0xa68] sm:$0xff]
    %v1034 = vld [vmem:[#allocation14 + $0xa70] sm:$0xff]
    %v1035 = vld [vmem:[#allocation14 + $0xa78] sm:$0xff]
    %v1036 = vld [vmem:[#allocation14 + $0xa80] sm:$0xff]
    %v1037 = vld [vmem:[#allocation14 + $0xa88] sm:$0xff]
    %v1038 = vld [vmem:[#allocation14 + $0xa90] sm:$0xff]
    %v1039 = vld [vmem:[#allocation14 + $0xa98] sm:$0xff]
    %v1040 = vld [vmem:[#allocation14 + $0xaa0] sm:$0xff]
    %v1041 = vld [vmem:[#allocation14 + $0xaa8] sm:$0xff]
    %v1042 = vld [vmem:[#allocation14 + $0xab0] sm:$0xff]
    %v1043 = vld [vmem:[#allocation14 + $0xab8] sm:$0xff]
    %v1044 = vld [vmem:[#allocation14 + $0xac0] sm:$0xff]
    %v1045 = vld [vmem:[#allocation14 + $0xac8] sm:$0xff]
    %v1046 = vld [vmem:[#allocation14 + $0xad0] sm:$0xff]
    %v1047 = vld [vmem:[#allocation14 + $0xad8] sm:$0xff]
    %v1048 = vld [vmem:[#allocation14 + $0xae0] sm:$0xff]
    %v1049 = vld [vmem:[#allocation14 + $0xae8] sm:$0xff]
    %v1050 = vld [vmem:[#allocation14 + $0xaf0] sm:$0xff]
    %v1051 = vld [vmem:[#allocation14 + $0xaf8] sm:$0xff]
    %v1052 = vld [vmem:[#allocation14 + $0xb00] sm:$0xff]
    %v1053 = vld [vmem:[#allocation14 + $0xb08] sm:$0xff]
    %v1054 = vld [vmem:[#allocation14 + $0xb10] sm:$0xff]
    %v1055 = vld [vmem:[#allocation14 + $0xb18] sm:$0xff]
    %v1056 = vld [vmem:[#allocation14 + $0xb20] sm:$0xff]
    %v1057 = vld [vmem:[#allocation14 + $0xb28] sm:$0xff]
    %v1058 = vld [vmem:[#allocation14 + $0xb30] sm:$0xff]
    %v1059 = vld [vmem:[#allocation14 + $0xb38] sm:$0xff]
    %v1060 = vld [vmem:[#allocation14 + $0xb40] sm:$0xff]
    %v1061 = vld [vmem:[#allocation14 + $0xb48] sm:$0xff]
    %v1062 = vld [vmem:[#allocation14 + $0xb50] sm:$0xff]
    %v1063 = vld [vmem:[#allocation14 + $0xb58] sm:$0xff]
    %v1064 = vld [vmem:[#allocation14 + $0xb60] sm:$0xff]
    %v1065 = vld [vmem:[#allocation14 + $0xb68] sm:$0xff]
    %v1066 = vld [vmem:[#allocation14 + $0xb70] sm:$0xff]
    %v1067 = vld [vmem:[#allocation14 + $0xb78] sm:$0xff]
    %v1068 = vld [vmem:[#allocation14 + $0xb80] sm:$0xff]
    %v1069 = vld [vmem:[#allocation14 + $0xb88] sm:$0xff]
    %v1070 = vld [vmem:[#allocation14 + $0xb90] sm:$0xff]
    %v1071 = vld [vmem:[#allocation14 + $0xb98] sm:$0xff]
    %v1072 = vld [vmem:[#allocation14 + $0xba0] sm:$0xff]
    %v1073 = vld [vmem:[#allocation14 + $0xba8] sm:$0xff]
    %v1074 = vld [vmem:[#allocation14 + $0xbb0] sm:$0xff]
    %v1075 = vld [vmem:[#allocation14 + $0xbb8] sm:$0xff]
    %v1076 = vld [vmem:[#allocation14 + $0xbc0] sm:$0xff]
    %v1077 = vld [vmem:[#allocation14 + $0xbc8] sm:$0xff]
    %v1078 = vld [vmem:[#allocation14 + $0xbd0] sm:$0xff]
    %v1079 = vld [vmem:[#allocation14 + $0xbd8] sm:$0xff]
    %v1080 = vld [vmem:[#allocation14 + $0xbe0] sm:$0xff]
    %v1081 = vld [vmem:[#allocation14 + $0xbe8] sm:$0xff]
    %v1082 = vld [vmem:[#allocation14 + $0xbf0] sm:$0xff]
    %v1083 = vld [vmem:[#allocation14 + $0xbf8] sm:$0xff]
    %v1084 = vld [vmem:[#allocation14 + $0xc00] sm:$0xff]
    %v1085 = vld [vmem:[#allocation14 + $0xc08] sm:$0xff]
    %v1086 = vld [vmem:[#allocation14 + $0xc10] sm:$0xff]
    %v1087 = vld [vmem:[#allocation14 + $0xc18] sm:$0xff]
    %v1088 = vld [vmem:[#allocation14 + $0xc20] sm:$0xff]
    %v1089 = vld [vmem:[#allocation14 + $0xc28] sm:$0xff]
    %v1090 = vld [vmem:[#allocation14 + $0xc30] sm:$0xff]
    %v1091 = vld [vmem:[#allocation14 + $0xc38] sm:$0xff]
    %v1092 = vld [vmem:[#allocation14 + $0xc40] sm:$0xff]
    %v1093 = vld [vmem:[#allocation14 + $0xc48] sm:$0xff]
    %v1094 = vld [vmem:[#allocation14 + $0xc50] sm:$0xff]
    %v1095 = vld [vmem:[#allocation14 + $0xc58] sm:$0xff]
    %v1096 = vld [vmem:[#allocation14 + $0xc60] sm:$0xff]
    %v1097 = vld [vmem:[#allocation14 + $0xc68] sm:$0xff]
    %v1098 = vld [vmem:[#allocation14 + $0xc70] sm:$0xff]
    %v1099 = vld [vmem:[#allocation14 + $0xc78] sm:$0xff]
    %v1100 = vld [vmem:[#allocation14 + $0xc80] sm:$0xff]
    %v1101 = vld [vmem:[#allocation14 + $0xc88] sm:$0xff]
    %v1102 = vld [vmem:[#allocation14 + $0xc90] sm:$0xff]
    %v1103 = vld [vmem:[#allocation14 + $0xc98] sm:$0xff]
    %v1104 = vld [vmem:[#allocation14 + $0xca0] sm:$0xff]
    %v1105 = vld [vmem:[#allocation14 + $0xca8] sm:$0xff]
    %v1106 = vld [vmem:[#allocation14 + $0xcb0] sm:$0xff]
    %v1107 = vld [vmem:[#allocation14 + $0xcb8] sm:$0xff]
    %v1108 = vld [vmem:[#allocation14 + $0xcc0] sm:$0xff]
    %v1109 = vld [vmem:[#allocation14 + $0xcc8] sm:$0xff]
    %v1110 = vld [vmem:[#allocation14 + $0xcd0] sm:$0xff]
    %v1111 = vld [vmem:[#allocation14 + $0xcd8] sm:$0xff]
    %v1112 = vld [vmem:[#allocation14 + $0xce0] sm:$0xff]
    %v1113 = vld [vmem:[#allocation14 + $0xce8] sm:$0xff]
    %v1114 = vld [vmem:[#allocation14 + $0xcf0] sm:$0xff]
    %v1115 = vld [vmem:[#allocation14 + $0xcf8] sm:$0xff]
    %v1116 = vld [vmem:[#allocation14 + $0xd00] sm:$0xff]
    %v1117 = vld [vmem:[#allocation14 + $0xd08] sm:$0xff]
    %v1118 = vld [vmem:[#allocation14 + $0xd10] sm:$0xff]
    %v1119 = vld [vmem:[#allocation14 + $0xd18] sm:$0xff]
    %v1120 = vld [vmem:[#allocation14 + $0xd20] sm:$0xff]
    %v1121 = vld [vmem:[#allocation14 + $0xd28] sm:$0xff]
    %v1122 = vld [vmem:[#allocation14 + $0xd30] sm:$0xff]
    %v1123 = vld [vmem:[#allocation14 + $0xd38] sm:$0xff]
    %v1124 = vld [vmem:[#allocation14 + $0xd40] sm:$0xff]
    %v1125 = vld [vmem:[#allocation14 + $0xd48] sm:$0xff]
    %v1126 = vld [vmem:[#allocation14 + $0xd50] sm:$0xff]
    %v1127 = vld [vmem:[#allocation14 + $0xd58] sm:$0xff]
    %v1128 = vld [vmem:[#allocation14 + $0xd60] sm:$0xff]
    %v1129 = vld [vmem:[#allocation14 + $0xd68] sm:$0xff]
    %v1130 = vld [vmem:[#allocation14 + $0xd70] sm:$0xff]
    %v1131 = vld [vmem:[#allocation14 + $0xd78] sm:$0xff]
    %v1132 = vld [vmem:[#allocation14 + $0xd80] sm:$0xff]
    %v1133 = vld [vmem:[#allocation14 + $0xd88] sm:$0xff]
    %v1134 = vld [vmem:[#allocation14 + $0xd90] sm:$0xff]
    %v1135 = vld [vmem:[#allocation14 + $0xd98] sm:$0xff]
    %v1136 = vld [vmem:[#allocation14 + $0xda0] sm:$0xff]
    %v1137 = vld [vmem:[#allocation14 + $0xda8] sm:$0xff]
    %v1138 = vld [vmem:[#allocation14 + $0xdb0] sm:$0xff]
    %v1139 = vld [vmem:[#allocation14 + $0xdb8] sm:$0xff]
    %v1140 = vld [vmem:[#allocation14 + $0xdc0] sm:$0xff]
    %v1141 = vld [vmem:[#allocation14 + $0xdc8] sm:$0xff]
    %v1142 = vld [vmem:[#allocation14 + $0xdd0] sm:$0xff]
    %v1143 = vld [vmem:[#allocation14 + $0xdd8] sm:$0xff]
    %v1144 = vld [vmem:[#allocation14 + $0xde0] sm:$0xff]
    %v1145 = vld [vmem:[#allocation14 + $0xde8] sm:$0xff]
    %v1146 = vld [vmem:[#allocation14 + $0xdf0] sm:$0xff]
    %v1147 = vld [vmem:[#allocation14 + $0xdf8] sm:$0xff]
    %v1148 = vld [vmem:[#allocation14 + $0xe00] sm:$0xff]
    %v1149 = vld [vmem:[#allocation14 + $0xe08] sm:$0xff]
    %v1150 = vld [vmem:[#allocation14 + $0xe10] sm:$0xff]
    %v1151 = vld [vmem:[#allocation14 + $0xe18] sm:$0xff]
    %v1152 = vld [vmem:[#allocation14 + $0xe20] sm:$0xff]
    %v1153 = vld [vmem:[#allocation14 + $0xe28] sm:$0xff]
    %v1154 = vld [vmem:[#allocation14 + $0xe30] sm:$0xff]
    %v1155 = vld [vmem:[#allocation14 + $0xe38] sm:$0xff]
    %v1156 = vld [vmem:[#allocation14 + $0xe40] sm:$0xff]
    %v1157 = vld [vmem:[#allocation14 + $0xe48] sm:$0xff]
    %v1158 = vld [vmem:[#allocation14 + $0xe50] sm:$0xff]
    %v1159 = vld [vmem:[#allocation14 + $0xe58] sm:$0xff]
    %v1160 = vld [vmem:[#allocation14 + $0xe60] sm:$0xff]
    %v1161 = vld [vmem:[#allocation14 + $0xe68] sm:$0xff]
    %v1162 = vld [vmem:[#allocation14 + $0xe70] sm:$0xff]
    %v1163 = vld [vmem:[#allocation14 + $0xe78] sm:$0xff]
    %v1164 = vld [vmem:[#allocation14 + $0xe80] sm:$0xff]
    %v1165 = vld [vmem:[#allocation14 + $0xe88] sm:$0xff]
    %v1166 = vld [vmem:[#allocation14 + $0xe90] sm:$0xff]
    %v1167 = vld [vmem:[#allocation14 + $0xe98] sm:$0xff]
    %v1168 = vld [vmem:[#allocation14 + $0xea0] sm:$0xff]
    %v1169 = vld [vmem:[#allocation14 + $0xea8] sm:$0xff]
    %v1170 = vld [vmem:[#allocation14 + $0xeb0] sm:$0xff]
    %v1171 = vld [vmem:[#allocation14 + $0xeb8] sm:$0xff]
    %v1172 = vld [vmem:[#allocation14 + $0xec0] sm:$0xff]
    %v1173 = vld [vmem:[#allocation14 + $0xec8] sm:$0xff]
    %v1174 = vld [vmem:[#allocation14 + $0xed0] sm:$0xff]
    %v1175 = vld [vmem:[#allocation14 + $0xed8] sm:$0xff]
    %v1176 = vld [vmem:[#allocation14 + $0xee0] sm:$0xff]
    %v1177 = vld [vmem:[#allocation14 + $0xee8] sm:$0xff]
    %v1178 = vld [vmem:[#allocation14 + $0xef0] sm:$0xff]
    %v1179 = vld [vmem:[#allocation14 + $0xef8] sm:$0xff]
    %v1180 = vld [vmem:[#allocation14 + $0xf00] sm:$0xff]
    %v1181 = vld [vmem:[#allocation14 + $0xf08] sm:$0xff]
    %v1182 = vld [vmem:[#allocation14 + $0xf10] sm:$0xff]
    %v1183 = vld [vmem:[#allocation14 + $0xf18] sm:$0xff]
    %v1184 = vld [vmem:[#allocation14 + $0xf20] sm:$0xff]
    %v1185 = vld [vmem:[#allocation14 + $0xf28] sm:$0xff]
    %v1186 = vld [vmem:[#allocation14 + $0xf30] sm:$0xff]
    %v1187 = vld [vmem:[#allocation14 + $0xf38] sm:$0xff]
    %v1188 = vld [vmem:[#allocation14 + $0xf40] sm:$0xff]
    %v1189 = vld [vmem:[#allocation14 + $0xf48] sm:$0xff]
    %v1190 = vld [vmem:[#allocation14 + $0xf50] sm:$0xff]
    %v1191 = vld [vmem:[#allocation14 + $0xf58] sm:$0xff]
    %v1192 = vld [vmem:[#allocation14 + $0xf60] sm:$0xff]
    %v1193 = vld [vmem:[#allocation14 + $0xf68] sm:$0xff]
    %v1194 = vld [vmem:[#allocation14 + $0xf70] sm:$0xff]
    %v1195 = vld [vmem:[#allocation14 + $0xf78] sm:$0xff]
    %v1196 = vld [vmem:[#allocation14 + $0xf80] sm:$0xff]
    %v1197 = vld [vmem:[#allocation14 + $0xf88] sm:$0xff]
    %v1198 = vld [vmem:[#allocation14 + $0xf90] sm:$0xff]
    %v1199 = vld [vmem:[#allocation14 + $0xf98] sm:$0xff]
    %v1200 = vld [vmem:[#allocation14 + $0xfa0] sm:$0xff]
    %v1201 = vld [vmem:[#allocation14 + $0xfa8] sm:$0xff]
    %v1202 = vld [vmem:[#allocation14 + $0xfb0] sm:$0xff]
    %v1203 = vld [vmem:[#allocation14 + $0xfb8] sm:$0xff]
    %v1204 = vld [vmem:[#allocation14 + $0xfc0] sm:$0xff]
    %v1205 = vld [vmem:[#allocation14 + $0xfc8] sm:$0xff]
    %v1206 = vld [vmem:[#allocation14 + $0xfd0] sm:$0xff]
    %v1207 = vld [vmem:[#allocation14 + $0xfd8] sm:$0xff]
    %v1208 = vld [vmem:[#allocation14 + $0xfe0] sm:$0xff]
    %v1209 = vld [vmem:[#allocation14 + $0xfe8] sm:$0xff]
    %v1210 = vld [vmem:[#allocation14 + $0xff0] sm:$0xff]
    %v1211 = vld [vmem:[#allocation14 + $0xff8] sm:$0xff]
    %v1212 = vld [vmem:[#allocation14 + $0x1000] sm:$0xff]
    %v1213 = vld [vmem:[#allocation14 + $0x1008] sm:$0xff]
    %v1214 = vld [vmem:[#allocation14 + $0x1010] sm:$0xff]
    %v1215 = vld [vmem:[#allocation14 + $0x1018] sm:$0xff]
    %v1216 = vld [vmem:[#allocation14 + $0x1020] sm:$0xff]
    %v1217 = vld [vmem:[#allocation14 + $0x1028] sm:$0xff]
    %v1218 = vld [vmem:[#allocation14 + $0x1030] sm:$0xff]
    %v1219 = vld [vmem:[#allocation14 + $0x1038] sm:$0xff]
    %v1220 = vld [vmem:[#allocation14 + $0x1040] sm:$0xff]
    %v1221 = vld [vmem:[#allocation14 + $0x1048] sm:$0xff]
    %v1222 = vld [vmem:[#allocation14 + $0x1050] sm:$0xff]
    %v1223 = vld [vmem:[#allocation14 + $0x1058] sm:$0xff]
    %v1224 = vld [vmem:[#allocation14 + $0x1060] sm:$0xff]
    %v1225 = vld [vmem:[#allocation14 + $0x1068] sm:$0xff]
    %v1226 = vld [vmem:[#allocation14 + $0x1070] sm:$0xff]
    %v1227 = vld [vmem:[#allocation14 + $0x1078] sm:$0xff]
    %v1228 = vld [vmem:[#allocation14 + $0x1080] sm:$0xff]
    %v1229 = vld [vmem:[#allocation14 + $0x1088] sm:$0xff]
    %v1230 = vld [vmem:[#allocation14 + $0x1090] sm:$0xff]
    %v1231 = vld [vmem:[#allocation14 + $0x1098] sm:$0xff]
    %v1232 = vld [vmem:[#allocation14 + $0x10a0] sm:$0xff]
    %v1233 = vld [vmem:[#allocation14 + $0x10a8] sm:$0xff]
    %v1234 = vld [vmem:[#allocation14 + $0x10b0] sm:$0xff]
    %v1235 = vld [vmem:[#allocation14 + $0x10b8] sm:$0xff]
    %v1236 = vld [vmem:[#allocation14 + $0x10c0] sm:$0xff]
    %v1237 = vld [vmem:[#allocation14 + $0x10c8] sm:$0xff]
    %v1238 = vld [vmem:[#allocation14 + $0x10d0] sm:$0xff]
    %v1239 = vld [vmem:[#allocation14 + $0x10d8] sm:$0xff]
    %v1240 = vld [vmem:[#allocation14 + $0x10e0] sm:$0xff]
    %v1241 = vld [vmem:[#allocation14 + $0x10e8] sm:$0xff]
    %v1242 = vld [vmem:[#allocation14 + $0x10f0] sm:$0xff]
    %v1243 = vld [vmem:[#allocation14 + $0x10f8] sm:$0xff]
    %v1244 = vld [vmem:[#allocation14 + $0x1100] sm:$0xff]
    %v1245 = vld [vmem:[#allocation14 + $0x1108] sm:$0xff]
    %v1246 = vld [vmem:[#allocation14 + $0x1110] sm:$0xff]
    %v1247 = vld [vmem:[#allocation14 + $0x1118] sm:$0xff]
    %v1248 = vld [vmem:[#allocation14 + $0x1120] sm:$0xff]
    %v1249 = vld [vmem:[#allocation14 + $0x1128] sm:$0xff]
    %v1250 = vld [vmem:[#allocation14 + $0x1130] sm:$0xff]
    %v1251 = vld [vmem:[#allocation14 + $0x1138] sm:$0xff]
    %v1252 = vld [vmem:[#allocation14 + $0x1140] sm:$0xff]
    %v1253 = vld [vmem:[#allocation14 + $0x1148] sm:$0xff]
    %v1254 = vld [vmem:[#allocation14 + $0x1150] sm:$0xff]
    %v1255 = vld [vmem:[#allocation14 + $0x1158] sm:$0xff]
    %v1256 = vld [vmem:[#allocation14 + $0x1160] sm:$0xff]
    %v1257 = vld [vmem:[#allocation14 + $0x1168] sm:$0xff]
    %v1258 = vld [vmem:[#allocation14 + $0x1170] sm:$0xff]
    %v1259 = vld [vmem:[#allocation14 + $0x1178] sm:$0xff]
    %v1260 = vld [vmem:[#allocation14 + $0x1180] sm:$0xff]
    %v1261 = vld [vmem:[#allocation14 + $0x1188] sm:$0xff]
    %v1262 = vld [vmem:[#allocation14 + $0x1190] sm:$0xff]
    %v1263 = vld [vmem:[#allocation14 + $0x1198] sm:$0xff]
    %v1264 = vld [vmem:[#allocation14 + $0x11a0] sm:$0xff]
    %v1265 = vld [vmem:[#allocation14 + $0x11a8] sm:$0xff]
    %v1266 = vld [vmem:[#allocation14 + $0x11b0] sm:$0xff]
    %v1267 = vld [vmem:[#allocation14 + $0x11b8] sm:$0xff]
    %v1268 = vld [vmem:[#allocation14 + $0x11c0] sm:$0xff]
    %v1269 = vld [vmem:[#allocation14 + $0x11c8] sm:$0xff]
    %v1270 = vld [vmem:[#allocation14 + $0x11d0] sm:$0xff]
    %v1271 = vld [vmem:[#allocation14 + $0x11d8] sm:$0xff]
    %v1272 = vld [vmem:[#allocation14 + $0x11e0] sm:$0xff]
    %v1273 = vld [vmem:[#allocation14 + $0x11e8] sm:$0xff]
    %v1274 = vld [vmem:[#allocation14 + $0x11f0] sm:$0xff]
    %v1275 = vld [vmem:[#allocation14 + $0x11f8] sm:$0xff]
    %v1276 = vld [vmem:[#allocation14 + $0x1200] sm:$0xff]
    %v1277 = vld [vmem:[#allocation14 + $0x1208] sm:$0xff]
    %v1278 = vld [vmem:[#allocation14 + $0x1210] sm:$0xff]
    %v1279 = vld [vmem:[#allocation14 + $0x1218] sm:$0xff]
    %v1280 = vld [vmem:[#allocation14 + $0x1220] sm:$0xff]
    %v1281 = vld [vmem:[#allocation14 + $0x1228] sm:$0xff]
    %v1282 = vld [vmem:[#allocation14 + $0x1230] sm:$0xff]
    %v1283 = vld [vmem:[#allocation14 + $0x1238] sm:$0xff]
    %v1284 = vld [vmem:[#allocation14 + $0x1240] sm:$0xff]
    %v1285 = vld [vmem:[#allocation14 + $0x1248] sm:$0xff]
    %v1286 = vld [vmem:[#allocation14 + $0x1250] sm:$0xff]
    %v1287 = vld [vmem:[#allocation14 + $0x1258] sm:$0xff]
    %v1288 = vld [vmem:[#allocation14 + $0x1260] sm:$0xff]
    %v1289 = vld [vmem:[#allocation14 + $0x1268] sm:$0xff]
    %v1290 = vld [vmem:[#allocation14 + $0x1270] sm:$0xff]
    %v1291 = vld [vmem:[#allocation14 + $0x1278] sm:$0xff]
    %v1292 = vld [vmem:[#allocation14 + $0x1280] sm:$0xff]
    %v1293 = vld [vmem:[#allocation14 + $0x1288] sm:$0xff]
    %v1294 = vld [vmem:[#allocation14 + $0x1290] sm:$0xff]
    %v1295 = vld [vmem:[#allocation14 + $0x1298] sm:$0xff]
    %v1296 = vld [vmem:[#allocation14 + $0x12a0] sm:$0xff]
    %v1297 = vld [vmem:[#allocation14 + $0x12a8] sm:$0xff]
    %v1298 = vld [vmem:[#allocation14 + $0x12b0] sm:$0xff]
    %v1299 = vld [vmem:[#allocation14 + $0x12b8] sm:$0xff]
    %v1300 = vld [vmem:[#allocation14 + $0x12c0] sm:$0xff]
    %v1301 = vld [vmem:[#allocation14 + $0x12c8] sm:$0xff]
    %v1302 = vld [vmem:[#allocation14 + $0x12d0] sm:$0xff]
    %v1303 = vld [vmem:[#allocation14 + $0x12d8] sm:$0xff]
    %v1304 = vld [vmem:[#allocation14 + $0x12e0] sm:$0xff]
    %v1305 = vld [vmem:[#allocation14 + $0x12e8] sm:$0xff]
    %v1306 = vld [vmem:[#allocation14 + $0x12f0] sm:$0xff]
    %v1307 = vld [vmem:[#allocation14 + $0x12f8] sm:$0xff]
    %v1308 = vld [vmem:[#allocation14 + $0x1300] sm:$0xff]
    %v1309 = vld [vmem:[#allocation14 + $0x1308] sm:$0xff]
    %v1310 = vld [vmem:[#allocation14 + $0x1310] sm:$0xff]
    %v1311 = vld [vmem:[#allocation14 + $0x1318] sm:$0xff]
    %v1312 = vld [vmem:[#allocation14 + $0x1320] sm:$0xff]
    %v1313 = vld [vmem:[#allocation14 + $0x1328] sm:$0xff]
    %v1314 = vld [vmem:[#allocation14 + $0x1330] sm:$0xff]
    %v1315 = vld [vmem:[#allocation14 + $0x1338] sm:$0xff]
    %v1316 = vld [vmem:[#allocation14 + $0x1340] sm:$0xff]
    %v1317 = vld [vmem:[#allocation14 + $0x1348] sm:$0xff]
    %v1318 = vld [vmem:[#allocation14 + $0x1350] sm:$0xff]
    %v1319 = vld [vmem:[#allocation14 + $0x1358] sm:$0xff]
    %v1320 = vld [vmem:[#allocation14 + $0x1360] sm:$0xff]
    %v1321 = vld [vmem:[#allocation14 + $0x1368] sm:$0xff]
    %v1322 = vld [vmem:[#allocation14 + $0x1370] sm:$0xff]
    %v1323 = vld [vmem:[#allocation14 + $0x1378] sm:$0xff]
    %v1324 = vld [vmem:[#allocation14 + $0x1380] sm:$0xff]
    %v1325 = vld [vmem:[#allocation14 + $0x1388] sm:$0xff]
    %v1326 = vld [vmem:[#allocation14 + $0x1390] sm:$0xff]
    %v1327 = vld [vmem:[#allocation14 + $0x1398] sm:$0xff]
    %v1328 = vld [vmem:[#allocation14 + $0x13a0] sm:$0xff]
    %v1329 = vld [vmem:[#allocation14 + $0x13a8] sm:$0xff]
    %v1330 = vld [vmem:[#allocation14 + $0x13b0] sm:$0xff]
    %v1331 = vld [vmem:[#allocation14 + $0x13b8] sm:$0xff]
    %v1332 = vld [vmem:[#allocation14 + $0x13c0] sm:$0xff]
    %v1333 = vld [vmem:[#allocation14 + $0x13c8] sm:$0xff]
    %v1334 = vld [vmem:[#allocation14 + $0x13d0] sm:$0xff]
    %v1335 = vld [vmem:[#allocation14 + $0x13d8] sm:$0xff]
    %v1336 = vld [vmem:[#allocation14 + $0x13e0] sm:$0xff]
    %v1337 = vld [vmem:[#allocation14 + $0x13e8] sm:$0xff]
    %v1338 = vld [vmem:[#allocation14 + $0x13f0] sm:$0xff]
    %v1339 = vld [vmem:[#allocation14 + $0x13f8] sm:$0xff]
    %v1980 = vunpack.c.l.b16 %v700
    %v1981 = vunpack.c.h.b16 %v700
    %v1982 = vunpack.c.l.b16 %v701
    %v1983 = vunpack.c.h.b16 %v701
    %v1984 = vunpack.c.l.b16 %v702
    %v1985 = vunpack.c.h.b16 %v702
    %v1986 = vunpack.c.l.b16 %v703
    %v1987 = vunpack.c.h.b16 %v703
    %v1988 = vunpack.c.l.b16 %v704
    %v1989 = vunpack.c.h.b16 %v704
    %v1990 = vunpack.c.l.b16 %v705
    %v1991 = vunpack.c.h.b16 %v705
    %v1992 = vunpack.c.l.b16 %v706
    %v1993 = vunpack.c.h.b16 %v706
    %v1994 = vunpack.c.l.b16 %v707
    %v1995 = vunpack.c.h.b16 %v707
    %v1996 = vunpack.c.l.b16 %v708
    %v1997 = vunpack.c.h.b16 %v708
    %v1998 = vunpack.c.l.b16 %v709
    %v1999 = vunpack.c.h.b16 %v709
    %v2000 = vunpack.c.l.b16 %v710
    %v2001 = vunpack.c.h.b16 %v710
    %v2002 = vunpack.c.l.b16 %v711
    %v2003 = vunpack.c.h.b16 %v711
    %v2004 = vunpack.c.l.b16 %v712
    %v2005 = vunpack.c.h.b16 %v712
    %v2006 = vunpack.c.l.b16 %v713
    %v2007 = vunpack.c.h.b16 %v713
    %v2008 = vunpack.c.l.b16 %v714
    %v2009 = vunpack.c.h.b16 %v714
    %v2010 = vunpack.c.l.b16 %v715
    %v2011 = vunpack.c.h.b16 %v715
    %v2012 = vunpack.c.l.b16 %v716
    %v2013 = vunpack.c.h.b16 %v716
    %v2014 = vunpack.c.l.b16 %v717
    %v2015 = vunpack.c.h.b16 %v717
    %v2016 = vunpack.c.l.b16 %v718
    %v2017 = vunpack.c.h.b16 %v718
    %v2018 = vunpack.c.l.b16 %v719
    %v2019 = vunpack.c.h.b16 %v719
    %v2020 = vunpack.c.l.b16 %v720
    %v2021 = vunpack.c.h.b16 %v720
    %v2022 = vunpack.c.l.b16 %v721
    %v2023 = vunpack.c.h.b16 %v721
    %v2024 = vunpack.c.l.b16 %v722
    %v2025 = vunpack.c.h.b16 %v722
    %v2026 = vunpack.c.l.b16 %v723
    %v2027 = vunpack.c.h.b16 %v723
    %v2028 = vunpack.c.l.b16 %v724
    %v2029 = vunpack.c.h.b16 %v724
    %v2030 = vunpack.c.l.b16 %v725
    %v2031 = vunpack.c.h.b16 %v725
    %v2032 = vunpack.c.l.b16 %v726
    %v2033 = vunpack.c.h.b16 %v726
    %v2034 = vunpack.c.l.b16 %v727
    %v2035 = vunpack.c.h.b16 %v727
    %v2036 = vunpack.c.l.b16 %v728
    %v2037 = vunpack.c.h.b16 %v728
    %v2038 = vunpack.c.l.b16 %v729
    %v2039 = vunpack.c.h.b16 %v729
    %v2040 = vunpack.c.l.b16 %v730
    %v2041 = vunpack.c.h.b16 %v730
    %v2042 = vunpack.c.l.b16 %v731
    %v2043 = vunpack.c.h.b16 %v731
    %v2044 = vunpack.c.l.b16 %v732
    %v2045 = vunpack.c.h.b16 %v732
    %v2046 = vunpack.c.l.b16 %v733
    %v2047 = vunpack.c.h.b16 %v733
    %v2048 = vunpack.c.l.b16 %v734
    %v2049 = vunpack.c.h.b16 %v734
    %v2050 = vunpack.c.l.b16 %v735
    %v2051 = vunpack.c.h.b16 %v735
    %v2052 = vunpack.c.l.b16 %v736
    %v2053 = vunpack.c.h.b16 %v736
    %v2054 = vunpack.c.l.b16 %v737
    %v2055 = vunpack.c.h.b16 %v737
    %v2056 = vunpack.c.l.b16 %v738
    %v2057 = vunpack.c.h.b16 %v738
    %v2058 = vunpack.c.l.b16 %v739
    %v2059 = vunpack.c.h.b16 %v739
    %v2060 = vunpack.c.l.b16 %v740
    %v2061 = vunpack.c.h.b16 %v740
    %v2062 = vunpack.c.l.b16 %v741
    %v2063 = vunpack.c.h.b16 %v741
    %v2064 = vunpack.c.l.b16 %v742
    %v2065 = vunpack.c.h.b16 %v742
    %v2066 = vunpack.c.l.b16 %v743
    %v2067 = vunpack.c.h.b16 %v743
    %v2068 = vunpack.c.l.b16 %v744
    %v2069 = vunpack.c.h.b16 %v744
    %v2070 = vunpack.c.l.b16 %v745
    %v2071 = vunpack.c.h.b16 %v745
    %v2072 = vunpack.c.l.b16 %v746
    %v2073 = vunpack.c.h.b16 %v746
    %v2074 = vunpack.c.l.b16 %v747
    %v2075 = vunpack.c.h.b16 %v747
    %v2076 = vunpack.c.l.b16 %v748
    %v2077 = vunpack.c.h.b16 %v748
    %v2078 = vunpack.c.l.b16 %v749
    %v2079 = vunpack.c.h.b16 %v749
    %v2080 = vunpack.c.l.b16 %v750
    %v2081 = vunpack.c.h.b16 %v750
    %v2082 = vunpack.c.l.b16 %v751
    %v2083 = vunpack.c.h.b16 %v751
    %v2084 = vunpack.c.l.b16 %v752
    %v2085 = vunpack.c.h.b16 %v752
    %v2086 = vunpack.c.l.b16 %v753
    %v2087 = vunpack.c.h.b16 %v753
    %v2088 = vunpack.c.l.b16 %v754
    %v2089 = vunpack.c.h.b16 %v754
    %v2090 = vunpack.c.l.b16 %v755
    %v2091 = vunpack.c.h.b16 %v755
    %v2092 = vunpack.c.l.b16 %v756
    %v2093 = vunpack.c.h.b16 %v756
    %v2094 = vunpack.c.l.b16 %v757
    %v2095 = vunpack.c.h.b16 %v757
    %v2096 = vunpack.c.l.b16 %v758
    %v2097 = vunpack.c.h.b16 %v758
    %v2098 = vunpack.c.l.b16 %v759
    %v2099 = vunpack.c.h.b16 %v759
    %v2100 = vunpack.c.l.b16 %v760
    %v2101 = vunpack.c.h.b16 %v760
    %v2102 = vunpack.c.l.b16 %v761
    %v2103 = vunpack.c.h.b16 %v761
    %v2104 = vunpack.c.l.b16 %v762
    %v2105 = vunpack.c.h.b16 %v762
    %v2106 = vunpack.c.l.b16 %v763
    %v2107 = vunpack.c.h.b16 %v763
    %v2108 = vunpack.c.l.b16 %v764
    %v2109 = vunpack.c.h.b16 %v764
    %v2110 = vunpack.c.l.b16 %v765
    %v2111 = vunpack.c.h.b16 %v765
    %v2112 = vunpack.c.l.b16 %v766
    %v2113 = vunpack.c.h.b16 %v766
    %v2114 = vunpack.c.l.b16 %v767
    %v2115 = vunpack.c.h.b16 %v767
    %v2116 = vunpack.c.l.b16 %v768
    %v2117 = vunpack.c.h.b16 %v768
    %v2118 = vunpack.c.l.b16 %v769
    %v2119 = vunpack.c.h.b16 %v769
    %v2120 = vunpack.c.l.b16 %v770
    %v2121 = vunpack.c.h.b16 %v770
    %v2122 = vunpack.c.l.b16 %v771
    %v2123 = vunpack.c.h.b16 %v771
    %v2124 = vunpack.c.l.b16 %v772
    %v2125 = vunpack.c.h.b16 %v772
    %v2126 = vunpack.c.l.b16 %v773
    %v2127 = vunpack.c.h.b16 %v773
    %v2128 = vunpack.c.l.b16 %v774
    %v2129 = vunpack.c.h.b16 %v774
    %v2130 = vunpack.c.l.b16 %v775
    %v2131 = vunpack.c.h.b16 %v775
    %v2132 = vunpack.c.l.b16 %v776
    %v2133 = vunpack.c.h.b16 %v776
    %v2134 = vunpack.c.l.b16 %v777
    %v2135 = vunpack.c.h.b16 %v777
    %v2136 = vunpack.c.l.b16 %v778
    %v2137 = vunpack.c.h.b16 %v778
    %v2138 = vunpack.c.l.b16 %v779
    %v2139 = vunpack.c.h.b16 %v779
    %v2140 = vunpack.c.l.b16 %v780
    %v2141 = vunpack.c.h.b16 %v780
    %v2142 = vunpack.c.l.b16 %v781
    %v2143 = vunpack.c.h.b16 %v781
    %v2144 = vunpack.c.l.b16 %v782
    %v2145 = vunpack.c.h.b16 %v782
    %v2146 = vunpack.c.l.b16 %v783
    %v2147 = vunpack.c.h.b16 %v783
    %v2148 = vunpack.c.l.b16 %v784
    %v2149 = vunpack.c.h.b16 %v784
    %v2150 = vunpack.c.l.b16 %v785
    %v2151 = vunpack.c.h.b16 %v785
    %v2152 = vunpack.c.l.b16 %v786
    %v2153 = vunpack.c.h.b16 %v786
    %v2154 = vunpack.c.l.b16 %v787
    %v2155 = vunpack.c.h.b16 %v787
    %v2156 = vunpack.c.l.b16 %v788
    %v2157 = vunpack.c.h.b16 %v788
    %v2158 = vunpack.c.l.b16 %v789
    %v2159 = vunpack.c.h.b16 %v789
    %v2160 = vunpack.c.l.b16 %v790
    %v2161 = vunpack.c.h.b16 %v790
    %v2162 = vunpack.c.l.b16 %v791
    %v2163 = vunpack.c.h.b16 %v791
    %v2164 = vunpack.c.l.b16 %v792
    %v2165 = vunpack.c.h.b16 %v792
    %v2166 = vunpack.c.l.b16 %v793
    %v2167 = vunpack.c.h.b16 %v793
    %v2168 = vunpack.c.l.b16 %v794
    %v2169 = vunpack.c.h.b16 %v794
    %v2170 = vunpack.c.l.b16 %v795
    %v2171 = vunpack.c.h.b16 %v795
    %v2172 = vunpack.c.l.b16 %v796
    %v2173 = vunpack.c.h.b16 %v796
    %v2174 = vunpack.c.l.b16 %v797
    %v2175 = vunpack.c.h.b16 %v797
    %v2176 = vunpack.c.l.b16 %v798
    %v2177 = vunpack.c.h.b16 %v798
    %v2178 = vunpack.c.l.b16 %v799
    %v2179 = vunpack.c.h.b16 %v799
    %v2180 = vunpack.c.l.b16 %v800
    %v2181 = vunpack.c.h.b16 %v800
    %v2182 = vunpack.c.l.b16 %v801
    %v2183 = vunpack.c.h.b16 %v801
    %v2184 = vunpack.c.l.b16 %v802
    %v2185 = vunpack.c.h.b16 %v802
    %v2186 = vunpack.c.l.b16 %v803
    %v2187 = vunpack.c.h.b16 %v803
    %v2188 = vunpack.c.l.b16 %v804
    %v2189 = vunpack.c.h.b16 %v804
    %v2190 = vunpack.c.l.b16 %v805
    %v2191 = vunpack.c.h.b16 %v805
    %v2192 = vunpack.c.l.b16 %v806
    %v2193 = vunpack.c.h.b16 %v806
    %v2194 = vunpack.c.l.b16 %v807
    %v2195 = vunpack.c.h.b16 %v807
    %v2196 = vunpack.c.l.b16 %v808
    %v2197 = vunpack.c.h.b16 %v808
    %v2198 = vunpack.c.l.b16 %v809
    %v2199 = vunpack.c.h.b16 %v809
    %v2200 = vunpack.c.l.b16 %v810
    %v2201 = vunpack.c.h.b16 %v810
    %v2202 = vunpack.c.l.b16 %v811
    %v2203 = vunpack.c.h.b16 %v811
    %v2204 = vunpack.c.l.b16 %v812
    %v2205 = vunpack.c.h.b16 %v812
    %v2206 = vunpack.c.l.b16 %v813
    %v2207 = vunpack.c.h.b16 %v813
    %v2208 = vunpack.c.l.b16 %v814
    %v2209 = vunpack.c.h.b16 %v814
    %v2210 = vunpack.c.l.b16 %v815
    %v2211 = vunpack.c.h.b16 %v815
    %v2212 = vunpack.c.l.b16 %v816
    %v2213 = vunpack.c.h.b16 %v816
    %v2214 = vunpack.c.l.b16 %v817
    %v2215 = vunpack.c.h.b16 %v817
    %v2216 = vunpack.c.l.b16 %v818
    %v2217 = vunpack.c.h.b16 %v818
    %v2218 = vunpack.c.l.b16 %v819
    %v2219 = vunpack.c.h.b16 %v819
    %v2220 = vunpack.c.l.b16 %v820
    %v2221 = vunpack.c.h.b16 %v820
    %v2222 = vunpack.c.l.b16 %v821
    %v2223 = vunpack.c.h.b16 %v821
    %v2224 = vunpack.c.l.b16 %v822
    %v2225 = vunpack.c.h.b16 %v822
    %v2226 = vunpack.c.l.b16 %v823
    %v2227 = vunpack.c.h.b16 %v823
    %v2228 = vunpack.c.l.b16 %v824
    %v2229 = vunpack.c.h.b16 %v824
    %v2230 = vunpack.c.l.b16 %v825
    %v2231 = vunpack.c.h.b16 %v825
    %v2232 = vunpack.c.l.b16 %v826
    %v2233 = vunpack.c.h.b16 %v826
    %v2234 = vunpack.c.l.b16 %v827
    %v2235 = vunpack.c.h.b16 %v827
    %v2236 = vunpack.c.l.b16 %v828
    %v2237 = vunpack.c.h.b16 %v828
    %v2238 = vunpack.c.l.b16 %v829
    %v2239 = vunpack.c.h.b16 %v829
    %v2240 = vunpack.c.l.b16 %v830
    %v2241 = vunpack.c.h.b16 %v830
    %v2242 = vunpack.c.l.b16 %v831
    %v2243 = vunpack.c.h.b16 %v831
    %v2244 = vunpack.c.l.b16 %v832
    %v2245 = vunpack.c.h.b16 %v832
    %v2246 = vunpack.c.l.b16 %v833
    %v2247 = vunpack.c.h.b16 %v833
    %v2248 = vunpack.c.l.b16 %v834
    %v2249 = vunpack.c.h.b16 %v834
    %v2250 = vunpack.c.l.b16 %v835
    %v2251 = vunpack.c.h.b16 %v835
    %v2252 = vunpack.c.l.b16 %v836
    %v2253 = vunpack.c.h.b16 %v836
    %v2254 = vunpack.c.l.b16 %v837
    %v2255 = vunpack.c.h.b16 %v837
    %v2256 = vunpack.c.l.b16 %v838
    %v2257 = vunpack.c.h.b16 %v838
    %v2258 = vunpack.c.l.b16 %v839
    %v2259 = vunpack.c.h.b16 %v839
    %v2260 = vunpack.c.l.b16 %v840
    %v2261 = vunpack.c.h.b16 %v840
    %v2262 = vunpack.c.l.b16 %v841
    %v2263 = vunpack.c.h.b16 %v841
    %v2264 = vunpack.c.l.b16 %v842
    %v2265 = vunpack.c.h.b16 %v842
    %v2266 = vunpack.c.l.b16 %v843
    %v2267 = vunpack.c.h.b16 %v843
    %v2268 = vunpack.c.l.b16 %v844
    %v2269 = vunpack.c.h.b16 %v844
    %v2270 = vunpack.c.l.b16 %v845
    %v2271 = vunpack.c.h.b16 %v845
    %v2272 = vunpack.c.l.b16 %v846
    %v2273 = vunpack.c.h.b16 %v846
    %v2274 = vunpack.c.l.b16 %v847
    %v2275 = vunpack.c.h.b16 %v847
    %v2276 = vunpack.c.l.b16 %v848
    %v2277 = vunpack.c.h.b16 %v848
    %v2278 = vunpack.c.l.b16 %v849
    %v2279 = vunpack.c.h.b16 %v849
    %v2280 = vunpack.c.l.b16 %v850
    %v2281 = vunpack.c.h.b16 %v850
    %v2282 = vunpack.c.l.b16 %v851
    %v2283 = vunpack.c.h.b16 %v851
    %v2284 = vunpack.c.l.b16 %v852
    %v2285 = vunpack.c.h.b16 %v852
    %v2286 = vunpack.c.l.b16 %v853
    %v2287 = vunpack.c.h.b16 %v853
    %v2288 = vunpack.c.l.b16 %v854
    %v2289 = vunpack.c.h.b16 %v854
    %v2290 = vunpack.c.l.b16 %v855
    %v2291 = vunpack.c.h.b16 %v855
    %v2292 = vunpack.c.l.b16 %v856
    %v2293 = vunpack.c.h.b16 %v856
    %v2294 = vunpack.c.l.b16 %v857
    %v2295 = vunpack.c.h.b16 %v857
    %v2296 = vunpack.c.l.b16 %v858
    %v2297 = vunpack.c.h.b16 %v858
    %v2298 = vunpack.c.l.b16 %v859
    %v2299 = vunpack.c.h.b16 %v859
    %v2300 = vunpack.c.l.b16 %v860
    %v2301 = vunpack.c.h.b16 %v860
    %v2302 = vunpack.c.l.b16 %v861
    %v2303 = vunpack.c.h.b16 %v861
    %v2304 = vunpack.c.l.b16 %v862
    %v2305 = vunpack.c.h.b16 %v862
    %v2306 = vunpack.c.l.b16 %v863
    %v2307 = vunpack.c.h.b16 %v863
    %v2308 = vunpack.c.l.b16 %v864
    %v2309 = vunpack.c.h.b16 %v864
    %v2310 = vunpack.c.l.b16 %v865
    %v2311 = vunpack.c.h.b16 %v865
    %v2312 = vunpack.c.l.b16 %v866
    %v2313 = vunpack.c.h.b16 %v866
    %v2314 = vunpack.c.l.b16 %v867
    %v2315 = vunpack.c.h.b16 %v867
    %v2316 = vunpack.c.l.b16 %v868
    %v2317 = vunpack.c.h.b16 %v868
    %v2318 = vunpack.c.l.b16 %v869
    %v2319 = vunpack.c.h.b16 %v869
    %v2320 = vunpack.c.l.b16 %v870
    %v2321 = vunpack.c.h.b16 %v870
    %v2322 = vunpack.c.l.b16 %v871
    %v2323 = vunpack.c.h.b16 %v871
    %v2324 = vunpack.c.l.b16 %v872
    %v2325 = vunpack.c.h.b16 %v872
    %v2326 = vunpack.c.l.b16 %v873
    %v2327 = vunpack.c.h.b16 %v873
    %v2328 = vunpack.c.l.b16 %v874
    %v2329 = vunpack.c.h.b16 %v874
    %v2330 = vunpack.c.l.b16 %v875
    %v2331 = vunpack.c.h.b16 %v875
    %v2332 = vunpack.c.l.b16 %v876
    %v2333 = vunpack.c.h.b16 %v876
    %v2334 = vunpack.c.l.b16 %v877
    %v2335 = vunpack.c.h.b16 %v877
    %v2336 = vunpack.c.l.b16 %v878
    %v2337 = vunpack.c.h.b16 %v878
    %v2338 = vunpack.c.l.b16 %v879
    %v2339 = vunpack.c.h.b16 %v879
    %v2340 = vunpack.c.l.b16 %v880
    %v2341 = vunpack.c.h.b16 %v880
    %v2342 = vunpack.c.l.b16 %v881
    %v2343 = vunpack.c.h.b16 %v881
    %v2344 = vunpack.c.l.b16 %v882
    %v2345 = vunpack.c.h.b16 %v882
    %v2346 = vunpack.c.l.b16 %v883
    %v2347 = vunpack.c.h.b16 %v883
    %v2348 = vunpack.c.l.b16 %v884
    %v2349 = vunpack.c.h.b16 %v884
    %v2350 = vunpack.c.l.b16 %v885
    %v2351 = vunpack.c.h.b16 %v885
    %v2352 = vunpack.c.l.b16 %v886
    %v2353 = vunpack.c.h.b16 %v886
    %v2354 = vunpack.c.l.b16 %v887
    %v2355 = vunpack.c.h.b16 %v887
    %v2356 = vunpack.c.l.b16 %v888
    %v2357 = vunpack.c.h.b16 %v888
    %v2358 = vunpack.c.l.b16 %v889
    %v2359 = vunpack.c.h.b16 %v889
    %v2360 = vunpack.c.l.b16 %v890
    %v2361 = vunpack.c.h.b16 %v890
    %v2362 = vunpack.c.l.b16 %v891
    %v2363 = vunpack.c.h.b16 %v891
    %v2364 = vunpack.c.l.b16 %v892
    %v2365 = vunpack.c.h.b16 %v892
    %v2366 = vunpack.c.l.b16 %v893
    %v2367 = vunpack.c.h.b16 %v893
    %v2368 = vunpack.c.l.b16 %v894
    %v2369 = vunpack.c.h.b16 %v894
    %v2370 = vunpack.c.l.b16 %v895
    %v2371 = vunpack.c.h.b16 %v895
    %v2372 = vunpack.c.l.b16 %v896
    %v2373 = vunpack.c.h.b16 %v896
    %v2374 = vunpack.c.l.b16 %v897
    %v2375 = vunpack.c.h.b16 %v897
    %v2376 = vunpack.c.l.b16 %v898
    %v2377 = vunpack.c.h.b16 %v898
    %v2378 = vunpack.c.l.b16 %v899
    %v2379 = vunpack.c.h.b16 %v899
    %v2380 = vunpack.c.l.b16 %v900
    %v2381 = vunpack.c.h.b16 %v900
    %v2382 = vunpack.c.l.b16 %v901
    %v2383 = vunpack.c.h.b16 %v901
    %v2384 = vunpack.c.l.b16 %v902
    %v2385 = vunpack.c.h.b16 %v902
    %v2386 = vunpack.c.l.b16 %v903
    %v2387 = vunpack.c.h.b16 %v903
    %v2388 = vunpack.c.l.b16 %v904
    %v2389 = vunpack.c.h.b16 %v904
    %v2390 = vunpack.c.l.b16 %v905
    %v2391 = vunpack.c.h.b16 %v905
    %v2392 = vunpack.c.l.b16 %v906
    %v2393 = vunpack.c.h.b16 %v906
    %v2394 = vunpack.c.l.b16 %v907
    %v2395 = vunpack.c.h.b16 %v907
    %v2396 = vunpack.c.l.b16 %v908
    %v2397 = vunpack.c.h.b16 %v908
    %v2398 = vunpack.c.l.b16 %v909
    %v2399 = vunpack.c.h.b16 %v909
    %v2400 = vunpack.c.l.b16 %v910
    %v2401 = vunpack.c.h.b16 %v910
    %v2402 = vunpack.c.l.b16 %v911
    %v2403 = vunpack.c.h.b16 %v911
    %v2404 = vunpack.c.l.b16 %v912
    %v2405 = vunpack.c.h.b16 %v912
    %v2406 = vunpack.c.l.b16 %v913
    %v2407 = vunpack.c.h.b16 %v913
    %v2408 = vunpack.c.l.b16 %v914
    %v2409 = vunpack.c.h.b16 %v914
    %v2410 = vunpack.c.l.b16 %v915
    %v2411 = vunpack.c.h.b16 %v915
    %v2412 = vunpack.c.l.b16 %v916
    %v2413 = vunpack.c.h.b16 %v916
    %v2414 = vunpack.c.l.b16 %v917
    %v2415 = vunpack.c.h.b16 %v917
    %v2416 = vunpack.c.l.b16 %v918
    %v2417 = vunpack.c.h.b16 %v918
    %v2418 = vunpack.c.l.b16 %v919
    %v2419 = vunpack.c.h.b16 %v919
    %v2420 = vunpack.c.l.b16 %v920
    %v2421 = vunpack.c.h.b16 %v920
    %v2422 = vunpack.c.l.b16 %v921
    %v2423 = vunpack.c.h.b16 %v921
    %v2424 = vunpack.c.l.b16 %v922
    %v2425 = vunpack.c.h.b16 %v922
    %v2426 = vunpack.c.l.b16 %v923
    %v2427 = vunpack.c.h.b16 %v923
    %v2428 = vunpack.c.l.b16 %v924
    %v2429 = vunpack.c.h.b16 %v924
    %v2430 = vunpack.c.l.b16 %v925
    %v2431 = vunpack.c.h.b16 %v925
    %v2432 = vunpack.c.l.b16 %v926
    %v2433 = vunpack.c.h.b16 %v926
    %v2434 = vunpack.c.l.b16 %v927
    %v2435 = vunpack.c.h.b16 %v927
    %v2436 = vunpack.c.l.b16 %v928
    %v2437 = vunpack.c.h.b16 %v928
    %v2438 = vunpack.c.l.b16 %v929
    %v2439 = vunpack.c.h.b16 %v929
    %v2440 = vunpack.c.l.b16 %v930
    %v2441 = vunpack.c.h.b16 %v930
    %v2442 = vunpack.c.l.b16 %v931
    %v2443 = vunpack.c.h.b16 %v931
    %v2444 = vunpack.c.l.b16 %v932
    %v2445 = vunpack.c.h.b16 %v932
    %v2446 = vunpack.c.l.b16 %v933
    %v2447 = vunpack.c.h.b16 %v933
    %v2448 = vunpack.c.l.b16 %v934
    %v2449 = vunpack.c.h.b16 %v934
    %v2450 = vunpack.c.l.b16 %v935
    %v2451 = vunpack.c.h.b16 %v935
    %v2452 = vunpack.c.l.b16 %v936
    %v2453 = vunpack.c.h.b16 %v936
    %v2454 = vunpack.c.l.b16 %v937
    %v2455 = vunpack.c.h.b16 %v937
    %v2456 = vunpack.c.l.b16 %v938
    %v2457 = vunpack.c.h.b16 %v938
    %v2458 = vunpack.c.l.b16 %v939
    %v2459 = vunpack.c.h.b16 %v939
    %v2460 = vunpack.c.l.b16 %v940
    %v2461 = vunpack.c.h.b16 %v940
    %v2462 = vunpack.c.l.b16 %v941
    %v2463 = vunpack.c.h.b16 %v941
    %v2464 = vunpack.c.l.b16 %v942
    %v2465 = vunpack.c.h.b16 %v942
    %v2466 = vunpack.c.l.b16 %v943
    %v2467 = vunpack.c.h.b16 %v943
    %v2468 = vunpack.c.l.b16 %v944
    %v2469 = vunpack.c.h.b16 %v944
    %v2470 = vunpack.c.l.b16 %v945
    %v2471 = vunpack.c.h.b16 %v945
    %v2472 = vunpack.c.l.b16 %v946
    %v2473 = vunpack.c.h.b16 %v946
    %v2474 = vunpack.c.l.b16 %v947
    %v2475 = vunpack.c.h.b16 %v947
    %v2476 = vunpack.c.l.b16 %v948
    %v2477 = vunpack.c.h.b16 %v948
    %v2478 = vunpack.c.l.b16 %v949
    %v2479 = vunpack.c.h.b16 %v949
    %v2480 = vunpack.c.l.b16 %v950
    %v2481 = vunpack.c.h.b16 %v950
    %v2482 = vunpack.c.l.b16 %v951
    %v2483 = vunpack.c.h.b16 %v951
    %v2484 = vunpack.c.l.b16 %v952
    %v2485 = vunpack.c.h.b16 %v952
    %v2486 = vunpack.c.l.b16 %v953
    %v2487 = vunpack.c.h.b16 %v953
    %v2488 = vunpack.c.l.b16 %v954
    %v2489 = vunpack.c.h.b16 %v954
    %v2490 = vunpack.c.l.b16 %v955
    %v2491 = vunpack.c.h.b16 %v955
    %v2492 = vunpack.c.l.b16 %v956
    %v2493 = vunpack.c.h.b16 %v956
    %v2494 = vunpack.c.l.b16 %v957
    %v2495 = vunpack.c.h.b16 %v957
    %v2496 = vunpack.c.l.b16 %v958
    %v2497 = vunpack.c.h.b16 %v958
    %v2498 = vunpack.c.l.b16 %v959
    %v2499 = vunpack.c.h.b16 %v959
    %v2500 = vunpack.c.l.b16 %v960
    %v2501 = vunpack.c.h.b16 %v960
    %v2502 = vunpack.c.l.b16 %v961
    %v2503 = vunpack.c.h.b16 %v961
    %v2504 = vunpack.c.l.b16 %v962
    %v2505 = vunpack.c.h.b16 %v962
    %v2506 = vunpack.c.l.b16 %v963
    %v2507 = vunpack.c.h.b16 %v963
    %v2508 = vunpack.c.l.b16 %v964
    %v2509 = vunpack.c.h.b16 %v964
    %v2510 = vunpack.c.l.b16 %v965
    %v2511 = vunpack.c.h.b16 %v965
    %v2512 = vunpack.c.l.b16 %v966
    %v2513 = vunpack.c.h.b16 %v966
    %v2514 = vunpack.c.l.b16 %v967
    %v2515 = vunpack.c.h.b16 %v967
    %v2516 = vunpack.c.l.b16 %v968
    %v2517 = vunpack.c.h.b16 %v968
    %v2518 = vunpack.c.l.b16 %v969
    %v2519 = vunpack.c.h.b16 %v969
    %v2520 = vunpack.c.l.b16 %v970
    %v2521 = vunpack.c.h.b16 %v970
    %v2522 = vunpack.c.l.b16 %v971
    %v2523 = vunpack.c.h.b16 %v971
    %v2524 = vunpack.c.l.b16 %v972
    %v2525 = vunpack.c.h.b16 %v972
    %v2526 = vunpack.c.l.b16 %v973
    %v2527 = vunpack.c.h.b16 %v973
    %v2528 = vunpack.c.l.b16 %v974
    %v2529 = vunpack.c.h.b16 %v974
    %v2530 = vunpack.c.l.b16 %v975
    %v2531 = vunpack.c.h.b16 %v975
    %v2532 = vunpack.c.l.b16 %v976
    %v2533 = vunpack.c.h.b16 %v976
    %v2534 = vunpack.c.l.b16 %v977
    %v2535 = vunpack.c.h.b16 %v977
    %v2536 = vunpack.c.l.b16 %v978
    %v2537 = vunpack.c.h.b16 %v978
    %v2538 = vunpack.c.l.b16 %v979
    %v2539 = vunpack.c.h.b16 %v979
    %v2540 = vunpack.c.l.b16 %v980
    %v2541 = vunpack.c.h.b16 %v980
    %v2542 = vunpack.c.l.b16 %v981
    %v2543 = vunpack.c.h.b16 %v981
    %v2544 = vunpack.c.l.b16 %v982
    %v2545 = vunpack.c.h.b16 %v982
    %v2546 = vunpack.c.l.b16 %v983
    %v2547 = vunpack.c.h.b16 %v983
    %v2548 = vunpack.c.l.b16 %v984
    %v2549 = vunpack.c.h.b16 %v984
    %v2550 = vunpack.c.l.b16 %v985
    %v2551 = vunpack.c.h.b16 %v985
    %v2552 = vunpack.c.l.b16 %v986
    %v2553 = vunpack.c.h.b16 %v986
    %v2554 = vunpack.c.l.b16 %v987
    %v2555 = vunpack.c.h.b16 %v987
    %v2556 = vunpack.c.l.b16 %v988
    %v2557 = vunpack.c.h.b16 %v988
    %v2558 = vunpack.c.l.b16 %v989
    %v2559 = vunpack.c.h.b16 %v989
    %v2560 = vunpack.c.l.b16 %v990
    %v2561 = vunpack.c.h.b16 %v990
    %v2562 = vunpack.c.l.b16 %v991
    %v2563 = vunpack.c.h.b16 %v991
    %v2564 = vunpack.c.l.b16 %v992
    %v2565 = vunpack.c.h.b16 %v992
    %v2566 = vunpack.c.l.b16 %v993
    %v2567 = vunpack.c.h.b16 %v993
    %v2568 = vunpack.c.l.b16 %v994
    %v2569 = vunpack.c.h.b16 %v994
    %v2570 = vunpack.c.l.b16 %v995
    %v2571 = vunpack.c.h.b16 %v995
    %v2572 = vunpack.c.l.b16 %v996
    %v2573 = vunpack.c.h.b16 %v996
    %v2574 = vunpack.c.l.b16 %v997
    %v2575 = vunpack.c.h.b16 %v997
    %v2576 = vunpack.c.l.b16 %v998
    %v2577 = vunpack.c.h.b16 %v998
    %v2578 = vunpack.c.l.b16 %v999
    %v2579 = vunpack.c.h.b16 %v999
    %v2580 = vunpack.c.l.b16 %v1000
    %v2581 = vunpack.c.h.b16 %v1000
    %v2582 = vunpack.c.l.b16 %v1001
    %v2583 = vunpack.c.h.b16 %v1001
    %v2584 = vunpack.c.l.b16 %v1002
    %v2585 = vunpack.c.h.b16 %v1002
    %v2586 = vunpack.c.l.b16 %v1003
    %v2587 = vunpack.c.h.b16 %v1003
    %v2588 = vunpack.c.l.b16 %v1004
    %v2589 = vunpack.c.h.b16 %v1004
    %v2590 = vunpack.c.l.b16 %v1005
    %v2591 = vunpack.c.h.b16 %v1005
    %v2592 = vunpack.c.l.b16 %v1006
    %v2593 = vunpack.c.h.b16 %v1006
    %v2594 = vunpack.c.l.b16 %v1007
    %v2595 = vunpack.c.h.b16 %v1007
    %v2596 = vunpack.c.l.b16 %v1008
    %v2597 = vunpack.c.h.b16 %v1008
    %v2598 = vunpack.c.l.b16 %v1009
    %v2599 = vunpack.c.h.b16 %v1009
    %v2600 = vunpack.c.l.b16 %v1010
    %v2601 = vunpack.c.h.b16 %v1010
    %v2602 = vunpack.c.l.b16 %v1011
    %v2603 = vunpack.c.h.b16 %v1011
    %v2604 = vunpack.c.l.b16 %v1012
    %v2605 = vunpack.c.h.b16 %v1012
    %v2606 = vunpack.c.l.b16 %v1013
    %v2607 = vunpack.c.h.b16 %v1013
    %v2608 = vunpack.c.l.b16 %v1014
    %v2609 = vunpack.c.h.b16 %v1014
    %v2610 = vunpack.c.l.b16 %v1015
    %v2611 = vunpack.c.h.b16 %v1015
    %v2612 = vunpack.c.l.b16 %v1016
    %v2613 = vunpack.c.h.b16 %v1016
    %v2614 = vunpack.c.l.b16 %v1017
    %v2615 = vunpack.c.h.b16 %v1017
    %v2616 = vunpack.c.l.b16 %v1018
    %v2617 = vunpack.c.h.b16 %v1018
    %v2618 = vunpack.c.l.b16 %v1019
    %v2619 = vunpack.c.h.b16 %v1019
    %v2620 = vunpack.c.l.b16 %v1020
    %v2621 = vunpack.c.h.b16 %v1020
    %v2622 = vunpack.c.l.b16 %v1021
    %v2623 = vunpack.c.h.b16 %v1021
    %v2624 = vunpack.c.l.b16 %v1022
    %v2625 = vunpack.c.h.b16 %v1022
    %v2626 = vunpack.c.l.b16 %v1023
    %v2627 = vunpack.c.h.b16 %v1023
    %v2628 = vunpack.c.l.b16 %v1024
    %v2629 = vunpack.c.h.b16 %v1024
    %v2630 = vunpack.c.l.b16 %v1025
    %v2631 = vunpack.c.h.b16 %v1025
    %v2632 = vunpack.c.l.b16 %v1026
    %v2633 = vunpack.c.h.b16 %v1026
    %v2634 = vunpack.c.l.b16 %v1027
    %v2635 = vunpack.c.h.b16 %v1027
    %v2636 = vunpack.c.l.b16 %v1028
    %v2637 = vunpack.c.h.b16 %v1028
    %v2638 = vunpack.c.l.b16 %v1029
    %v2639 = vunpack.c.h.b16 %v1029
    %v2640 = vunpack.c.l.b16 %v1030
    %v2641 = vunpack.c.h.b16 %v1030
    %v2642 = vunpack.c.l.b16 %v1031
    %v2643 = vunpack.c.h.b16 %v1031
    %v2644 = vunpack.c.l.b16 %v1032
    %v2645 = vunpack.c.h.b16 %v1032
    %v2646 = vunpack.c.l.b16 %v1033
    %v2647 = vunpack.c.h.b16 %v1033
    %v2648 = vunpack.c.l.b16 %v1034
    %v2649 = vunpack.c.h.b16 %v1034
    %v2650 = vunpack.c.l.b16 %v1035
    %v2651 = vunpack.c.h.b16 %v1035
    %v2652 = vunpack.c.l.b16 %v1036
    %v2653 = vunpack.c.h.b16 %v1036
    %v2654 = vunpack.c.l.b16 %v1037
    %v2655 = vunpack.c.h.b16 %v1037
    %v2656 = vunpack.c.l.b16 %v1038
    %v2657 = vunpack.c.h.b16 %v1038
    %v2658 = vunpack.c.l.b16 %v1039
    %v2659 = vunpack.c.h.b16 %v1039
    %v2660 = vunpack.c.l.b16 %v1040
    %v2661 = vunpack.c.h.b16 %v1040
    %v2662 = vunpack.c.l.b16 %v1041
    %v2663 = vunpack.c.h.b16 %v1041
    %v2664 = vunpack.c.l.b16 %v1042
    %v2665 = vunpack.c.h.b16 %v1042
    %v2666 = vunpack.c.l.b16 %v1043
    %v2667 = vunpack.c.h.b16 %v1043
    %v2668 = vunpack.c.l.b16 %v1044
    %v2669 = vunpack.c.h.b16 %v1044
    %v2670 = vunpack.c.l.b16 %v1045
    %v2671 = vunpack.c.h.b16 %v1045
    %v2672 = vunpack.c.l.b16 %v1046
    %v2673 = vunpack.c.h.b16 %v1046
    %v2674 = vunpack.c.l.b16 %v1047
    %v2675 = vunpack.c.h.b16 %v1047
    %v2676 = vunpack.c.l.b16 %v1048
    %v2677 = vunpack.c.h.b16 %v1048
    %v2678 = vunpack.c.l.b16 %v1049
    %v2679 = vunpack.c.h.b16 %v1049
    %v2680 = vunpack.c.l.b16 %v1050
    %v2681 = vunpack.c.h.b16 %v1050
    %v2682 = vunpack.c.l.b16 %v1051
    %v2683 = vunpack.c.h.b16 %v1051
    %v2684 = vunpack.c.l.b16 %v1052
    %v2685 = vunpack.c.h.b16 %v1052
    %v2686 = vunpack.c.l.b16 %v1053
    %v2687 = vunpack.c.h.b16 %v1053
    %v2688 = vunpack.c.l.b16 %v1054
    %v2689 = vunpack.c.h.b16 %v1054
    %v2690 = vunpack.c.l.b16 %v1055
    %v2691 = vunpack.c.h.b16 %v1055
    %v2692 = vunpack.c.l.b16 %v1056
    %v2693 = vunpack.c.h.b16 %v1056
    %v2694 = vunpack.c.l.b16 %v1057
    %v2695 = vunpack.c.h.b16 %v1057
    %v2696 = vunpack.c.l.b16 %v1058
    %v2697 = vunpack.c.h.b16 %v1058
    %v2698 = vunpack.c.l.b16 %v1059
    %v2699 = vunpack.c.h.b16 %v1059
    %v2700 = vunpack.c.l.b16 %v1060
    %v2701 = vunpack.c.h.b16 %v1060
    %v2702 = vunpack.c.l.b16 %v1061
    %v2703 = vunpack.c.h.b16 %v1061
    %v2704 = vunpack.c.l.b16 %v1062
    %v2705 = vunpack.c.h.b16 %v1062
    %v2706 = vunpack.c.l.b16 %v1063
    %v2707 = vunpack.c.h.b16 %v1063
    %v2708 = vunpack.c.l.b16 %v1064
    %v2709 = vunpack.c.h.b16 %v1064
    %v2710 = vunpack.c.l.b16 %v1065
    %v2711 = vunpack.c.h.b16 %v1065
    %v2712 = vunpack.c.l.b16 %v1066
    %v2713 = vunpack.c.h.b16 %v1066
    %v2714 = vunpack.c.l.b16 %v1067
    %v2715 = vunpack.c.h.b16 %v1067
    %v2716 = vunpack.c.l.b16 %v1068
    %v2717 = vunpack.c.h.b16 %v1068
    %v2718 = vunpack.c.l.b16 %v1069
    %v2719 = vunpack.c.h.b16 %v1069
    %v2720 = vunpack.c.l.b16 %v1070
    %v2721 = vunpack.c.h.b16 %v1070
    %v2722 = vunpack.c.l.b16 %v1071
    %v2723 = vunpack.c.h.b16 %v1071
    %v2724 = vunpack.c.l.b16 %v1072
    %v2725 = vunpack.c.h.b16 %v1072
    %v2726 = vunpack.c.l.b16 %v1073
    %v2727 = vunpack.c.h.b16 %v1073
    %v2728 = vunpack.c.l.b16 %v1074
    %v2729 = vunpack.c.h.b16 %v1074
    %v2730 = vunpack.c.l.b16 %v1075
    %v2731 = vunpack.c.h.b16 %v1075
    %v2732 = vunpack.c.l.b16 %v1076
    %v2733 = vunpack.c.h.b16 %v1076
    %v2734 = vunpack.c.l.b16 %v1077
    %v2735 = vunpack.c.h.b16 %v1077
    %v2736 = vunpack.c.l.b16 %v1078
    %v2737 = vunpack.c.h.b16 %v1078
    %v2738 = vunpack.c.l.b16 %v1079
    %v2739 = vunpack.c.h.b16 %v1079
    %v2740 = vunpack.c.l.b16 %v1080
    %v2741 = vunpack.c.h.b16 %v1080
    %v2742 = vunpack.c.l.b16 %v1081
    %v2743 = vunpack.c.h.b16 %v1081
    %v2744 = vunpack.c.l.b16 %v1082
    %v2745 = vunpack.c.h.b16 %v1082
    %v2746 = vunpack.c.l.b16 %v1083
    %v2747 = vunpack.c.h.b16 %v1083
    %v2748 = vunpack.c.l.b16 %v1084
    %v2749 = vunpack.c.h.b16 %v1084
    %v2750 = vunpack.c.l.b16 %v1085
    %v2751 = vunpack.c.h.b16 %v1085
    %v2752 = vunpack.c.l.b16 %v1086
    %v2753 = vunpack.c.h.b16 %v1086
    %v2754 = vunpack.c.l.b16 %v1087
    %v2755 = vunpack.c.h.b16 %v1087
    %v2756 = vunpack.c.l.b16 %v1088
    %v2757 = vunpack.c.h.b16 %v1088
    %v2758 = vunpack.c.l.b16 %v1089
    %v2759 = vunpack.c.h.b16 %v1089
    %v2760 = vunpack.c.l.b16 %v1090
    %v2761 = vunpack.c.h.b16 %v1090
    %v2762 = vunpack.c.l.b16 %v1091
    %v2763 = vunpack.c.h.b16 %v1091
    %v2764 = vunpack.c.l.b16 %v1092
    %v2765 = vunpack.c.h.b16 %v1092
    %v2766 = vunpack.c.l.b16 %v1093
    %v2767 = vunpack.c.h.b16 %v1093
    %v2768 = vunpack.c.l.b16 %v1094
    %v2769 = vunpack.c.h.b16 %v1094
    %v2770 = vunpack.c.l.b16 %v1095
    %v2771 = vunpack.c.h.b16 %v1095
    %v2772 = vunpack.c.l.b16 %v1096
    %v2773 = vunpack.c.h.b16 %v1096
    %v2774 = vunpack.c.l.b16 %v1097
    %v2775 = vunpack.c.h.b16 %v1097
    %v2776 = vunpack.c.l.b16 %v1098
    %v2777 = vunpack.c.h.b16 %v1098
    %v2778 = vunpack.c.l.b16 %v1099
    %v2779 = vunpack.c.h.b16 %v1099
    %v2780 = vunpack.c.l.b16 %v1100
    %v2781 = vunpack.c.h.b16 %v1100
    %v2782 = vunpack.c.l.b16 %v1101
    %v2783 = vunpack.c.h.b16 %v1101
    %v2784 = vunpack.c.l.b16 %v1102
    %v2785 = vunpack.c.h.b16 %v1102
    %v2786 = vunpack.c.l.b16 %v1103
    %v2787 = vunpack.c.h.b16 %v1103
    %v2788 = vunpack.c.l.b16 %v1104
    %v2789 = vunpack.c.h.b16 %v1104
    %v2790 = vunpack.c.l.b16 %v1105
    %v2791 = vunpack.c.h.b16 %v1105
    %v2792 = vunpack.c.l.b16 %v1106
    %v2793 = vunpack.c.h.b16 %v1106
    %v2794 = vunpack.c.l.b16 %v1107
    %v2795 = vunpack.c.h.b16 %v1107
    %v2796 = vunpack.c.l.b16 %v1108
    %v2797 = vunpack.c.h.b16 %v1108
    %v2798 = vunpack.c.l.b16 %v1109
    %v2799 = vunpack.c.h.b16 %v1109
    %v2800 = vunpack.c.l.b16 %v1110
    %v2801 = vunpack.c.h.b16 %v1110
    %v2802 = vunpack.c.l.b16 %v1111
    %v2803 = vunpack.c.h.b16 %v1111
    %v2804 = vunpack.c.l.b16 %v1112
    %v2805 = vunpack.c.h.b16 %v1112
    %v2806 = vunpack.c.l.b16 %v1113
    %v2807 = vunpack.c.h.b16 %v1113
    %v2808 = vunpack.c.l.b16 %v1114
    %v2809 = vunpack.c.h.b16 %v1114
    %v2810 = vunpack.c.l.b16 %v1115
    %v2811 = vunpack.c.h.b16 %v1115
    %v2812 = vunpack.c.l.b16 %v1116
    %v2813 = vunpack.c.h.b16 %v1116
    %v2814 = vunpack.c.l.b16 %v1117
    %v2815 = vunpack.c.h.b16 %v1117
    %v2816 = vunpack.c.l.b16 %v1118
    %v2817 = vunpack.c.h.b16 %v1118
    %v2818 = vunpack.c.l.b16 %v1119
    %v2819 = vunpack.c.h.b16 %v1119
    %v2820 = vunpack.c.l.b16 %v1120
    %v2821 = vunpack.c.h.b16 %v1120
    %v2822 = vunpack.c.l.b16 %v1121
    %v2823 = vunpack.c.h.b16 %v1121
    %v2824 = vunpack.c.l.b16 %v1122
    %v2825 = vunpack.c.h.b16 %v1122
    %v2826 = vunpack.c.l.b16 %v1123
    %v2827 = vunpack.c.h.b16 %v1123
    %v2828 = vunpack.c.l.b16 %v1124
    %v2829 = vunpack.c.h.b16 %v1124
    %v2830 = vunpack.c.l.b16 %v1125
    %v2831 = vunpack.c.h.b16 %v1125
    %v2832 = vunpack.c.l.b16 %v1126
    %v2833 = vunpack.c.h.b16 %v1126
    %v2834 = vunpack.c.l.b16 %v1127
    %v2835 = vunpack.c.h.b16 %v1127
    %v2836 = vunpack.c.l.b16 %v1128
    %v2837 = vunpack.c.h.b16 %v1128
    %v2838 = vunpack.c.l.b16 %v1129
    %v2839 = vunpack.c.h.b16 %v1129
    %v2840 = vunpack.c.l.b16 %v1130
    %v2841 = vunpack.c.h.b16 %v1130
    %v2842 = vunpack.c.l.b16 %v1131
    %v2843 = vunpack.c.h.b16 %v1131
    %v2844 = vunpack.c.l.b16 %v1132
    %v2845 = vunpack.c.h.b16 %v1132
    %v2846 = vunpack.c.l.b16 %v1133
    %v2847 = vunpack.c.h.b16 %v1133
    %v2848 = vunpack.c.l.b16 %v1134
    %v2849 = vunpack.c.h.b16 %v1134
    %v2850 = vunpack.c.l.b16 %v1135
    %v2851 = vunpack.c.h.b16 %v1135
    %v2852 = vunpack.c.l.b16 %v1136
    %v2853 = vunpack.c.h.b16 %v1136
    %v2854 = vunpack.c.l.b16 %v1137
    %v2855 = vunpack.c.h.b16 %v1137
    %v2856 = vunpack.c.l.b16 %v1138
    %v2857 = vunpack.c.h.b16 %v1138
    %v2858 = vunpack.c.l.b16 %v1139
    %v2859 = vunpack.c.h.b16 %v1139
    %v2860 = vunpack.c.l.b16 %v1140
    %v2861 = vunpack.c.h.b16 %v1140
    %v2862 = vunpack.c.l.b16 %v1141
    %v2863 = vunpack.c.h.b16 %v1141
    %v2864 = vunpack.c.l.b16 %v1142
    %v2865 = vunpack.c.h.b16 %v1142
    %v2866 = vunpack.c.l.b16 %v1143
    %v2867 = vunpack.c.h.b16 %v1143
    %v2868 = vunpack.c.l.b16 %v1144
    %v2869 = vunpack.c.h.b16 %v1144
    %v2870 = vunpack.c.l.b16 %v1145
    %v2871 = vunpack.c.h.b16 %v1145
    %v2872 = vunpack.c.l.b16 %v1146
    %v2873 = vunpack.c.h.b16 %v1146
    %v2874 = vunpack.c.l.b16 %v1147
    %v2875 = vunpack.c.h.b16 %v1147
    %v2876 = vunpack.c.l.b16 %v1148
    %v2877 = vunpack.c.h.b16 %v1148
    %v2878 = vunpack.c.l.b16 %v1149
    %v2879 = vunpack.c.h.b16 %v1149
    %v2880 = vunpack.c.l.b16 %v1150
    %v2881 = vunpack.c.h.b16 %v1150
    %v2882 = vunpack.c.l.b16 %v1151
    %v2883 = vunpack.c.h.b16 %v1151
    %v2884 = vunpack.c.l.b16 %v1152
    %v2885 = vunpack.c.h.b16 %v1152
    %v2886 = vunpack.c.l.b16 %v1153
    %v2887 = vunpack.c.h.b16 %v1153
    %v2888 = vunpack.c.l.b16 %v1154
    %v2889 = vunpack.c.h.b16 %v1154
    %v2890 = vunpack.c.l.b16 %v1155
    %v2891 = vunpack.c.h.b16 %v1155
    %v2892 = vunpack.c.l.b16 %v1156
    %v2893 = vunpack.c.h.b16 %v1156
    %v2894 = vunpack.c.l.b16 %v1157
    %v2895 = vunpack.c.h.b16 %v1157
    %v2896 = vunpack.c.l.b16 %v1158
    %v2897 = vunpack.c.h.b16 %v1158
    %v2898 = vunpack.c.l.b16 %v1159
    %v2899 = vunpack.c.h.b16 %v1159
    %v2900 = vunpack.c.l.b16 %v1160
    %v2901 = vunpack.c.h.b16 %v1160
    %v2902 = vunpack.c.l.b16 %v1161
    %v2903 = vunpack.c.h.b16 %v1161
    %v2904 = vunpack.c.l.b16 %v1162
    %v2905 = vunpack.c.h.b16 %v1162
    %v2906 = vunpack.c.l.b16 %v1163
    %v2907 = vunpack.c.h.b16 %v1163
    %v2908 = vunpack.c.l.b16 %v1164
    %v2909 = vunpack.c.h.b16 %v1164
    %v2910 = vunpack.c.l.b16 %v1165
    %v2911 = vunpack.c.h.b16 %v1165
    %v2912 = vunpack.c.l.b16 %v1166
    %v2913 = vunpack.c.h.b16 %v1166
    %v2914 = vunpack.c.l.b16 %v1167
    %v2915 = vunpack.c.h.b16 %v1167
    %v2916 = vunpack.c.l.b16 %v1168
    %v2917 = vunpack.c.h.b16 %v1168
    %v2918 = vunpack.c.l.b16 %v1169
    %v2919 = vunpack.c.h.b16 %v1169
    %v2920 = vunpack.c.l.b16 %v1170
    %v2921 = vunpack.c.h.b16 %v1170
    %v2922 = vunpack.c.l.b16 %v1171
    %v2923 = vunpack.c.h.b16 %v1171
    %v2924 = vunpack.c.l.b16 %v1172
    %v2925 = vunpack.c.h.b16 %v1172
    %v2926 = vunpack.c.l.b16 %v1173
    %v2927 = vunpack.c.h.b16 %v1173
    %v2928 = vunpack.c.l.b16 %v1174
    %v2929 = vunpack.c.h.b16 %v1174
    %v2930 = vunpack.c.l.b16 %v1175
    %v2931 = vunpack.c.h.b16 %v1175
    %v2932 = vunpack.c.l.b16 %v1176
    %v2933 = vunpack.c.h.b16 %v1176
    %v2934 = vunpack.c.l.b16 %v1177
    %v2935 = vunpack.c.h.b16 %v1177
    %v2936 = vunpack.c.l.b16 %v1178
    %v2937 = vunpack.c.h.b16 %v1178
    %v2938 = vunpack.c.l.b16 %v1179
    %v2939 = vunpack.c.h.b16 %v1179
    %v2940 = vunpack.c.l.b16 %v1180
    %v2941 = vunpack.c.h.b16 %v1180
    %v2942 = vunpack.c.l.b16 %v1181
    %v2943 = vunpack.c.h.b16 %v1181
    %v2944 = vunpack.c.l.b16 %v1182
    %v2945 = vunpack.c.h.b16 %v1182
    %v2946 = vunpack.c.l.b16 %v1183
    %v2947 = vunpack.c.h.b16 %v1183
    %v2948 = vunpack.c.l.b16 %v1184
    %v2949 = vunpack.c.h.b16 %v1184
    %v2950 = vunpack.c.l.b16 %v1185
    %v2951 = vunpack.c.h.b16 %v1185
    %v2952 = vunpack.c.l.b16 %v1186
    %v2953 = vunpack.c.h.b16 %v1186
    %v2954 = vunpack.c.l.b16 %v1187
    %v2955 = vunpack.c.h.b16 %v1187
    %v2956 = vunpack.c.l.b16 %v1188
    %v2957 = vunpack.c.h.b16 %v1188
    %v2958 = vunpack.c.l.b16 %v1189
    %v2959 = vunpack.c.h.b16 %v1189
    %v2960 = vunpack.c.l.b16 %v1190
    %v2961 = vunpack.c.h.b16 %v1190
    %v2962 = vunpack.c.l.b16 %v1191
    %v2963 = vunpack.c.h.b16 %v1191
    %v2964 = vunpack.c.l.b16 %v1192
    %v2965 = vunpack.c.h.b16 %v1192
    %v2966 = vunpack.c.l.b16 %v1193
    %v2967 = vunpack.c.h.b16 %v1193
    %v2968 = vunpack.c.l.b16 %v1194
    %v2969 = vunpack.c.h.b16 %v1194
    %v2970 = vunpack.c.l.b16 %v1195
    %v2971 = vunpack.c.h.b16 %v1195
    %v2972 = vunpack.c.l.b16 %v1196
    %v2973 = vunpack.c.h.b16 %v1196
    %v2974 = vunpack.c.l.b16 %v1197
    %v2975 = vunpack.c.h.b16 %v1197
    %v2976 = vunpack.c.l.b16 %v1198
    %v2977 = vunpack.c.h.b16 %v1198
    %v2978 = vunpack.c.l.b16 %v1199
    %v2979 = vunpack.c.h.b16 %v1199
    %v2980 = vunpack.c.l.b16 %v1200
    %v2981 = vunpack.c.h.b16 %v1200
    %v2982 = vunpack.c.l.b16 %v1201
    %v2983 = vunpack.c.h.b16 %v1201
    %v2984 = vunpack.c.l.b16 %v1202
    %v2985 = vunpack.c.h.b16 %v1202
    %v2986 = vunpack.c.l.b16 %v1203
    %v2987 = vunpack.c.h.b16 %v1203
    %v2988 = vunpack.c.l.b16 %v1204
    %v2989 = vunpack.c.h.b16 %v1204
    %v2990 = vunpack.c.l.b16 %v1205
    %v2991 = vunpack.c.h.b16 %v1205
    %v2992 = vunpack.c.l.b16 %v1206
    %v2993 = vunpack.c.h.b16 %v1206
    %v2994 = vunpack.c.l.b16 %v1207
    %v2995 = vunpack.c.h.b16 %v1207
    %v2996 = vunpack.c.l.b16 %v1208
    %v2997 = vunpack.c.h.b16 %v1208
    %v2998 = vunpack.c.l.b16 %v1209
    %v2999 = vunpack.c.h.b16 %v1209
    %v3000 = vunpack.c.l.b16 %v1210
    %v3001 = vunpack.c.h.b16 %v1210
    %v3002 = vunpack.c.l.b16 %v1211
    %v3003 = vunpack.c.h.b16 %v1211
    %v3004 = vunpack.c.l.b16 %v1212
    %v3005 = vunpack.c.h.b16 %v1212
    %v3006 = vunpack.c.l.b16 %v1213
    %v3007 = vunpack.c.h.b16 %v1213
    %v3008 = vunpack.c.l.b16 %v1214
    %v3009 = vunpack.c.h.b16 %v1214
    %v3010 = vunpack.c.l.b16 %v1215
    %v3011 = vunpack.c.h.b16 %v1215
    %v3012 = vunpack.c.l.b16 %v1216
    %v3013 = vunpack.c.h.b16 %v1216
    %v3014 = vunpack.c.l.b16 %v1217
    %v3015 = vunpack.c.h.b16 %v1217
    %v3016 = vunpack.c.l.b16 %v1218
    %v3017 = vunpack.c.h.b16 %v1218
    %v3018 = vunpack.c.l.b16 %v1219
    %v3019 = vunpack.c.h.b16 %v1219
    %v3020 = vunpack.c.l.b16 %v1220
    %v3021 = vunpack.c.h.b16 %v1220
    %v3022 = vunpack.c.l.b16 %v1221
    %v3023 = vunpack.c.h.b16 %v1221
    %v3024 = vunpack.c.l.b16 %v1222
    %v3025 = vunpack.c.h.b16 %v1222
    %v3026 = vunpack.c.l.b16 %v1223
    %v3027 = vunpack.c.h.b16 %v1223
    %v3028 = vunpack.c.l.b16 %v1224
    %v3029 = vunpack.c.h.b16 %v1224
    %v3030 = vunpack.c.l.b16 %v1225
    %v3031 = vunpack.c.h.b16 %v1225
    %v3032 = vunpack.c.l.b16 %v1226
    %v3033 = vunpack.c.h.b16 %v1226
    %v3034 = vunpack.c.l.b16 %v1227
    %v3035 = vunpack.c.h.b16 %v1227
    %v3036 = vunpack.c.l.b16 %v1228
    %v3037 = vunpack.c.h.b16 %v1228
    %v3038 = vunpack.c.l.b16 %v1229
    %v3039 = vunpack.c.h.b16 %v1229
    %v3040 = vunpack.c.l.b16 %v1230
    %v3041 = vunpack.c.h.b16 %v1230
    %v3042 = vunpack.c.l.b16 %v1231
    %v3043 = vunpack.c.h.b16 %v1231
    %v3044 = vunpack.c.l.b16 %v1232
    %v3045 = vunpack.c.h.b16 %v1232
    %v3046 = vunpack.c.l.b16 %v1233
    %v3047 = vunpack.c.h.b16 %v1233
    %v3048 = vunpack.c.l.b16 %v1234
    %v3049 = vunpack.c.h.b16 %v1234
    %v3050 = vunpack.c.l.b16 %v1235
    %v3051 = vunpack.c.h.b16 %v1235
    %v3052 = vunpack.c.l.b16 %v1236
    %v3053 = vunpack.c.h.b16 %v1236
    %v3054 = vunpack.c.l.b16 %v1237
    %v3055 = vunpack.c.h.b16 %v1237
    %v3056 = vunpack.c.l.b16 %v1238
    %v3057 = vunpack.c.h.b16 %v1238
    %v3058 = vunpack.c.l.b16 %v1239
    %v3059 = vunpack.c.h.b16 %v1239
    %v3060 = vunpack.c.l.b16 %v1240
    %v3061 = vunpack.c.h.b16 %v1240
    %v3062 = vunpack.c.l.b16 %v1241
    %v3063 = vunpack.c.h.b16 %v1241
    %v3064 = vunpack.c.l.b16 %v1242
    %v3065 = vunpack.c.h.b16 %v1242
    %v3066 = vunpack.c.l.b16 %v1243
    %v3067 = vunpack.c.h.b16 %v1243
    %v3068 = vunpack.c.l.b16 %v1244
    %v3069 = vunpack.c.h.b16 %v1244
    %v3070 = vunpack.c.l.b16 %v1245
    %v3071 = vunpack.c.h.b16 %v1245
    %v3072 = vunpack.c.l.b16 %v1246
    %v3073 = vunpack.c.h.b16 %v1246
    %v3074 = vunpack.c.l.b16 %v1247
    %v3075 = vunpack.c.h.b16 %v1247
    %v3076 = vunpack.c.l.b16 %v1248
    %v3077 = vunpack.c.h.b16 %v1248
    %v3078 = vunpack.c.l.b16 %v1249
    %v3079 = vunpack.c.h.b16 %v1249
    %v3080 = vunpack.c.l.b16 %v1250
    %v3081 = vunpack.c.h.b16 %v1250
    %v3082 = vunpack.c.l.b16 %v1251
    %v3083 = vunpack.c.h.b16 %v1251
    %v3084 = vunpack.c.l.b16 %v1252
    %v3085 = vunpack.c.h.b16 %v1252
    %v3086 = vunpack.c.l.b16 %v1253
    %v3087 = vunpack.c.h.b16 %v1253
    %v3088 = vunpack.c.l.b16 %v1254
    %v3089 = vunpack.c.h.b16 %v1254
    %v3090 = vunpack.c.l.b16 %v1255
    %v3091 = vunpack.c.h.b16 %v1255
    %v3092 = vunpack.c.l.b16 %v1256
    %v3093 = vunpack.c.h.b16 %v1256
    %v3094 = vunpack.c.l.b16 %v1257
    %v3095 = vunpack.c.h.b16 %v1257
    %v3096 = vunpack.c.l.b16 %v1258
    %v3097 = vunpack.c.h.b16 %v1258
    %v3098 = vunpack.c.l.b16 %v1259
    %v3099 = vunpack.c.h.b16 %v1259
    %v3100 = vunpack.c.l.b16 %v1260
    %v3101 = vunpack.c.h.b16 %v1260
    %v3102 = vunpack.c.l.b16 %v1261
    %v3103 = vunpack.c.h.b16 %v1261
    %v3104 = vunpack.c.l.b16 %v1262
    %v3105 = vunpack.c.h.b16 %v1262
    %v3106 = vunpack.c.l.b16 %v1263
    %v3107 = vunpack.c.h.b16 %v1263
    %v3108 = vunpack.c.l.b16 %v1264
    %v3109 = vunpack.c.h.b16 %v1264
    %v3110 = vunpack.c.l.b16 %v1265
    %v3111 = vunpack.c.h.b16 %v1265
    %v3112 = vunpack.c.l.b16 %v1266
    %v3113 = vunpack.c.h.b16 %v1266
    %v3114 = vunpack.c.l.b16 %v1267
    %v3115 = vunpack.c.h.b16 %v1267
    %v3116 = vunpack.c.l.b16 %v1268
    %v3117 = vunpack.c.h.b16 %v1268
    %v3118 = vunpack.c.l.b16 %v1269
    %v3119 = vunpack.c.h.b16 %v1269
    %v3120 = vunpack.c.l.b16 %v1270
    %v3121 = vunpack.c.h.b16 %v1270
    %v3122 = vunpack.c.l.b16 %v1271
    %v3123 = vunpack.c.h.b16 %v1271
    %v3124 = vunpack.c.l.b16 %v1272
    %v3125 = vunpack.c.h.b16 %v1272
    %v3126 = vunpack.c.l.b16 %v1273
    %v3127 = vunpack.c.h.b16 %v1273
    %v3128 = vunpack.c.l.b16 %v1274
    %v3129 = vunpack.c.h.b16 %v1274
    %v3130 = vunpack.c.l.b16 %v1275
    %v3131 = vunpack.c.h.b16 %v1275
    %v3132 = vunpack.c.l.b16 %v1276
    %v3133 = vunpack.c.h.b16 %v1276
    %v3134 = vunpack.c.l.b16 %v1277
    %v3135 = vunpack.c.h.b16 %v1277
    %v3136 = vunpack.c.l.b16 %v1278
    %v3137 = vunpack.c.h.b16 %v1278
    %v3138 = vunpack.c.l.b16 %v1279
    %v3139 = vunpack.c.h.b16 %v1279
    %v3140 = vunpack.c.l.b16 %v1280
    %v3141 = vunpack.c.h.b16 %v1280
    %v3142 = vunpack.c.l.b16 %v1281
    %v3143 = vunpack.c.h.b16 %v1281
    %v3144 = vunpack.c.l.b16 %v1282
    %v3145 = vunpack.c.h.b16 %v1282
    %v3146 = vunpack.c.l.b16 %v1283
    %v3147 = vunpack.c.h.b16 %v1283
    %v3148 = vunpack.c.l.b16 %v1284
    %v3149 = vunpack.c.h.b16 %v1284
    %v3150 = vunpack.c.l.b16 %v1285
    %v3151 = vunpack.c.h.b16 %v1285
    %v3152 = vunpack.c.l.b16 %v1286
    %v3153 = vunpack.c.h.b16 %v1286
    %v3154 = vunpack.c.l.b16 %v1287
    %v3155 = vunpack.c.h.b16 %v1287
    %v3156 = vunpack.c.l.b16 %v1288
    %v3157 = vunpack.c.h.b16 %v1288
    %v3158 = vunpack.c.l.b16 %v1289
    %v3159 = vunpack.c.h.b16 %v1289
    %v3160 = vunpack.c.l.b16 %v1290
    %v3161 = vunpack.c.h.b16 %v1290
    %v3162 = vunpack.c.l.b16 %v1291
    %v3163 = vunpack.c.h.b16 %v1291
    %v3164 = vunpack.c.l.b16 %v1292
    %v3165 = vunpack.c.h.b16 %v1292
    %v3166 = vunpack.c.l.b16 %v1293
    %v3167 = vunpack.c.h.b16 %v1293
    %v3168 = vunpack.c.l.b16 %v1294
    %v3169 = vunpack.c.h.b16 %v1294
    %v3170 = vunpack.c.l.b16 %v1295
    %v3171 = vunpack.c.h.b16 %v1295
    %v3172 = vunpack.c.l.b16 %v1296
    %v3173 = vunpack.c.h.b16 %v1296
    %v3174 = vunpack.c.l.b16 %v1297
    %v3175 = vunpack.c.h.b16 %v1297
    %v3176 = vunpack.c.l.b16 %v1298
    %v3177 = vunpack.c.h.b16 %v1298
    %v3178 = vunpack.c.l.b16 %v1299
    %v3179 = vunpack.c.h.b16 %v1299
    %v3180 = vunpack.c.l.b16 %v1300
    %v3181 = vunpack.c.h.b16 %v1300
    %v3182 = vunpack.c.l.b16 %v1301
    %v3183 = vunpack.c.h.b16 %v1301
    %v3184 = vunpack.c.l.b16 %v1302
    %v3185 = vunpack.c.h.b16 %v1302
    %v3186 = vunpack.c.l.b16 %v1303
    %v3187 = vunpack.c.h.b16 %v1303
    %v3188 = vunpack.c.l.b16 %v1304
    %v3189 = vunpack.c.h.b16 %v1304
    %v3190 = vunpack.c.l.b16 %v1305
    %v3191 = vunpack.c.h.b16 %v1305
    %v3192 = vunpack.c.l.b16 %v1306
    %v3193 = vunpack.c.h.b16 %v1306
    %v3194 = vunpack.c.l.b16 %v1307
    %v3195 = vunpack.c.h.b16 %v1307
    %v3196 = vunpack.c.l.b16 %v1308
    %v3197 = vunpack.c.h.b16 %v1308
    %v3198 = vunpack.c.l.b16 %v1309
    %v3199 = vunpack.c.h.b16 %v1309
    %v3200 = vunpack.c.l.b16 %v1310
    %v3201 = vunpack.c.h.b16 %v1310
    %v3202 = vunpack.c.l.b16 %v1311
    %v3203 = vunpack.c.h.b16 %v1311
    %v3204 = vunpack.c.l.b16 %v1312
    %v3205 = vunpack.c.h.b16 %v1312
    %v3206 = vunpack.c.l.b16 %v1313
    %v3207 = vunpack.c.h.b16 %v1313
    %v3208 = vunpack.c.l.b16 %v1314
    %v3209 = vunpack.c.h.b16 %v1314
    %v3210 = vunpack.c.l.b16 %v1315
    %v3211 = vunpack.c.h.b16 %v1315
    %v3212 = vunpack.c.l.b16 %v1316
    %v3213 = vunpack.c.h.b16 %v1316
    %v3214 = vunpack.c.l.b16 %v1317
    %v3215 = vunpack.c.h.b16 %v1317
    %v3216 = vunpack.c.l.b16 %v1318
    %v3217 = vunpack.c.h.b16 %v1318
    %v3218 = vunpack.c.l.b16 %v1319
    %v3219 = vunpack.c.h.b16 %v1319
    %v3220 = vunpack.c.l.b16 %v1320
    %v3221 = vunpack.c.h.b16 %v1320
    %v3222 = vunpack.c.l.b16 %v1321
    %v3223 = vunpack.c.h.b16 %v1321
    %v3224 = vunpack.c.l.b16 %v1322
    %v3225 = vunpack.c.h.b16 %v1322
    %v3226 = vunpack.c.l.b16 %v1323
    %v3227 = vunpack.c.h.b16 %v1323
    %v3228 = vunpack.c.l.b16 %v1324
    %v3229 = vunpack.c.h.b16 %v1324
    %v3230 = vunpack.c.l.b16 %v1325
    %v3231 = vunpack.c.h.b16 %v1325
    %v3232 = vunpack.c.l.b16 %v1326
    %v3233 = vunpack.c.h.b16 %v1326
    %v3234 = vunpack.c.l.b16 %v1327
    %v3235 = vunpack.c.h.b16 %v1327
    %v3236 = vunpack.c.l.b16 %v1328
    %v3237 = vunpack.c.h.b16 %v1328
    %v3238 = vunpack.c.l.b16 %v1329
    %v3239 = vunpack.c.h.b16 %v1329
    %v3240 = vunpack.c.l.b16 %v1330
    %v3241 = vunpack.c.h.b16 %v1330
    %v3242 = vunpack.c.l.b16 %v1331
    %v3243 = vunpack.c.h.b16 %v1331
    %v3244 = vunpack.c.l.b16 %v1332
    %v3245 = vunpack.c.h.b16 %v1332
    %v3246 = vunpack.c.l.b16 %v1333
    %v3247 = vunpack.c.h.b16 %v1333
    %v3248 = vunpack.c.l.b16 %v1334
    %v3249 = vunpack.c.h.b16 %v1334
    %v3250 = vunpack.c.l.b16 %v1335
    %v3251 = vunpack.c.h.b16 %v1335
    %v3252 = vunpack.c.l.b16 %v1336
    %v3253 = vunpack.c.h.b16 %v1336
    %v3254 = vunpack.c.l.b16 %v1337
    %v3255 = vunpack.c.h.b16 %v1337
    %v3256 = vunpack.c.l.b16 %v1338
    %v3257 = vunpack.c.h.b16 %v1338
    %v3258 = vunpack.c.l.b16 %v1339
    %v3259 = vunpack.c.h.b16 %v1339
    %v3260 = vpack.c.b16 %v1990, %v1980
    %v3261 = vpack.c.b16 %v1991, %v1981
    %v3262 = vpack.c.b16 %v1992, %v1982
    %v3263 = vpack.c.b16 %v1993, %v1983
    %v3264 = vpack.c.b16 %v1994, %v1984
    %v3265 = vpack.c.b16 %v1995, %v1985
    %v3266 = vpack.c.b16 %v1996, %v1986
    %v3267 = vpack.c.b16 %v1997, %v1987
    %v3268 = vpack.c.b16 %v1998, %v1988
    %v3269 = vpack.c.b16 %v1999, %v1989
    %v3270 = vpack.c.b16 %v2010, %v2000
    %v3271 = vpack.c.b16 %v2011, %v2001
    %v3272 = vpack.c.b16 %v2012, %v2002
    %v3273 = vpack.c.b16 %v2013, %v2003
    %v3274 = vpack.c.b16 %v2014, %v2004
    %v3275 = vpack.c.b16 %v2015, %v2005
    %v3276 = vpack.c.b16 %v2016, %v2006
    %v3277 = vpack.c.b16 %v2017, %v2007
    %v3278 = vpack.c.b16 %v2018, %v2008
    %v3279 = vpack.c.b16 %v2019, %v2009
    %v3280 = vpack.c.b16 %v2030, %v2020
    %v3281 = vpack.c.b16 %v2031, %v2021
    %v3282 = vpack.c.b16 %v2032, %v2022
    %v3283 = vpack.c.b16 %v2033, %v2023
    %v3284 = vpack.c.b16 %v2034, %v2024
    %v3285 = vpack.c.b16 %v2035, %v2025
    %v3286 = vpack.c.b16 %v2036, %v2026
    %v3287 = vpack.c.b16 %v2037, %v2027
    %v3288 = vpack.c.b16 %v2038, %v2028
    %v3289 = vpack.c.b16 %v2039, %v2029
    %v3290 = vpack.c.b16 %v2050, %v2040
    %v3291 = vpack.c.b16 %v2051, %v2041
    %v3292 = vpack.c.b16 %v2052, %v2042
    %v3293 = vpack.c.b16 %v2053, %v2043
    %v3294 = vpack.c.b16 %v2054, %v2044
    %v3295 = vpack.c.b16 %v2055, %v2045
    %v3296 = vpack.c.b16 %v2056, %v2046
    %v3297 = vpack.c.b16 %v2057, %v2047
    %v3298 = vpack.c.b16 %v2058, %v2048
    %v3299 = vpack.c.b16 %v2059, %v2049
    %v3300 = vpack.c.b16 %v2070, %v2060
    %v3301 = vpack.c.b16 %v2071, %v2061
    %v3302 = vpack.c.b16 %v2072, %v2062
    %v3303 = vpack.c.b16 %v2073, %v2063
    %v3304 = vpack.c.b16 %v2074, %v2064
    %v3305 = vpack.c.b16 %v2075, %v2065
    %v3306 = vpack.c.b16 %v2076, %v2066
    %v3307 = vpack.c.b16 %v2077, %v2067
    %v3308 = vpack.c.b16 %v2078, %v2068
    %v3309 = vpack.c.b16 %v2079, %v2069
    %v3310 = vpack.c.b16 %v2090, %v2080
    %v3311 = vpack.c.b16 %v2091, %v2081
    %v3312 = vpack.c.b16 %v2092, %v2082
    %v3313 = vpack.c.b16 %v2093, %v2083
    %v3314 = vpack.c.b16 %v2094, %v2084
    %v3315 = vpack.c.b16 %v2095, %v2085
    %v3316 = vpack.c.b16 %v2096, %v2086
    %v3317 = vpack.c.b16 %v2097, %v2087
    %v3318 = vpack.c.b16 %v2098, %v2088
    %v3319 = vpack.c.b16 %v2099, %v2089
    %v3320 = vpack.c.b16 %v2110, %v2100
    %v3321 = vpack.c.b16 %v2111, %v2101
    %v3322 = vpack.c.b16 %v2112, %v2102
    %v3323 = vpack.c.b16 %v2113, %v2103
    %v3324 = vpack.c.b16 %v2114, %v2104
    %v3325 = vpack.c.b16 %v2115, %v2105
    %v3326 = vpack.c.b16 %v2116, %v2106
    %v3327 = vpack.c.b16 %v2117, %v2107
    %v3328 = vpack.c.b16 %v2118, %v2108
    %v3329 = vpack.c.b16 %v2119, %v2109
    %v3330 = vpack.c.b16 %v2130, %v2120
    %v3331 = vpack.c.b16 %v2131, %v2121
    %v3332 = vpack.c.b16 %v2132, %v2122
    %v3333 = vpack.c.b16 %v2133, %v2123
    %v3334 = vpack.c.b16 %v2134, %v2124
    %v3335 = vpack.c.b16 %v2135, %v2125
    %v3336 = vpack.c.b16 %v2136, %v2126
    %v3337 = vpack.c.b16 %v2137, %v2127
    %v3338 = vpack.c.b16 %v2138, %v2128
    %v3339 = vpack.c.b16 %v2139, %v2129
    %v3340 = vpack.c.b16 %v2150, %v2140
    %v3341 = vpack.c.b16 %v2151, %v2141
    %v3342 = vpack.c.b16 %v2152, %v2142
    %v3343 = vpack.c.b16 %v2153, %v2143
    %v3344 = vpack.c.b16 %v2154, %v2144
    %v3345 = vpack.c.b16 %v2155, %v2145
    %v3346 = vpack.c.b16 %v2156, %v2146
    %v3347 = vpack.c.b16 %v2157, %v2147
    %v3348 = vpack.c.b16 %v2158, %v2148
    %v3349 = vpack.c.b16 %v2159, %v2149
    %v3350 = vpack.c.b16 %v2170, %v2160
    %v3351 = vpack.c.b16 %v2171, %v2161
    %v3352 = vpack.c.b16 %v2172, %v2162
    %v3353 = vpack.c.b16 %v2173, %v2163
    %v3354 = vpack.c.b16 %v2174, %v2164
    %v3355 = vpack.c.b16 %v2175, %v2165
    %v3356 = vpack.c.b16 %v2176, %v2166
    %v3357 = vpack.c.b16 %v2177, %v2167
    %v3358 = vpack.c.b16 %v2178, %v2168
    %v3359 = vpack.c.b16 %v2179, %v2169
    %v3360 = vpack.c.b16 %v2190, %v2180
    %v3361 = vpack.c.b16 %v2191, %v2181
    %v3362 = vpack.c.b16 %v2192, %v2182
    %v3363 = vpack.c.b16 %v2193, %v2183
    %v3364 = vpack.c.b16 %v2194, %v2184
    %v3365 = vpack.c.b16 %v2195, %v2185
    %v3366 = vpack.c.b16 %v2196, %v2186
    %v3367 = vpack.c.b16 %v2197, %v2187
    %v3368 = vpack.c.b16 %v2198, %v2188
    %v3369 = vpack.c.b16 %v2199, %v2189
    %v3370 = vpack.c.b16 %v2210, %v2200
    %v3371 = vpack.c.b16 %v2211, %v2201
    %v3372 = vpack.c.b16 %v2212, %v2202
    %v3373 = vpack.c.b16 %v2213, %v2203
    %v3374 = vpack.c.b16 %v2214, %v2204
    %v3375 = vpack.c.b16 %v2215, %v2205
    %v3376 = vpack.c.b16 %v2216, %v2206
    %v3377 = vpack.c.b16 %v2217, %v2207
    %v3378 = vpack.c.b16 %v2218, %v2208
    %v3379 = vpack.c.b16 %v2219, %v2209
    %v3380 = vpack.c.b16 %v2230, %v2220
    %v3381 = vpack.c.b16 %v2231, %v2221
    %v3382 = vpack.c.b16 %v2232, %v2222
    %v3383 = vpack.c.b16 %v2233, %v2223
    %v3384 = vpack.c.b16 %v2234, %v2224
    %v3385 = vpack.c.b16 %v2235, %v2225
    %v3386 = vpack.c.b16 %v2236, %v2226
    %v3387 = vpack.c.b16 %v2237, %v2227
    %v3388 = vpack.c.b16 %v2238, %v2228
    %v3389 = vpack.c.b16 %v2239, %v2229
    %v3390 = vpack.c.b16 %v2250, %v2240
    %v3391 = vpack.c.b16 %v2251, %v2241
    %v3392 = vpack.c.b16 %v2252, %v2242
    %v3393 = vpack.c.b16 %v2253, %v2243
    %v3394 = vpack.c.b16 %v2254, %v2244
    %v3395 = vpack.c.b16 %v2255, %v2245
    %v3396 = vpack.c.b16 %v2256, %v2246
    %v3397 = vpack.c.b16 %v2257, %v2247
    %v3398 = vpack.c.b16 %v2258, %v2248
    %v3399 = vpack.c.b16 %v2259, %v2249
    %v3400 = vpack.c.b16 %v2270, %v2260
    %v3401 = vpack.c.b16 %v2271, %v2261
    %v3402 = vpack.c.b16 %v2272, %v2262
    %v3403 = vpack.c.b16 %v2273, %v2263
    %v3404 = vpack.c.b16 %v2274, %v2264
    %v3405 = vpack.c.b16 %v2275, %v2265
    %v3406 = vpack.c.b16 %v2276, %v2266
    %v3407 = vpack.c.b16 %v2277, %v2267
    %v3408 = vpack.c.b16 %v2278, %v2268
    %v3409 = vpack.c.b16 %v2279, %v2269
    %v3410 = vpack.c.b16 %v2290, %v2280
    %v3411 = vpack.c.b16 %v2291, %v2281
    %v3412 = vpack.c.b16 %v2292, %v2282
    %v3413 = vpack.c.b16 %v2293, %v2283
    %v3414 = vpack.c.b16 %v2294, %v2284
    %v3415 = vpack.c.b16 %v2295, %v2285
    %v3416 = vpack.c.b16 %v2296, %v2286
    %v3417 = vpack.c.b16 %v2297, %v2287
    %v3418 = vpack.c.b16 %v2298, %v2288
    %v3419 = vpack.c.b16 %v2299, %v2289
    %v3420 = vpack.c.b16 %v2310, %v2300
    %v3421 = vpack.c.b16 %v2311, %v2301
    %v3422 = vpack.c.b16 %v2312, %v2302
    %v3423 = vpack.c.b16 %v2313, %v2303
    %v3424 = vpack.c.b16 %v2314, %v2304
    %v3425 = vpack.c.b16 %v2315, %v2305
    %v3426 = vpack.c.b16 %v2316, %v2306
    %v3427 = vpack.c.b16 %v2317, %v2307
    %v3428 = vpack.c.b16 %v2318, %v2308
    %v3429 = vpack.c.b16 %v2319, %v2309
    %v3430 = vpack.c.b16 %v2330, %v2320
    %v3431 = vpack.c.b16 %v2331, %v2321
    %v3432 = vpack.c.b16 %v2332, %v2322
    %v3433 = vpack.c.b16 %v2333, %v2323
    %v3434 = vpack.c.b16 %v2334, %v2324
    %v3435 = vpack.c.b16 %v2335, %v2325
    %v3436 = vpack.c.b16 %v2336, %v2326
    %v3437 = vpack.c.b16 %v2337, %v2327
    %v3438 = vpack.c.b16 %v2338, %v2328
    %v3439 = vpack.c.b16 %v2339, %v2329
    %v3440 = vpack.c.b16 %v2350, %v2340
    %v3441 = vpack.c.b16 %v2351, %v2341
    %v3442 = vpack.c.b16 %v2352, %v2342
    %v3443 = vpack.c.b16 %v2353, %v2343
    %v3444 = vpack.c.b16 %v2354, %v2344
    %v3445 = vpack.c.b16 %v2355, %v2345
    %v3446 = vpack.c.b16 %v2356, %v2346
    %v3447 = vpack.c.b16 %v2357, %v2347
    %v3448 = vpack.c.b16 %v2358, %v2348
    %v3449 = vpack.c.b16 %v2359, %v2349
    %v3450 = vpack.c.b16 %v2370, %v2360
    %v3451 = vpack.c.b16 %v2371, %v2361
    %v3452 = vpack.c.b16 %v2372, %v2362
    %v3453 = vpack.c.b16 %v2373, %v2363
    %v3454 = vpack.c.b16 %v2374, %v2364
    %v3455 = vpack.c.b16 %v2375, %v2365
    %v3456 = vpack.c.b16 %v2376, %v2366
    %v3457 = vpack.c.b16 %v2377, %v2367
    %v3458 = vpack.c.b16 %v2378, %v2368
    %v3459 = vpack.c.b16 %v2379, %v2369
    %v3460 = vpack.c.b16 %v2390, %v2380
    %v3461 = vpack.c.b16 %v2391, %v2381
    %v3462 = vpack.c.b16 %v2392, %v2382
    %v3463 = vpack.c.b16 %v2393, %v2383
    %v3464 = vpack.c.b16 %v2394, %v2384
    %v3465 = vpack.c.b16 %v2395, %v2385
    %v3466 = vpack.c.b16 %v2396, %v2386
    %v3467 = vpack.c.b16 %v2397, %v2387
    %v3468 = vpack.c.b16 %v2398, %v2388
    %v3469 = vpack.c.b16 %v2399, %v2389
    %v3470 = vpack.c.b16 %v2410, %v2400
    %v3471 = vpack.c.b16 %v2411, %v2401
    %v3472 = vpack.c.b16 %v2412, %v2402
    %v3473 = vpack.c.b16 %v2413, %v2403
    %v3474 = vpack.c.b16 %v2414, %v2404
    %v3475 = vpack.c.b16 %v2415, %v2405
    %v3476 = vpack.c.b16 %v2416, %v2406
    %v3477 = vpack.c.b16 %v2417, %v2407
    %v3478 = vpack.c.b16 %v2418, %v2408
    %v3479 = vpack.c.b16 %v2419, %v2409
    %v3480 = vpack.c.b16 %v2430, %v2420
    %v3481 = vpack.c.b16 %v2431, %v2421
    %v3482 = vpack.c.b16 %v2432, %v2422
    %v3483 = vpack.c.b16 %v2433, %v2423
    %v3484 = vpack.c.b16 %v2434, %v2424
    %v3485 = vpack.c.b16 %v2435, %v2425
    %v3486 = vpack.c.b16 %v2436, %v2426
    %v3487 = vpack.c.b16 %v2437, %v2427
    %v3488 = vpack.c.b16 %v2438, %v2428
    %v3489 = vpack.c.b16 %v2439, %v2429
    %v3490 = vpack.c.b16 %v2450, %v2440
    %v3491 = vpack.c.b16 %v2451, %v2441
    %v3492 = vpack.c.b16 %v2452, %v2442
    %v3493 = vpack.c.b16 %v2453, %v2443
    %v3494 = vpack.c.b16 %v2454, %v2444
    %v3495 = vpack.c.b16 %v2455, %v2445
    %v3496 = vpack.c.b16 %v2456, %v2446
    %v3497 = vpack.c.b16 %v2457, %v2447
    %v3498 = vpack.c.b16 %v2458, %v2448
    %v3499 = vpack.c.b16 %v2459, %v2449
    %v3500 = vpack.c.b16 %v2470, %v2460
    %v3501 = vpack.c.b16 %v2471, %v2461
    %v3502 = vpack.c.b16 %v2472, %v2462
    %v3503 = vpack.c.b16 %v2473, %v2463
    %v3504 = vpack.c.b16 %v2474, %v2464
    %v3505 = vpack.c.b16 %v2475, %v2465
    %v3506 = vpack.c.b16 %v2476, %v2466
    %v3507 = vpack.c.b16 %v2477, %v2467
    %v3508 = vpack.c.b16 %v2478, %v2468
    %v3509 = vpack.c.b16 %v2479, %v2469
    %v3510 = vpack.c.b16 %v2490, %v2480
    %v3511 = vpack.c.b16 %v2491, %v2481
    %v3512 = vpack.c.b16 %v2492, %v2482
    %v3513 = vpack.c.b16 %v2493, %v2483
    %v3514 = vpack.c.b16 %v2494, %v2484
    %v3515 = vpack.c.b16 %v2495, %v2485
    %v3516 = vpack.c.b16 %v2496, %v2486
    %v3517 = vpack.c.b16 %v2497, %v2487
    %v3518 = vpack.c.b16 %v2498, %v2488
    %v3519 = vpack.c.b16 %v2499, %v2489
    %v3520 = vpack.c.b16 %v2510, %v2500
    %v3521 = vpack.c.b16 %v2511, %v2501
    %v3522 = vpack.c.b16 %v2512, %v2502
    %v3523 = vpack.c.b16 %v2513, %v2503
    %v3524 = vpack.c.b16 %v2514, %v2504
    %v3525 = vpack.c.b16 %v2515, %v2505
    %v3526 = vpack.c.b16 %v2516, %v2506
    %v3527 = vpack.c.b16 %v2517, %v2507
    %v3528 = vpack.c.b16 %v2518, %v2508
    %v3529 = vpack.c.b16 %v2519, %v2509
    %v3530 = vpack.c.b16 %v2530, %v2520
    %v3531 = vpack.c.b16 %v2531, %v2521
    %v3532 = vpack.c.b16 %v2532, %v2522
    %v3533 = vpack.c.b16 %v2533, %v2523
    %v3534 = vpack.c.b16 %v2534, %v2524
    %v3535 = vpack.c.b16 %v2535, %v2525
    %v3536 = vpack.c.b16 %v2536, %v2526
    %v3537 = vpack.c.b16 %v2537, %v2527
    %v3538 = vpack.c.b16 %v2538, %v2528
    %v3539 = vpack.c.b16 %v2539, %v2529
    %v3540 = vpack.c.b16 %v2550, %v2540
    %v3541 = vpack.c.b16 %v2551, %v2541
    %v3542 = vpack.c.b16 %v2552, %v2542
    %v3543 = vpack.c.b16 %v2553, %v2543
    %v3544 = vpack.c.b16 %v2554, %v2544
    %v3545 = vpack.c.b16 %v2555, %v2545
    %v3546 = vpack.c.b16 %v2556, %v2546
    %v3547 = vpack.c.b16 %v2557, %v2547
    %v3548 = vpack.c.b16 %v2558, %v2548
    %v3549 = vpack.c.b16 %v2559, %v2549
    %v3550 = vpack.c.b16 %v2570, %v2560
    %v3551 = vpack.c.b16 %v2571, %v2561
    %v3552 = vpack.c.b16 %v2572, %v2562
    %v3553 = vpack.c.b16 %v2573, %v2563
    %v3554 = vpack.c.b16 %v2574, %v2564
    %v3555 = vpack.c.b16 %v2575, %v2565
    %v3556 = vpack.c.b16 %v2576, %v2566
    %v3557 = vpack.c.b16 %v2577, %v2567
    %v3558 = vpack.c.b16 %v2578, %v2568
    %v3559 = vpack.c.b16 %v2579, %v2569
    %v3560 = vpack.c.b16 %v2590, %v2580
    %v3561 = vpack.c.b16 %v2591, %v2581
    %v3562 = vpack.c.b16 %v2592, %v2582
    %v3563 = vpack.c.b16 %v2593, %v2583
    %v3564 = vpack.c.b16 %v2594, %v2584
    %v3565 = vpack.c.b16 %v2595, %v2585
    %v3566 = vpack.c.b16 %v2596, %v2586
    %v3567 = vpack.c.b16 %v2597, %v2587
    %v3568 = vpack.c.b16 %v2598, %v2588
    %v3569 = vpack.c.b16 %v2599, %v2589
    %v3570 = vpack.c.b16 %v2610, %v2600
    %v3571 = vpack.c.b16 %v2611, %v2601
    %v3572 = vpack.c.b16 %v2612, %v2602
    %v3573 = vpack.c.b16 %v2613, %v2603
    %v3574 = vpack.c.b16 %v2614, %v2604
    %v3575 = vpack.c.b16 %v2615, %v2605
    %v3576 = vpack.c.b16 %v2616, %v2606
    %v3577 = vpack.c.b16 %v2617, %v2607
    %v3578 = vpack.c.b16 %v2618, %v2608
    %v3579 = vpack.c.b16 %v2619, %v2609
    %v3580 = vpack.c.b16 %v2630, %v2620
    %v3581 = vpack.c.b16 %v2631, %v2621
    %v3582 = vpack.c.b16 %v2632, %v2622
    %v3583 = vpack.c.b16 %v2633, %v2623
    %v3584 = vpack.c.b16 %v2634, %v2624
    %v3585 = vpack.c.b16 %v2635, %v2625
    %v3586 = vpack.c.b16 %v2636, %v2626
    %v3587 = vpack.c.b16 %v2637, %v2627
    %v3588 = vpack.c.b16 %v2638, %v2628
    %v3589 = vpack.c.b16 %v2639, %v2629
    %v3590 = vpack.c.b16 %v2650, %v2640
    %v3591 = vpack.c.b16 %v2651, %v2641
    %v3592 = vpack.c.b16 %v2652, %v2642
    %v3593 = vpack.c.b16 %v2653, %v2643
    %v3594 = vpack.c.b16 %v2654, %v2644
    %v3595 = vpack.c.b16 %v2655, %v2645
    %v3596 = vpack.c.b16 %v2656, %v2646
    %v3597 = vpack.c.b16 %v2657, %v2647
    %v3598 = vpack.c.b16 %v2658, %v2648
    %v3599 = vpack.c.b16 %v2659, %v2649
    %v3600 = vpack.c.b16 %v2670, %v2660
    %v3601 = vpack.c.b16 %v2671, %v2661
    %v3602 = vpack.c.b16 %v2672, %v2662
    %v3603 = vpack.c.b16 %v2673, %v2663
    %v3604 = vpack.c.b16 %v2674, %v2664
    %v3605 = vpack.c.b16 %v2675, %v2665
    %v3606 = vpack.c.b16 %v2676, %v2666
    %v3607 = vpack.c.b16 %v2677, %v2667
    %v3608 = vpack.c.b16 %v2678, %v2668
    %v3609 = vpack.c.b16 %v2679, %v2669
    %v3610 = vpack.c.b16 %v2690, %v2680
    %v3611 = vpack.c.b16 %v2691, %v2681
    %v3612 = vpack.c.b16 %v2692, %v2682
    %v3613 = vpack.c.b16 %v2693, %v2683
    %v3614 = vpack.c.b16 %v2694, %v2684
    %v3615 = vpack.c.b16 %v2695, %v2685
    %v3616 = vpack.c.b16 %v2696, %v2686
    %v3617 = vpack.c.b16 %v2697, %v2687
    %v3618 = vpack.c.b16 %v2698, %v2688
    %v3619 = vpack.c.b16 %v2699, %v2689
    %v3620 = vpack.c.b16 %v2710, %v2700
    %v3621 = vpack.c.b16 %v2711, %v2701
    %v3622 = vpack.c.b16 %v2712, %v2702
    %v3623 = vpack.c.b16 %v2713, %v2703
    %v3624 = vpack.c.b16 %v2714, %v2704
    %v3625 = vpack.c.b16 %v2715, %v2705
    %v3626 = vpack.c.b16 %v2716, %v2706
    %v3627 = vpack.c.b16 %v2717, %v2707
    %v3628 = vpack.c.b16 %v2718, %v2708
    %v3629 = vpack.c.b16 %v2719, %v2709
    %v3630 = vpack.c.b16 %v2730, %v2720
    %v3631 = vpack.c.b16 %v2731, %v2721
    %v3632 = vpack.c.b16 %v2732, %v2722
    %v3633 = vpack.c.b16 %v2733, %v2723
    %v3634 = vpack.c.b16 %v2734, %v2724
    %v3635 = vpack.c.b16 %v2735, %v2725
    %v3636 = vpack.c.b16 %v2736, %v2726
    %v3637 = vpack.c.b16 %v2737, %v2727
    %v3638 = vpack.c.b16 %v2738, %v2728
    %v3639 = vpack.c.b16 %v2739, %v2729
    %v3640 = vpack.c.b16 %v2750, %v2740
    %v3641 = vpack.c.b16 %v2751, %v2741
    %v3642 = vpack.c.b16 %v2752, %v2742
    %v3643 = vpack.c.b16 %v2753, %v2743
    %v3644 = vpack.c.b16 %v2754, %v2744
    %v3645 = vpack.c.b16 %v2755, %v2745
    %v3646 = vpack.c.b16 %v2756, %v2746
    %v3647 = vpack.c.b16 %v2757, %v2747
    %v3648 = vpack.c.b16 %v2758, %v2748
    %v3649 = vpack.c.b16 %v2759, %v2749
    %v3650 = vpack.c.b16 %v2770, %v2760
    %v3651 = vpack.c.b16 %v2771, %v2761
    %v3652 = vpack.c.b16 %v2772, %v2762
    %v3653 = vpack.c.b16 %v2773, %v2763
    %v3654 = vpack.c.b16 %v2774, %v2764
    %v3655 = vpack.c.b16 %v2775, %v2765
    %v3656 = vpack.c.b16 %v2776, %v2766
    %v3657 = vpack.c.b16 %v2777, %v2767
    %v3658 = vpack.c.b16 %v2778, %v2768
    %v3659 = vpack.c.b16 %v2779, %v2769
    %v3660 = vpack.c.b16 %v2790, %v2780
    %v3661 = vpack.c.b16 %v2791, %v2781
    %v3662 = vpack.c.b16 %v2792, %v2782
    %v3663 = vpack.c.b16 %v2793, %v2783
    %v3664 = vpack.c.b16 %v2794, %v2784
    %v3665 = vpack.c.b16 %v2795, %v2785
    %v3666 = vpack.c.b16 %v2796, %v2786
    %v3667 = vpack.c.b16 %v2797, %v2787
    %v3668 = vpack.c.b16 %v2798, %v2788
    %v3669 = vpack.c.b16 %v2799, %v2789
    %v3670 = vpack.c.b16 %v2810, %v2800
    %v3671 = vpack.c.b16 %v2811, %v2801
    %v3672 = vpack.c.b16 %v2812, %v2802
    %v3673 = vpack.c.b16 %v2813, %v2803
    %v3674 = vpack.c.b16 %v2814, %v2804
    %v3675 = vpack.c.b16 %v2815, %v2805
    %v3676 = vpack.c.b16 %v2816, %v2806
    %v3677 = vpack.c.b16 %v2817, %v2807
    %v3678 = vpack.c.b16 %v2818, %v2808
    %v3679 = vpack.c.b16 %v2819, %v2809
    %v3680 = vpack.c.b16 %v2830, %v2820
    %v3681 = vpack.c.b16 %v2831, %v2821
    %v3682 = vpack.c.b16 %v2832, %v2822
    %v3683 = vpack.c.b16 %v2833, %v2823
    %v3684 = vpack.c.b16 %v2834, %v2824
    %v3685 = vpack.c.b16 %v2835, %v2825
    %v3686 = vpack.c.b16 %v2836, %v2826
    %v3687 = vpack.c.b16 %v2837, %v2827
    %v3688 = vpack.c.b16 %v2838, %v2828
    %v3689 = vpack.c.b16 %v2839, %v2829
    %v3690 = vpack.c.b16 %v2850, %v2840
    %v3691 = vpack.c.b16 %v2851, %v2841
    %v3692 = vpack.c.b16 %v2852, %v2842
    %v3693 = vpack.c.b16 %v2853, %v2843
    %v3694 = vpack.c.b16 %v2854, %v2844
    %v3695 = vpack.c.b16 %v2855, %v2845
    %v3696 = vpack.c.b16 %v2856, %v2846
    %v3697 = vpack.c.b16 %v2857, %v2847
    %v3698 = vpack.c.b16 %v2858, %v2848
    %v3699 = vpack.c.b16 %v2859, %v2849
    %v3700 = vpack.c.b16 %v2870, %v2860
    %v3701 = vpack.c.b16 %v2871, %v2861
    %v3702 = vpack.c.b16 %v2872, %v2862
    %v3703 = vpack.c.b16 %v2873, %v2863
    %v3704 = vpack.c.b16 %v2874, %v2864
    %v3705 = vpack.c.b16 %v2875, %v2865
    %v3706 = vpack.c.b16 %v2876, %v2866
    %v3707 = vpack.c.b16 %v2877, %v2867
    %v3708 = vpack.c.b16 %v2878, %v2868
    %v3709 = vpack.c.b16 %v2879, %v2869
    %v3710 = vpack.c.b16 %v2890, %v2880
    %v3711 = vpack.c.b16 %v2891, %v2881
    %v3712 = vpack.c.b16 %v2892, %v2882
    %v3713 = vpack.c.b16 %v2893, %v2883
    %v3714 = vpack.c.b16 %v2894, %v2884
    %v3715 = vpack.c.b16 %v2895, %v2885
    %v3716 = vpack.c.b16 %v2896, %v2886
    %v3717 = vpack.c.b16 %v2897, %v2887
    %v3718 = vpack.c.b16 %v2898, %v2888
    %v3719 = vpack.c.b16 %v2899, %v2889
    %v3720 = vpack.c.b16 %v2910, %v2900
    %v3721 = vpack.c.b16 %v2911, %v2901
    %v3722 = vpack.c.b16 %v2912, %v2902
    %v3723 = vpack.c.b16 %v2913, %v2903
    %v3724 = vpack.c.b16 %v2914, %v2904
    %v3725 = vpack.c.b16 %v2915, %v2905
    %v3726 = vpack.c.b16 %v2916, %v2906
    %v3727 = vpack.c.b16 %v2917, %v2907
    %v3728 = vpack.c.b16 %v2918, %v2908
    %v3729 = vpack.c.b16 %v2919, %v2909
    %v3730 = vpack.c.b16 %v2930, %v2920
    %v3731 = vpack.c.b16 %v2931, %v2921
    %v3732 = vpack.c.b16 %v2932, %v2922
    %v3733 = vpack.c.b16 %v2933, %v2923
    %v3734 = vpack.c.b16 %v2934, %v2924
    %v3735 = vpack.c.b16 %v2935, %v2925
    %v3736 = vpack.c.b16 %v2936, %v2926
    %v3737 = vpack.c.b16 %v2937, %v2927
    %v3738 = vpack.c.b16 %v2938, %v2928
    %v3739 = vpack.c.b16 %v2939, %v2929
    %v3740 = vpack.c.b16 %v2950, %v2940
    %v3741 = vpack.c.b16 %v2951, %v2941
    %v3742 = vpack.c.b16 %v2952, %v2942
    %v3743 = vpack.c.b16 %v2953, %v2943
    %v3744 = vpack.c.b16 %v2954, %v2944
    %v3745 = vpack.c.b16 %v2955, %v2945
    %v3746 = vpack.c.b16 %v2956, %v2946
    %v3747 = vpack.c.b16 %v2957, %v2947
    %v3748 = vpack.c.b16 %v2958, %v2948
    %v3749 = vpack.c.b16 %v2959, %v2949
    %v3750 = vpack.c.b16 %v2970, %v2960
    %v3751 = vpack.c.b16 %v2971, %v2961
    %v3752 = vpack.c.b16 %v2972, %v2962
    %v3753 = vpack.c.b16 %v2973, %v2963
    %v3754 = vpack.c.b16 %v2974, %v2964
    %v3755 = vpack.c.b16 %v2975, %v2965
    %v3756 = vpack.c.b16 %v2976, %v2966
    %v3757 = vpack.c.b16 %v2977, %v2967
    %v3758 = vpack.c.b16 %v2978, %v2968
    %v3759 = vpack.c.b16 %v2979, %v2969
    %v3760 = vpack.c.b16 %v2990, %v2980
    %v3761 = vpack.c.b16 %v2991, %v2981
    %v3762 = vpack.c.b16 %v2992, %v2982
    %v3763 = vpack.c.b16 %v2993, %v2983
    %v3764 = vpack.c.b16 %v2994, %v2984
    %v3765 = vpack.c.b16 %v2995, %v2985
    %v3766 = vpack.c.b16 %v2996, %v2986
    %v3767 = vpack.c.b16 %v2997, %v2987
    %v3768 = vpack.c.b16 %v2998, %v2988
    %v3769 = vpack.c.b16 %v2999, %v2989
    %v3770 = vpack.c.b16 %v3010, %v3000
    %v3771 = vpack.c.b16 %v3011, %v3001
    %v3772 = vpack.c.b16 %v3012, %v3002
    %v3773 = vpack.c.b16 %v3013, %v3003
    %v3774 = vpack.c.b16 %v3014, %v3004
    %v3775 = vpack.c.b16 %v3015, %v3005
    %v3776 = vpack.c.b16 %v3016, %v3006
    %v3777 = vpack.c.b16 %v3017, %v3007
    %v3778 = vpack.c.b16 %v3018, %v3008
    %v3779 = vpack.c.b16 %v3019, %v3009
    %v3780 = vpack.c.b16 %v3030, %v3020
    %v3781 = vpack.c.b16 %v3031, %v3021
    %v3782 = vpack.c.b16 %v3032, %v3022
    %v3783 = vpack.c.b16 %v3033, %v3023
    %v3784 = vpack.c.b16 %v3034, %v3024
    %v3785 = vpack.c.b16 %v3035, %v3025
    %v3786 = vpack.c.b16 %v3036, %v3026
    %v3787 = vpack.c.b16 %v3037, %v3027
    %v3788 = vpack.c.b16 %v3038, %v3028
    %v3789 = vpack.c.b16 %v3039, %v3029
    %v3790 = vpack.c.b16 %v3050, %v3040
    %v3791 = vpack.c.b16 %v3051, %v3041
    %v3792 = vpack.c.b16 %v3052, %v3042
    %v3793 = vpack.c.b16 %v3053, %v3043
    %v3794 = vpack.c.b16 %v3054, %v3044
    %v3795 = vpack.c.b16 %v3055, %v3045
    %v3796 = vpack.c.b16 %v3056, %v3046
    %v3797 = vpack.c.b16 %v3057, %v3047
    %v3798 = vpack.c.b16 %v3058, %v3048
    %v3799 = vpack.c.b16 %v3059, %v3049
    %v3800 = vpack.c.b16 %v3070, %v3060
    %v3801 = vpack.c.b16 %v3071, %v3061
    %v3802 = vpack.c.b16 %v3072, %v3062
    %v3803 = vpack.c.b16 %v3073, %v3063
    %v3804 = vpack.c.b16 %v3074, %v3064
    %v3805 = vpack.c.b16 %v3075, %v3065
    %v3806 = vpack.c.b16 %v3076, %v3066
    %v3807 = vpack.c.b16 %v3077, %v3067
    %v3808 = vpack.c.b16 %v3078, %v3068
    %v3809 = vpack.c.b16 %v3079, %v3069
    %v3810 = vpack.c.b16 %v3090, %v3080
    %v3811 = vpack.c.b16 %v3091, %v3081
    %v3812 = vpack.c.b16 %v3092, %v3082
    %v3813 = vpack.c.b16 %v3093, %v3083
    %v3814 = vpack.c.b16 %v3094, %v3084
    %v3815 = vpack.c.b16 %v3095, %v3085
    %v3816 = vpack.c.b16 %v3096, %v3086
    %v3817 = vpack.c.b16 %v3097, %v3087
    %v3818 = vpack.c.b16 %v3098, %v3088
    %v3819 = vpack.c.b16 %v3099, %v3089
    %v3820 = vpack.c.b16 %v3110, %v3100
    %v3821 = vpack.c.b16 %v3111, %v3101
    %v3822 = vpack.c.b16 %v3112, %v3102
    %v3823 = vpack.c.b16 %v3113, %v3103
    %v3824 = vpack.c.b16 %v3114, %v3104
    %v3825 = vpack.c.b16 %v3115, %v3105
    %v3826 = vpack.c.b16 %v3116, %v3106
    %v3827 = vpack.c.b16 %v3117, %v3107
    %v3828 = vpack.c.b16 %v3118, %v3108
    %v3829 = vpack.c.b16 %v3119, %v3109
    %v3830 = vpack.c.b16 %v3130, %v3120
    %v3831 = vpack.c.b16 %v3131, %v3121
    %v3832 = vpack.c.b16 %v3132, %v3122
    %v3833 = vpack.c.b16 %v3133, %v3123
    %v3834 = vpack.c.b16 %v3134, %v3124
    %v3835 = vpack.c.b16 %v3135, %v3125
    %v3836 = vpack.c.b16 %v3136, %v3126
    %v3837 = vpack.c.b16 %v3137, %v3127
    %v3838 = vpack.c.b16 %v3138, %v3128
    %v3839 = vpack.c.b16 %v3139, %v3129
    %v3840 = vpack.c.b16 %v3150, %v3140
    %v3841 = vpack.c.b16 %v3151, %v3141
    %v3842 = vpack.c.b16 %v3152, %v3142
    %v3843 = vpack.c.b16 %v3153, %v3143
    %v3844 = vpack.c.b16 %v3154, %v3144
    %v3845 = vpack.c.b16 %v3155, %v3145
    %v3846 = vpack.c.b16 %v3156, %v3146
    %v3847 = vpack.c.b16 %v3157, %v3147
    %v3848 = vpack.c.b16 %v3158, %v3148
    %v3849 = vpack.c.b16 %v3159, %v3149
    %v3850 = vpack.c.b16 %v3170, %v3160
    %v3851 = vpack.c.b16 %v3171, %v3161
    %v3852 = vpack.c.b16 %v3172, %v3162
    %v3853 = vpack.c.b16 %v3173, %v3163
    %v3854 = vpack.c.b16 %v3174, %v3164
    %v3855 = vpack.c.b16 %v3175, %v3165
    %v3856 = vpack.c.b16 %v3176, %v3166
    %v3857 = vpack.c.b16 %v3177, %v3167
    %v3858 = vpack.c.b16 %v3178, %v3168
    %v3859 = vpack.c.b16 %v3179, %v3169
    %v3860 = vpack.c.b16 %v3190, %v3180
    %v3861 = vpack.c.b16 %v3191, %v3181
    %v3862 = vpack.c.b16 %v3192, %v3182
    %v3863 = vpack.c.b16 %v3193, %v3183
    %v3864 = vpack.c.b16 %v3194, %v3184
    %v3865 = vpack.c.b16 %v3195, %v3185
    %v3866 = vpack.c.b16 %v3196, %v3186
    %v3867 = vpack.c.b16 %v3197, %v3187
    %v3868 = vpack.c.b16 %v3198, %v3188
    %v3869 = vpack.c.b16 %v3199, %v3189
    %v3870 = vpack.c.b16 %v3210, %v3200
    %v3871 = vpack.c.b16 %v3211, %v3201
    %v3872 = vpack.c.b16 %v3212, %v3202
    %v3873 = vpack.c.b16 %v3213, %v3203
    %v3874 = vpack.c.b16 %v3214, %v3204
    %v3875 = vpack.c.b16 %v3215, %v3205
    %v3876 = vpack.c.b16 %v3216, %v3206
    %v3877 = vpack.c.b16 %v3217, %v3207
    %v3878 = vpack.c.b16 %v3218, %v3208
    %v3879 = vpack.c.b16 %v3219, %v3209
    %v3880 = vpack.c.b16 %v3230, %v3220
    %v3881 = vpack.c.b16 %v3231, %v3221
    %v3882 = vpack.c.b16 %v3232, %v3222
    %v3883 = vpack.c.b16 %v3233, %v3223
    %v3884 = vpack.c.b16 %v3234, %v3224
    %v3885 = vpack.c.b16 %v3235, %v3225
    %v3886 = vpack.c.b16 %v3236, %v3226
    %v3887 = vpack.c.b16 %v3237, %v3227
    %v3888 = vpack.c.b16 %v3238, %v3228
    %v3889 = vpack.c.b16 %v3239, %v3229
    %v3890 = vpack.c.b16 %v3250, %v3240
    %v3891 = vpack.c.b16 %v3251, %v3241
    %v3892 = vpack.c.b16 %v3252, %v3242
    %v3893 = vpack.c.b16 %v3253, %v3243
    %v3894 = vpack.c.b16 %v3254, %v3244
    %v3895 = vpack.c.b16 %v3255, %v3245
    %v3896 = vpack.c.b16 %v3256, %v3246
    %v3897 = vpack.c.b16 %v3257, %v3247
    %v3898 = vpack.c.b16 %v3258, %v3248
    %v3899 = vpack.c.b16 %v3259, %v3249
    %4540 = vmatprep.subr.bf16.mxu0 %v3261
    %4541 = vmatpush1.bf16.msra.mxu0 %v3260
    %4542 = vmatprep.subr.bf16.mxu0 %v3271
    %4543 = vmatpush1.bf16.msra.mxu0 %v3270
    %4544 = vmatprep.subr.bf16.mxu0 %v3281
    %4545 = vmatpush1.bf16.msra.mxu0 %v3280
    %4546 = vmatprep.subr.bf16.mxu0 %v3291
    %4547 = vmatpush1.bf16.msra.mxu0 %v3290
    %4548 = vmatprep.subr.bf16.mxu0 %v3301
    %4549 = vmatpush1.bf16.msra.mxu0 %v3300
    %4550 = vmatprep.subr.bf16.mxu0 %v3311
    %4551 = vmatpush1.bf16.msra.mxu0 %v3310
    %4552 = vmatprep.subr.bf16.mxu0 %v3321
    %4553 = vmatpush1.bf16.msra.mxu0 %v3320
    %4554 = vmatprep.subr.bf16.mxu0 %v3331
    %4555 = vmatpush1.bf16.msra.mxu0 %v3330
    %4556 = vmatprep.subr.bf16.mxu0 %v3341
    %4557 = vmatpush1.bf16.msra.mxu0 %v3340
    %4558 = vmatprep.subr.bf16.mxu0 %v3351
    %4559 = vmatpush1.bf16.msra.mxu0 %v3350
    %4560 = vmatprep.subr.bf16.mxu0 %v3361
    %4561 = vmatpush1.bf16.msra.mxu0 %v3360
    %4562 = vmatprep.subr.bf16.mxu0 %v3371
    %4563 = vmatpush1.bf16.msra.mxu0 %v3370
    %4564 = vmatprep.subr.bf16.mxu0 %v3381
    %4565 = vmatpush1.bf16.msra.mxu0 %v3380
    %4566 = vmatprep.subr.bf16.mxu0 %v3391
    %4567 = vmatpush1.bf16.msra.mxu0 %v3390
    %4568 = vmatprep.subr.bf16.mxu0 %v3401
    %4569 = vmatpush1.bf16.msra.mxu0 %v3400
    %4570 = vmatprep.subr.bf16.mxu0 %v3411
    %4571 = vmatpush1.bf16.msra.mxu0 %v3410
    %4572 = vmatprep.mubr.bf16.mxu0 %v693
    %4573 = vmatmul.mubr.bf16.gmra.mrb[0].mxu0 %v692
    %v4574 = vpop.f32.mrb[0].mxu0
    %v4575 = vadd.f32 0.0, %v4574
    %v4576 = vpop.f32.mrb[0].mxu0
    %v4577 = vadd.f32 0.0, %v4576
    %v4578 = vpop.f32.mrb[0].mxu0
    %v4579 = vpop.f32.mrb[0].mxu0
    %4580 = vdwg.mxu0
    %4581 = vmatprep.subr.bf16.mxu0 %v3421
    %4582 = vmatpush1.bf16.msra.mxu0 %v3420
    %4583 = vmatprep.subr.bf16.mxu0 %v3431
    %4584 = vmatpush1.bf16.msra.mxu0 %v3430
    %4585 = vmatprep.subr.bf16.mxu0 %v3441
    %4586 = vmatpush1.bf16.msra.mxu0 %v3440
    %4587 = vmatprep.subr.bf16.mxu0 %v3451
    %4588 = vmatpush1.bf16.msra.mxu0 %v3450
    %4589 = vmatprep.subr.bf16.mxu0 %v3461
    %4590 = vmatpush1.bf16.msra.mxu0 %v3460
    %4591 = vmatprep.subr.bf16.mxu0 %v3471
    %4592 = vmatpush1.bf16.msra.mxu0 %v3470
    %4593 = vmatprep.subr.bf16.mxu0 %v3481
    %4594 = vmatpush1.bf16.msra.mxu0 %v3480
    %4595 = vmatprep.subr.bf16.mxu0 %v3491
    %4596 = vmatpush1.bf16.msra.mxu0 %v3490
    %4597 = vmatprep.subr.bf16.mxu0 %v3501
    %4598 = vmatpush1.bf16.msra.mxu0 %v3500
    %4599 = vmatprep.subr.bf16.mxu0 %v3511
    %4600 = vmatpush1.bf16.msra.mxu0 %v3510
    %4601 = vmatprep.subr.bf16.mxu0 %v3521
    %4602 = vmatpush1.bf16.msra.mxu0 %v3520
    %4603 = vmatprep.subr.bf16.mxu0 %v3531
    %4604 = vmatpush1.bf16.msra.mxu0 %v3530
    %4605 = vmatprep.subr.bf16.mxu0 %v3541
    %4606 = vmatpush1.bf16.msra.mxu0 %v3540
    %4607 = vmatprep.subr.bf16.mxu0 %v3551
    %4608 = vmatpush1.bf16.msra.mxu0 %v3550
    %4609 = vmatprep.subr.bf16.mxu0 %v3561
    %4610 = vmatpush1.bf16.msra.mxu0 %v3560
    %4611 = vmatprep.subr.bf16.mxu0 %v3571
    %4612 = vmatpush1.bf16.msra.mxu0 %v3570
    %4613 = vmatprep.mubr.bf16.mxu0 %v695
    %4614 = vmatmul.mubr.bf16.gmra.mrb[0].mxu0 %v694
    %v4615 = vpop.f32.mrb[0].mxu0
    %v4616 = vadd.f32 %v4575, %v4615
    %v4617 = vpop.f32.mrb[0].mxu0
    %v4618 = vadd.f32 %v4577, %v4617
    %v4619 = vpop.f32.mrb[0].mxu0
    %v4620 = vpop.f32.mrb[0].mxu0
    %4621 = vdwg.mxu0
    %4622 = vmatprep.subr.bf16.mxu0 %v3581
    %4623 = vmatpush1.bf16.msra.mxu0 %v3580
    %4624 = vmatprep.subr.bf16.mxu0 %v3591
    %4625 = vmatpush1.bf16.msra.mxu0 %v3590
    %4626 = vmatprep.subr.bf16.mxu0 %v3601
    %4627 = vmatpush1.bf16.msra.mxu0 %v3600
    %4628 = vmatprep.subr.bf16.mxu0 %v3611
    %4629 = vmatpush1.bf16.msra.mxu0 %v3610
    %4630 = vmatprep.subr.bf16.mxu0 %v3621
    %4631 = vmatpush1.bf16.msra.mxu0 %v3620
    %4632 = vmatprep.subr.bf16.mxu0 %v3631
    %4633 = vmatpush1.bf16.msra.mxu0 %v3630
    %4634 = vmatprep.subr.bf16.mxu0 %v3641
    %4635 = vmatpush1.bf16.msra.mxu0 %v3640
    %4636 = vmatprep.subr.bf16.mxu0 %v3651
    %4637 = vmatpush1.bf16.msra.mxu0 %v3650
    %4638 = vmatprep.subr.bf16.mxu0 %v3661
    %4639 = vmatpush1.bf16.msra.mxu0 %v3660
    %4640 = vmatprep.subr.bf16.mxu0 %v3671
    %4641 = vmatpush1.bf16.msra.mxu0 %v3670
    %4642 = vmatprep.subr.bf16.mxu0 %v3681
    %4643 = vmatpush1.bf16.msra.mxu0 %v3680
    %4644 = vmatprep.subr.bf16.mxu0 %v3691
    %4645 = vmatpush1.bf16.msra.mxu0 %v3690
    %4646 = vmatprep.subr.bf16.mxu0 %v3701
    %4647 = vmatpush1.bf16.msra.mxu0 %v3700
    %4648 = vmatprep.subr.bf16.mxu0 %v3711
    %4649 = vmatpush1.bf16.msra.mxu0 %v3710
    %4650 = vmatprep.subr.bf16.mxu0 %v3721
    %4651 = vmatpush1.bf16.msra.mxu0 %v3720
    %4652 = vmatprep.subr.bf16.mxu0 %v3731
    %4653 = vmatpush1.bf16.msra.mxu0 %v3730
    %4654 = vmatprep.mubr.bf16.mxu0 %v697
    %4655 = vmatmul.mubr.bf16.gmra.mrb[0].mxu0 %v696
    %v4656 = vpop.f32.mrb[0].mxu0
    %v4657 = vadd.f32 %v4616, %v4656
    %v4658 = vpop.f32.mrb[0].mxu0
    %v4659 = vadd.f32 %v4618, %v4658
    %v4660 = vpop.f32.mrb[0].mxu0
    %v4661 = vpop.f32.mrb[0].mxu0
    %4662 = vdwg.mxu0
    %4663 = vmatprep.subr.bf16.mxu0 %v3741
    %4664 = vmatpush1.bf16.msra.mxu0 %v3740
    %4665 = vmatprep.subr.bf16.mxu0 %v3751
    %4666 = vmatpush1.bf16.msra.mxu0 %v3750
    %4667 = vmatprep.subr.bf16.mxu0 %v3761
    %4668 = vmatpush1.bf16.msra.mxu0 %v3760
    %4669 = vmatprep.subr.bf16.mxu0 %v3771
    %4670 = vmatpush1.bf16.msra.mxu0 %v3770
    %4671 = vmatprep.subr.bf16.mxu0 %v3781
    %4672 = vmatpush1.bf16.msra.mxu0 %v3780
    %4673 = vmatprep.subr.bf16.mxu0 %v3791
    %4674 = vmatpush1.bf16.msra.mxu0 %v3790
    %4675 = vmatprep.subr.bf16.mxu0 %v3801
    %4676 = vmatpush1.bf16.msra.mxu0 %v3800
    %4677 = vmatprep.subr.bf16.mxu0 %v3811
    %4678 = vmatpush1.bf16.msra.mxu0 %v3810
    %4679 = vmatprep.subr.bf16.mxu0 %v3821
    %4680 = vmatpush1.bf16.msra.mxu0 %v3820
    %4681 = vmatprep.subr.bf16.mxu0 %v3831
    %4682 = vmatpush1.bf16.msra.mxu0 %v3830
    %4683 = vmatprep.subr.bf16.mxu0 %v3841
    %4684 = vmatpush1.bf16.msra.mxu0 %v3840
    %4685 = vmatprep.subr.bf16.mxu0 %v3851
    %4686 = vmatpush1.bf16.msra.mxu0 %v3850
    %4687 = vmatprep.subr.bf16.mxu0 %v3861
    %4688 = vmatpush1.bf16.msra.mxu0 %v3860
    %4689 = vmatprep.subr.bf16.mxu0 %v3871
    %4690 = vmatpush1.bf16.msra.mxu0 %v3870
    %4691 = vmatprep.subr.bf16.mxu0 %v3881
    %4692 = vmatpush1.bf16.msra.mxu0 %v3880
    %4693 = vmatprep.subr.bf16.mxu0 %v3891
    %4694 = vmatpush1.bf16.msra.mxu0 %v3890
    %4695 = vmatprep.mubr.bf16.mxu0 %v699
    %4696 = vmatmul.mubr.bf16.gmra.mrb[0].mxu0 %v698
    %v4697 = vpop.f32.mrb[0].mxu0
    %v4698 = vadd.f32 %v4657, %v4697
    %v4699 = vpop.f32.mrb[0].mxu0
    %v4700 = vadd.f32 %v4659, %v4699
    %v4701 = vpop.f32.mrb[0].mxu0
    %v4702 = vpop.f32.mrb[0].mxu0
    %4703 = vdwg.mxu0
    %4704 = vmatprep.subr.bf16.mxu0 %v3263
    %4705 = vmatpush1.bf16.msra.mxu0 %v3262
    %4706 = vmatprep.subr.bf16.mxu0 %v3273
    %4707 = vmatpush1.bf16.msra.mxu0 %v3272
    %4708 = vmatprep.subr.bf16.mxu0 %v3283
    %4709 = vmatpush1.bf16.msra.mxu0 %v3282
    %4710 = vmatprep.subr.bf16.mxu0 %v3293
    %4711 = vmatpush1.bf16.msra.mxu0 %v3292
    %4712 = vmatprep.subr.bf16.mxu0 %v3303
    %4713 = vmatpush1.bf16.msra.mxu0 %v3302
    %4714 = vmatprep.subr.bf16.mxu0 %v3313
    %4715 = vmatpush1.bf16.msra.mxu0 %v3312
    %4716 = vmatprep.subr.bf16.mxu0 %v3323
    %4717 = vmatpush1.bf16.msra.mxu0 %v3322
    %4718 = vmatprep.subr.bf16.mxu0 %v3333
    %4719 = vmatpush1.bf16.msra.mxu0 %v3332
    %4720 = vmatprep.subr.bf16.mxu0 %v3343
    %4721 = vmatpush1.bf16.msra.mxu0 %v3342
    %4722 = vmatprep.subr.bf16.mxu0 %v3353
    %4723 = vmatpush1.bf16.msra.mxu0 %v3352
    %4724 = vmatprep.subr.bf16.mxu0 %v3363
    %4725 = vmatpush1.bf16.msra.mxu0 %v3362
    %4726 = vmatprep.subr.bf16.mxu0 %v3373
    %4727 = vmatpush1.bf16.msra.mxu0 %v3372
    %4728 = vmatprep.subr.bf16.mxu0 %v3383
    %4729 = vmatpush1.bf16.msra.mxu0 %v3382
    %4730 = vmatprep.subr.bf16.mxu0 %v3393
    %4731 = vmatpush1.bf16.msra.mxu0 %v3392
    %4732 = vmatprep.subr.bf16.mxu0 %v3403
    %4733 = vmatpush1.bf16.msra.mxu0 %v3402
    %4734 = vmatprep.subr.bf16.mxu0 %v3413
    %4735 = vmatpush1.bf16.msra.mxu0 %v3412
    %4736 = vmatprep.mubr.bf16.mxu0 %v693
    %4737 = vmatmul.mubr.bf16.gmra.mrb[0].mxu0 %v692
    %v4738 = vpop.f32.mrb[0].mxu0
    %v4739 = vadd.f32 0.0, %v4738
    %v4740 = vpop.f32.mrb[0].mxu0
    %v4741 = vadd.f32 0.0, %v4740
    %v4742 = vpop.f32.mrb[0].mxu0
    %v4743 = vpop.f32.mrb[0].mxu0
    %4744 = vdwg.mxu0
    %4745 = vmatprep.subr.bf16.mxu0 %v3423
    %4746 = vmatpush1.bf16.msra.mxu0 %v3422
    %4747 = vmatprep.subr.bf16.mxu0 %v3433
    %4748 = vmatpush1.bf16.msra.mxu0 %v3432
    %4749 = vmatprep.subr.bf16.mxu0 %v3443
    %4750 = vmatpush1.bf16.msra.mxu0 %v3442
    %4751 = vmatprep.subr.bf16.mxu0 %v3453
    %4752 = vmatpush1.bf16.msra.mxu0 %v3452
    %4753 = vmatprep.subr.bf16.mxu0 %v3463
    %4754 = vmatpush1.bf16.msra.mxu0 %v3462
    %4755 = vmatprep.subr.bf16.mxu0 %v3473
    %4756 = vmatpush1.bf16.msra.mxu0 %v3472
    %4757 = vmatprep.subr.bf16.mxu0 %v3483
    %4758 = vmatpush1.bf16.msra.mxu0 %v3482
    %4759 = vmatprep.subr.bf16.mxu0 %v3493
    %4760 = vmatpush1.bf16.msra.mxu0 %v3492
    %4761 = vmatprep.subr.bf16.mxu0 %v3503
    %4762 = vmatpush1.bf16.msra.mxu0 %v3502
    %4763 = vmatprep.subr.bf16.mxu0 %v3513
    %4764 = vmatpush1.bf16.msra.mxu0 %v3512
    %4765 = vmatprep.subr.bf16.mxu0 %v3523
    %4766 = vmatpush1.bf16.msra.mxu0 %v3522
    %4767 = vmatprep.subr.bf16.mxu0 %v3533
    %4768 = vmatpush1.bf16.msra.mxu0 %v3532
    %4769 = vmatprep.subr.bf16.mxu0 %v3543
    %4770 = vmatpush1.bf16.msra.mxu0 %v3542
    %4771 = vmatprep.subr.bf16.mxu0 %v3553
    %4772 = vmatpush1.bf16.msra.mxu0 %v3552
    %4773 = vmatprep.subr.bf16.mxu0 %v3563
    %4774 = vmatpush1.bf16.msra.mxu0 %v3562
    %4775 = vmatprep.subr.bf16.mxu0 %v3573
    %4776 = vmatpush1.bf16.msra.mxu0 %v3572
    %4777 = vmatprep.mubr.bf16.mxu0 %v695
    %4778 = vmatmul.mubr.bf16.gmra.mrb[0].mxu0 %v694
    %v4779 = vpop.f32.mrb[0].mxu0
    %v4780 = vadd.f32 %v4739, %v4779
    %v4781 = vpop.f32.mrb[0].mxu0
    %v4782 = vadd.f32 %v4741, %v4781
    %v4783 = vpop.f32.mrb[0].mxu0
    %v4784 = vpop.f32.mrb[0].mxu0
    %4785 = vdwg.mxu0
    %4786 = vmatprep.subr.bf16.mxu0 %v3583
    %4787 = vmatpush1.bf16.msra.mxu0 %v3582
    %4788 = vmatprep.subr.bf16.mxu0 %v3593
    %4789 = vmatpush1.bf16.msra.mxu0 %v3592
    %4790 = vmatprep.subr.bf16.mxu0 %v3603
    %4791 = vmatpush1.bf16.msra.mxu0 %v3602
    %4792 = vmatprep.subr.bf16.mxu0 %v3613
    %4793 = vmatpush1.bf16.msra.mxu0 %v3612
    %4794 = vmatprep.subr.bf16.mxu0 %v3623
    %4795 = vmatpush1.bf16.msra.mxu0 %v3622
    %4796 = vmatprep.subr.bf16.mxu0 %v3633
    %4797 = vmatpush1.bf16.msra.mxu0 %v3632
    %4798 = vmatprep.subr.bf16.mxu0 %v3643
    %4799 = vmatpush1.bf16.msra.mxu0 %v3642
    %4800 = vmatprep.subr.bf16.mxu0 %v3653
    %4801 = vmatpush1.bf16.msra.mxu0 %v3652
    %4802 = vmatprep.subr.bf16.mxu0 %v3663
    %4803 = vmatpush1.bf16.msra.mxu0 %v3662
    %4804 = vmatprep.subr.bf16.mxu0 %v3673
    %4805 = vmatpush1.bf16.msra.mxu0 %v3672
    %4806 = vmatprep.subr.bf16.mxu0 %v3683
    %4807 = vmatpush1.bf16.msra.mxu0 %v3682
    %4808 = vmatprep.subr.bf16.mxu0 %v3693
    %4809 = vmatpush1.bf16.msra.mxu0 %v3692
    %4810 = vmatprep.subr.bf16.mxu0 %v3703
    %4811 = vmatpush1.bf16.msra.mxu0 %v3702
    %4812 = vmatprep.subr.bf16.mxu0 %v3713
    %4813 = vmatpush1.bf16.msra.mxu0 %v3712
    %4814 = vmatprep.subr.bf16.mxu0 %v3723
    %4815 = vmatpush1.bf16.msra.mxu0 %v3722
    %4816 = vmatprep.subr.bf16.mxu0 %v3733
    %4817 = vmatpush1.bf16.msra.mxu0 %v3732
    %4818 = vmatprep.mubr.bf16.mxu0 %v697
    %4819 = vmatmul.mubr.bf16.gmra.mrb[0].mxu0 %v696
    %v4820 = vpop.f32.mrb[0].mxu0
    %v4821 = vadd.f32 %v4780, %v4820
    %v4822 = vpop.f32.mrb[0].mxu0
    %v4823 = vadd.f32 %v4782, %v4822
    %v4824 = vpop.f32.mrb[0].mxu0
    %v4825 = vpop.f32.mrb[0].mxu0
    %4826 = vdwg.mxu0
    %4827 = vmatprep.subr.bf16.mxu0 %v3743
    %4828 = vmatpush1.bf16.msra.mxu0 %v3742
    %4829 = vmatprep.subr.bf16.mxu0 %v3753
    %4830 = vmatpush1.bf16.msra.mxu0 %v3752
    %4831 = vmatprep.subr.bf16.mxu0 %v3763
    %4832 = vmatpush1.bf16.msra.mxu0 %v3762
    %4833 = vmatprep.subr.bf16.mxu0 %v3773
    %4834 = vmatpush1.bf16.msra.mxu0 %v3772
    %4835 = vmatprep.subr.bf16.mxu0 %v3783
    %4836 = vmatpush1.bf16.msra.mxu0 %v3782
    %4837 = vmatprep.subr.bf16.mxu0 %v3793
    %4838 = vmatpush1.bf16.msra.mxu0 %v3792
    %4839 = vmatprep.subr.bf16.mxu0 %v3803
    %4840 = vmatpush1.bf16.msra.mxu0 %v3802
    %4841 = vmatprep.subr.bf16.mxu0 %v3813
    %4842 = vmatpush1.bf16.msra.mxu0 %v3812
    %4843 = vmatprep.subr.bf16.mxu0 %v3823
    %4844 = vmatpush1.bf16.msra.mxu0 %v3822
    %4845 = vmatprep.subr.bf16.mxu0 %v3833
    %4846 = vmatpush1.bf16.msra.mxu0 %v3832
    %4847 = vmatprep.subr.bf16.mxu0 %v3843
    %4848 = vmatpush1.bf16.msra.mxu0 %v3842
    %4849 = vmatprep.subr.bf16.mxu0 %v3853
    %4850 = vmatpush1.bf16.msra.mxu0 %v3852
    %4851 = vmatprep.subr.bf16.mxu0 %v3863
    %4852 = vmatpush1.bf16.msra.mxu0 %v3862
    %4853 = vmatprep.subr.bf16.mxu0 %v3873
    %4854 = vmatpush1.bf16.msra.mxu0 %v3872
    %4855 = vmatprep.subr.bf16.mxu0 %v3883
    %4856 = vmatpush1.bf16.msra.mxu0 %v3882
    %4857 = vmatprep.subr.bf16.mxu0 %v3893
    %4858 = vmatpush1.bf16.msra.mxu0 %v3892
    %4859 = vmatprep.mubr.bf16.mxu0 %v699
    %4860 = vmatmul.mubr.bf16.gmra.mrb[0].mxu0 %v698
    %v4861 = vpop.f32.mrb[0].mxu0
    %v4862 = vadd.f32 %v4821, %v4861
    %v4863 = vpop.f32.mrb[0].mxu0
    %v4864 = vadd.f32 %v4823, %v4863
    %v4865 = vpop.f32.mrb[0].mxu0
    %v4866 = vpop.f32.mrb[0].mxu0
    %4867 = vdwg.mxu0
    %4868 = vmatprep.subr.bf16.mxu0 %v3265
    %4869 = vmatpush1.bf16.msra.mxu0 %v3264
    %4870 = vmatprep.subr.bf16.mxu0 %v3275
    %4871 = vmatpush1.bf16.msra.mxu0 %v3274
    %4872 = vmatprep.subr.bf16.mxu0 %v3285
    %4873 = vmatpush1.bf16.msra.mxu0 %v3284
    %4874 = vmatprep.subr.bf16.mxu0 %v3295
    %4875 = vmatpush1.bf16.msra.mxu0 %v3294
    %4876 = vmatprep.subr.bf16.mxu0 %v3305
    %4877 = vmatpush1.bf16.msra.mxu0 %v3304
    %4878 = vmatprep.subr.bf16.mxu0 %v3315
    %4879 = vmatpush1.bf16.msra.mxu0 %v3314
    %4880 = vmatprep.subr.bf16.mxu0 %v3325
    %4881 = vmatpush1.bf16.msra.mxu0 %v3324
    %4882 = vmatprep.subr.bf16.mxu0 %v3335
    %4883 = vmatpush1.bf16.msra.mxu0 %v3334
    %4884 = vmatprep.subr.bf16.mxu0 %v3345
    %4885 = vmatpush1.bf16.msra.mxu0 %v3344
    %4886 = vmatprep.subr.bf16.mxu0 %v3355
    %4887 = vmatpush1.bf16.msra.mxu0 %v3354
    %4888 = vmatprep.subr.bf16.mxu0 %v3365
    %4889 = vmatpush1.bf16.msra.mxu0 %v3364
    %4890 = vmatprep.subr.bf16.mxu0 %v3375
    %4891 = vmatpush1.bf16.msra.mxu0 %v3374
    %4892 = vmatprep.subr.bf16.mxu0 %v3385
    %4893 = vmatpush1.bf16.msra.mxu0 %v3384
    %4894 = vmatprep.subr.bf16.mxu0 %v3395
    %4895 = vmatpush1.bf16.msra.mxu0 %v3394
    %4896 = vmatprep.subr.bf16.mxu0 %v3405
    %4897 = vmatpush1.bf16.msra.mxu0 %v3404
    %4898 = vmatprep.subr.bf16.mxu0 %v3415
    %4899 = vmatpush1.bf16.msra.mxu0 %v3414
    %4900 = vmatprep.mubr.bf16.mxu0 %v693
    %4901 = vmatmul.mubr.bf16.gmra.mrb[0].mxu0 %v692
    %v4902 = vpop.f32.mrb[0].mxu0
    %v4903 = vadd.f32 0.0, %v4902
    %v4904 = vpop.f32.mrb[0].mxu0
    %v4905 = vadd.f32 0.0, %v4904
    %v4906 = vpop.f32.mrb[0].mxu0
    %v4907 = vpop.f32.mrb[0].mxu0
    %4908 = vdwg.mxu0
    %4909 = vmatprep.subr.bf16.mxu0 %v3425
    %4910 = vmatpush1.bf16.msra.mxu0 %v3424
    %4911 = vmatprep.subr.bf16.mxu0 %v3435
    %4912 = vmatpush1.bf16.msra.mxu0 %v3434
    %4913 = vmatprep.subr.bf16.mxu0 %v3445
    %4914 = vmatpush1.bf16.msra.mxu0 %v3444
    %4915 = vmatprep.subr.bf16.mxu0 %v3455
    %4916 = vmatpush1.bf16.msra.mxu0 %v3454
    %4917 = vmatprep.subr.bf16.mxu0 %v3465
    %4918 = vmatpush1.bf16.msra.mxu0 %v3464
    %4919 = vmatprep.subr.bf16.mxu0 %v3475
    %4920 = vmatpush1.bf16.msra.mxu0 %v3474
    %4921 = vmatprep.subr.bf16.mxu0 %v3485
    %4922 = vmatpush1.bf16.msra.mxu0 %v3484
    %4923 = vmatprep.subr.bf16.mxu0 %v3495
    %4924 = vmatpush1.bf16.msra.mxu0 %v3494
    %4925 = vmatprep.subr.bf16.mxu0 %v3505
    %4926 = vmatpush1.bf16.msra.mxu0 %v3504
    %4927 = vmatprep.subr.bf16.mxu0 %v3515
    %4928 = vmatpush1.bf16.msra.mxu0 %v3514
    %4929 = vmatprep.subr.bf16.mxu0 %v3525
    %4930 = vmatpush1.bf16.msra.mxu0 %v3524
    %4931 = vmatprep.subr.bf16.mxu0 %v3535
    %4932 = vmatpush1.bf16.msra.mxu0 %v3534
    %4933 = vmatprep.subr.bf16.mxu0 %v3545
    %4934 = vmatpush1.bf16.msra.mxu0 %v3544
    %4935 = vmatprep.subr.bf16.mxu0 %v3555
    %4936 = vmatpush1.bf16.msra.mxu0 %v3554
    %4937 = vmatprep.subr.bf16.mxu0 %v3565
    %4938 = vmatpush1.bf16.msra.mxu0 %v3564
    %4939 = vmatprep.subr.bf16.mxu0 %v3575
    %4940 = vmatpush1.bf16.msra.mxu0 %v3574
    %4941 = vmatprep.mubr.bf16.mxu0 %v695
    %4942 = vmatmul.mubr.bf16.gmra.mrb[0].mxu0 %v694
    %v4943 = vpop.f32.mrb[0].mxu0
    %v4944 = vadd.f32 %v4903, %v4943
    %v4945 = vpop.f32.mrb[0].mxu0
    %v4946 = vadd.f32 %v4905, %v4945
    %v4947 = vpop.f32.mrb[0].mxu0
    %v4948 = vpop.f32.mrb[0].mxu0
    %4949 = vdwg.mxu0
    %4950 = vmatprep.subr.bf16.mxu0 %v3585
    %4951 = vmatpush1.bf16.msra.mxu0 %v3584
    %4952 = vmatprep.subr.bf16.mxu0 %v3595
    %4953 = vmatpush1.bf16.msra.mxu0 %v3594
    %4954 = vmatprep.subr.bf16.mxu0 %v3605
    %4955 = vmatpush1.bf16.msra.mxu0 %v3604
    %4956 = vmatprep.subr.bf16.mxu0 %v3615
    %4957 = vmatpush1.bf16.msra.mxu0 %v3614
    %4958 = vmatprep.subr.bf16.mxu0 %v3625
    %4959 = vmatpush1.bf16.msra.mxu0 %v3624
    %4960 = vmatprep.subr.bf16.mxu0 %v3635
    %4961 = vmatpush1.bf16.msra.mxu0 %v3634
    %4962 = vmatprep.subr.bf16.mxu0 %v3645
    %4963 = vmatpush1.bf16.msra.mxu0 %v3644
    %4964 = vmatprep.subr.bf16.mxu0 %v3655
    %4965 = vmatpush1.bf16.msra.mxu0 %v3654
    %4966 = vmatprep.subr.bf16.mxu0 %v3665
    %4967 = vmatpush1.bf16.msra.mxu0 %v3664
    %4968 = vmatprep.subr.bf16.mxu0 %v3675
    %4969 = vmatpush1.bf16.msra.mxu0 %v3674
    %4970 = vmatprep.subr.bf16.mxu0 %v3685
    %4971 = vmatpush1.bf16.msra.mxu0 %v3684
    %4972 = vmatprep.subr.bf16.mxu0 %v3695
    %4973 = vmatpush1.bf16.msra.mxu0 %v3694
    %4974 = vmatprep.subr.bf16.mxu0 %v3705
    %4975 = vmatpush1.bf16.msra.mxu0 %v3704
    %4976 = vmatprep.subr.bf16.mxu0 %v3715
    %4977 = vmatpush1.bf16.msra.mxu0 %v3714
    %4978 = vmatprep.subr.bf16.mxu0 %v3725
    %4979 = vmatpush1.bf16.msra.mxu0 %v3724
    %4980 = vmatprep.subr.bf16.mxu0 %v3735
    %4981 = vmatpush1.bf16.msra.mxu0 %v3734
    %4982 = vmatprep.mubr.bf16.mxu0 %v697
    %4983 = vmatmul.mubr.bf16.gmra.mrb[0].mxu0 %v696
    %v4984 = vpop.f32.mrb[0].mxu0
    %v4985 = vadd.f32 %v4944, %v4984
    %v4986 = vpop.f32.mrb[0].mxu0
    %v4987 = vadd.f32 %v4946, %v4986
    %v4988 = vpop.f32.mrb[0].mxu0
    %v4989 = vpop.f32.mrb[0].mxu0
    %4990 = vdwg.mxu0
    %4991 = vmatprep.subr.bf16.mxu0 %v3745
    %4992 = vmatpush1.bf16.msra.mxu0 %v3744
    %4993 = vmatprep.subr.bf16.mxu0 %v3755
    %4994 = vmatpush1.bf16.msra.mxu0 %v3754
    %4995 = vmatprep.subr.bf16.mxu0 %v3765
    %4996 = vmatpush1.bf16.msra.mxu0 %v3764
    %4997 = vmatprep.subr.bf16.mxu0 %v3775
    %4998 = vmatpush1.bf16.msra.mxu0 %v3774
    %4999 = vmatprep.subr.bf16.mxu0 %v3785
    %5000 = vmatpush1.bf16.msra.mxu0 %v3784
    %5001 = vmatprep.subr.bf16.mxu0 %v3795
    %5002 = vmatpush1.bf16.msra.mxu0 %v3794
    %5003 = vmatprep.subr.bf16.mxu0 %v3805
    %5004 = vmatpush1.bf16.msra.mxu0 %v3804
    %5005 = vmatprep.subr.bf16.mxu0 %v3815
    %5006 = vmatpush1.bf16.msra.mxu0 %v3814
    %5007 = vmatprep.subr.bf16.mxu0 %v3825
    %5008 = vmatpush1.bf16.msra.mxu0 %v3824
    %5009 = vmatprep.subr.bf16.mxu0 %v3835
    %5010 = vmatpush1.bf16.msra.mxu0 %v3834
    %5011 = vmatprep.subr.bf16.mxu0 %v3845
    %5012 = vmatpush1.bf16.msra.mxu0 %v3844
    %5013 = vmatprep.subr.bf16.mxu0 %v3855
    %5014 = vmatpush1.bf16.msra.mxu0 %v3854
    %5015 = vmatprep.subr.bf16.mxu0 %v3865
    %5016 = vmatpush1.bf16.msra.mxu0 %v3864
    %5017 = vmatprep.subr.bf16.mxu0 %v3875
    %5018 = vmatpush1.bf16.msra.mxu0 %v3874
    %5019 = vmatprep.subr.bf16.mxu0 %v3885
    %5020 = vmatpush1.bf16.msra.mxu0 %v3884
    %5021 = vmatprep.subr.bf16.mxu0 %v3895
    %5022 = vmatpush1.bf16.msra.mxu0 %v3894
    %5023 = vmatprep.mubr.bf16.mxu0 %v699
    %5024 = vmatmul.mubr.bf16.gmra.mrb[0].mxu0 %v698
    %v5025 = vpop.f32.mrb[0].mxu0
    %v5026 = vadd.f32 %v4985, %v5025
    %v5027 = vpop.f32.mrb[0].mxu0
    %v5028 = vadd.f32 %v4987, %v5027
    %v5029 = vpop.f32.mrb[0].mxu0
    %v5030 = vpop.f32.mrb[0].mxu0
    %5031 = vdwg.mxu0
    %5032 = vmatprep.subr.bf16.mxu0 %v3267
    %5033 = vmatpush1.bf16.msra.mxu0 %v3266
    %5034 = vmatprep.subr.bf16.mxu0 %v3277
    %5035 = vmatpush1.bf16.msra.mxu0 %v3276
    %5036 = vmatprep.subr.bf16.mxu0 %v3287
    %5037 = vmatpush1.bf16.msra.mxu0 %v3286
    %5038 = vmatprep.subr.bf16.mxu0 %v3297
    %5039 = vmatpush1.bf16.msra.mxu0 %v3296
    %5040 = vmatprep.subr.bf16.mxu0 %v3307
    %5041 = vmatpush1.bf16.msra.mxu0 %v3306
    %5042 = vmatprep.subr.bf16.mxu0 %v3317
    %5043 = vmatpush1.bf16.msra.mxu0 %v3316
    %5044 = vmatprep.subr.bf16.mxu0 %v3327
    %5045 = vmatpush1.bf16.msra.mxu0 %v3326
    %5046 = vmatprep.subr.bf16.mxu0 %v3337
    %5047 = vmatpush1.bf16.msra.mxu0 %v3336
    %5048 = vmatprep.subr.bf16.mxu0 %v3347
    %5049 = vmatpush1.bf16.msra.mxu0 %v3346
    %5050 = vmatprep.subr.bf16.mxu0 %v3357
    %5051 = vmatpush1.bf16.msra.mxu0 %v3356
    %5052 = vmatprep.subr.bf16.mxu0 %v3367
    %5053 = vmatpush1.bf16.msra.mxu0 %v3366
    %5054 = vmatprep.subr.bf16.mxu0 %v3377
    %5055 = vmatpush1.bf16.msra.mxu0 %v3376
    %5056 = vmatprep.subr.bf16.mxu0 %v3387
    %5057 = vmatpush1.bf16.msra.mxu0 %v3386
    %5058 = vmatprep.subr.bf16.mxu0 %v3397
    %5059 = vmatpush1.bf16.msra.mxu0 %v3396
    %5060 = vmatprep.subr.bf16.mxu0 %v3407
    %5061 = vmatpush1.bf16.msra.mxu0 %v3406
    %5062 = vmatprep.subr.bf16.mxu0 %v3417
    %5063 = vmatpush1.bf16.msra.mxu0 %v3416
    %5064 = vmatprep.mubr.bf16.mxu0 %v693
    %5065 = vmatmul.mubr.bf16.gmra.mrb[0].mxu0 %v692
    %v5066 = vpop.f32.mrb[0].mxu0
    %v5067 = vadd.f32 0.0, %v5066
    %v5068 = vpop.f32.mrb[0].mxu0
    %v5069 = vadd.f32 0.0, %v5068
    %v5070 = vpop.f32.mrb[0].mxu0
    %v5071 = vpop.f32.mrb[0].mxu0
    %5072 = vdwg.mxu0
    %5073 = vmatprep.subr.bf16.mxu0 %v3427
    %5074 = vmatpush1.bf16.msra.mxu0 %v3426
    %5075 = vmatprep.subr.bf16.mxu0 %v3437
    %5076 = vmatpush1.bf16.msra.mxu0 %v3436
    %5077 = vmatprep.subr.bf16.mxu0 %v3447
    %5078 = vmatpush1.bf16.msra.mxu0 %v3446
    %5079 = vmatprep.subr.bf16.mxu0 %v3457
    %5080 = vmatpush1.bf16.msra.mxu0 %v3456
    %5081 = vmatprep.subr.bf16.mxu0 %v3467
    %5082 = vmatpush1.bf16.msra.mxu0 %v3466
    %5083 = vmatprep.subr.bf16.mxu0 %v3477
    %5084 = vmatpush1.bf16.msra.mxu0 %v3476
    %5085 = vmatprep.subr.bf16.mxu0 %v3487
    %5086 = vmatpush1.bf16.msra.mxu0 %v3486
    %5087 = vmatprep.subr.bf16.mxu0 %v3497
    %5088 = vmatpush1.bf16.msra.mxu0 %v3496
    %5089 = vmatprep.subr.bf16.mxu0 %v3507
    %5090 = vmatpush1.bf16.msra.mxu0 %v3506
    %5091 = vmatprep.subr.bf16.mxu0 %v3517
    %5092 = vmatpush1.bf16.msra.mxu0 %v3516
    %5093 = vmatprep.subr.bf16.mxu0 %v3527
    %5094 = vmatpush1.bf16.msra.mxu0 %v3526
    %5095 = vmatprep.subr.bf16.mxu0 %v3537
    %5096 = vmatpush1.bf16.msra.mxu0 %v3536
    %5097 = vmatprep.subr.bf16.mxu0 %v3547
    %5098 = vmatpush1.bf16.msra.mxu0 %v3546
    %5099 = vmatprep.subr.bf16.mxu0 %v3557
    %5100 = vmatpush1.bf16.msra.mxu0 %v3556
    %5101 = vmatprep.subr.bf16.mxu0 %v3567
    %5102 = vmatpush1.bf16.msra.mxu0 %v3566
    %5103 = vmatprep.subr.bf16.mxu0 %v3577
    %5104 = vmatpush1.bf16.msra.mxu0 %v3576
    %5105 = vmatprep.mubr.bf16.mxu0 %v695
    %5106 = vmatmul.mubr.bf16.gmra.mrb[0].mxu0 %v694
    %v5107 = vpop.f32.mrb[0].mxu0
    %v5108 = vadd.f32 %v5067, %v5107
    %v5109 = vpop.f32.mrb[0].mxu0
    %v5110 = vadd.f32 %v5069, %v5109
    %v5111 = vpop.f32.mrb[0].mxu0
    %v5112 = vpop.f32.mrb[0].mxu0
    %5113 = vdwg.mxu0
    %5114 = vmatprep.subr.bf16.mxu0 %v3587
    %5115 = vmatpush1.bf16.msra.mxu0 %v3586
    %5116 = vmatprep.subr.bf16.mxu0 %v3597
    %5117 = vmatpush1.bf16.msra.mxu0 %v3596
    %5118 = vmatprep.subr.bf16.mxu0 %v3607
    %5119 = vmatpush1.bf16.msra.mxu0 %v3606
    %5120 = vmatprep.subr.bf16.mxu0 %v3617
    %5121 = vmatpush1.bf16.msra.mxu0 %v3616
    %5122 = vmatprep.subr.bf16.mxu0 %v3627
    %5123 = vmatpush1.bf16.msra.mxu0 %v3626
    %5124 = vmatprep.subr.bf16.mxu0 %v3637
    %5125 = vmatpush1.bf16.msra.mxu0 %v3636
    %5126 = vmatprep.subr.bf16.mxu0 %v3647
    %5127 = vmatpush1.bf16.msra.mxu0 %v3646
    %5128 = vmatprep.subr.bf16.mxu0 %v3657
    %5129 = vmatpush1.bf16.msra.mxu0 %v3656
    %5130 = vmatprep.subr.bf16.mxu0 %v3667
    %5131 = vmatpush1.bf16.msra.mxu0 %v3666
    %5132 = vmatprep.subr.bf16.mxu0 %v3677
    %5133 = vmatpush1.bf16.msra.mxu0 %v3676
    %5134 = vmatprep.subr.bf16.mxu0 %v3687
    %5135 = vmatpush1.bf16.msra.mxu0 %v3686
    %5136 = vmatprep.subr.bf16.mxu0 %v3697
    %5137 = vmatpush1.bf16.msra.mxu0 %v3696
    %5138 = vmatprep.subr.bf16.mxu0 %v3707
    %5139 = vmatpush1.bf16.msra.mxu0 %v3706
    %5140 = vmatprep.subr.bf16.mxu0 %v3717
    %5141 = vmatpush1.bf16.msra.mxu0 %v3716
    %5142 = vmatprep.subr.bf16.mxu0 %v3727
    %5143 = vmatpush1.bf16.msra.mxu0 %v3726
    %5144 = vmatprep.subr.bf16.mxu0 %v3737
    %5145 = vmatpush1.bf16.msra.mxu0 %v3736
    %5146 = vmatprep.mubr.bf16.mxu0 %v697
    %5147 = vmatmul.mubr.bf16.gmra.mrb[0].mxu0 %v696
    %v5148 = vpop.f32.mrb[0].mxu0
    %v5149 = vadd.f32 %v5108, %v5148
    %v5150 = vpop.f32.mrb[0].mxu0
    %v5151 = vadd.f32 %v5110, %v5150
    %v5152 = vpop.f32.mrb[0].mxu0
    %v5153 = vpop.f32.mrb[0].mxu0
    %5154 = vdwg.mxu0
    %5155 = vmatprep.subr.bf16.mxu0 %v3747
    %5156 = vmatpush1.bf16.msra.mxu0 %v3746
    %5157 = vmatprep.subr.bf16.mxu0 %v3757
    %5158 = vmatpush1.bf16.msra.mxu0 %v3756
    %5159 = vmatprep.subr.bf16.mxu0 %v3767
    %5160 = vmatpush1.bf16.msra.mxu0 %v3766
    %5161 = vmatprep.subr.bf16.mxu0 %v3777
    %5162 = vmatpush1.bf16.msra.mxu0 %v3776
    %5163 = vmatprep.subr.bf16.mxu0 %v3787
    %5164 = vmatpush1.bf16.msra.mxu0 %v3786
    %5165 = vmatprep.subr.bf16.mxu0 %v3797
    %5166 = vmatpush1.bf16.msra.mxu0 %v3796
    %5167 = vmatprep.subr.bf16.mxu0 %v3807
    %5168 = vmatpush1.bf16.msra.mxu0 %v3806
    %5169 = vmatprep.subr.bf16.mxu0 %v3817
    %5170 = vmatpush1.bf16.msra.mxu0 %v3816
    %5171 = vmatprep.subr.bf16.mxu0 %v3827
    %5172 = vmatpush1.bf16.msra.mxu0 %v3826
    %5173 = vmatprep.subr.bf16.mxu0 %v3837
    %5174 = vmatpush1.bf16.msra.mxu0 %v3836
    %5175 = vmatprep.subr.bf16.mxu0 %v3847
    %5176 = vmatpush1.bf16.msra.mxu0 %v3846
    %5177 = vmatprep.subr.bf16.mxu0 %v3857
    %5178 = vmatpush1.bf16.msra.mxu0 %v3856
    %5179 = vmatprep.subr.bf16.mxu0 %v3867
    %5180 = vmatpush1.bf16.msra.mxu0 %v3866
    %5181 = vmatprep.subr.bf16.mxu0 %v3877
    %5182 = vmatpush1.bf16.msra.mxu0 %v3876
    %5183 = vmatprep.subr.bf16.mxu0 %v3887
    %5184 = vmatpush1.bf16.msra.mxu0 %v3886
    %5185 = vmatprep.subr.bf16.mxu0 %v3897
    %5186 = vmatpush1.bf16.msra.mxu0 %v3896
    %5187 = vmatprep.mubr.bf16.mxu0 %v699
    %5188 = vmatmul.mubr.bf16.gmra.mrb[0].mxu0 %v698
    %v5189 = vpop.f32.mrb[0].mxu0
    %v5190 = vadd.f32 %v5149, %v5189
    %v5191 = vpop.f32.mrb[0].mxu0
    %v5192 = vadd.f32 %v5151, %v5191
    %v5193 = vpop.f32.mrb[0].mxu0
    %v5194 = vpop.f32.mrb[0].mxu0
    %5195 = vdwg.mxu0
    %5196 = vmatprep.subr.bf16.mxu0 %v3269
    %5197 = vmatpush1.bf16.msra.mxu0 %v3268
    %5198 = vmatprep.subr.bf16.mxu0 %v3279
    %5199 = vmatpush1.bf16.msra.mxu0 %v3278
    %5200 = vmatprep.subr.bf16.mxu0 %v3289
    %5201 = vmatpush1.bf16.msra.mxu0 %v3288
    %5202 = vmatprep.subr.bf16.mxu0 %v3299
    %5203 = vmatpush1.bf16.msra.mxu0 %v3298
    %5204 = vmatprep.subr.bf16.mxu0 %v3309
    %5205 = vmatpush1.bf16.msra.mxu0 %v3308
    %5206 = vmatprep.subr.bf16.mxu0 %v3319
    %5207 = vmatpush1.bf16.msra.mxu0 %v3318
    %5208 = vmatprep.subr.bf16.mxu0 %v3329
    %5209 = vmatpush1.bf16.msra.mxu0 %v3328
    %5210 = vmatprep.subr.bf16.mxu0 %v3339
    %5211 = vmatpush1.bf16.msra.mxu0 %v3338
    %5212 = vmatprep.subr.bf16.mxu0 %v3349
    %5213 = vmatpush1.bf16.msra.mxu0 %v3348
    %5214 = vmatprep.subr.bf16.mxu0 %v3359
    %5215 = vmatpush1.bf16.msra.mxu0 %v3358
    %5216 = vmatprep.subr.bf16.mxu0 %v3369
    %5217 = vmatpush1.bf16.msra.mxu0 %v3368
    %5218 = vmatprep.subr.bf16.mxu0 %v3379
    %5219 = vmatpush1.bf16.msra.mxu0 %v3378
    %5220 = vmatprep.subr.bf16.mxu0 %v3389
    %5221 = vmatpush1.bf16.msra.mxu0 %v3388
    %5222 = vmatprep.subr.bf16.mxu0 %v3399
    %5223 = vmatpush1.bf16.msra.mxu0 %v3398
    %5224 = vmatprep.subr.bf16.mxu0 %v3409
    %5225 = vmatpush1.bf16.msra.mxu0 %v3408
    %5226 = vmatprep.subr.bf16.mxu0 %v3419
    %5227 = vmatpush1.bf16.msra.mxu0 %v3418
    %5228 = vmatprep.mubr.bf16.mxu0 %v693
    %5229 = vmatmul.mubr.bf16.gmra.mrb[0].mxu0 %v692
    %v5230 = vpop.f32.mrb[0].mxu0
    %v5231 = vadd.f32 0.0, %v5230
    %v5232 = vpop.f32.mrb[0].mxu0
    %v5233 = vadd.f32 0.0, %v5232
    %v5234 = vpop.f32.mrb[0].mxu0
    %v5235 = vpop.f32.mrb[0].mxu0
    %5236 = vdwg.mxu0
    %5237 = vmatprep.subr.bf16.mxu0 %v3429
    %5238 = vmatpush1.bf16.msra.mxu0 %v3428
    %5239 = vmatprep.subr.bf16.mxu0 %v3439
    %5240 = vmatpush1.bf16.msra.mxu0 %v3438
    %5241 = vmatprep.subr.bf16.mxu0 %v3449
    %5242 = vmatpush1.bf16.msra.mxu0 %v3448
    %5243 = vmatprep.subr.bf16.mxu0 %v3459
    %5244 = vmatpush1.bf16.msra.mxu0 %v3458
    %5245 = vmatprep.subr.bf16.mxu0 %v3469
    %5246 = vmatpush1.bf16.msra.mxu0 %v3468
    %5247 = vmatprep.subr.bf16.mxu0 %v3479
    %5248 = vmatpush1.bf16.msra.mxu0 %v3478
    %5249 = vmatprep.subr.bf16.mxu0 %v3489
    %5250 = vmatpush1.bf16.msra.mxu0 %v3488
    %5251 = vmatprep.subr.bf16.mxu0 %v3499
    %5252 = vmatpush1.bf16.msra.mxu0 %v3498
    %5253 = vmatprep.subr.bf16.mxu0 %v3509
    %5254 = vmatpush1.bf16.msra.mxu0 %v3508
    %5255 = vmatprep.subr.bf16.mxu0 %v3519
    %5256 = vmatpush1.bf16.msra.mxu0 %v3518
    %5257 = vmatprep.subr.bf16.mxu0 %v3529
    %5258 = vmatpush1.bf16.msra.mxu0 %v3528
    %5259 = vmatprep.subr.bf16.mxu0 %v3539
    %5260 = vmatpush1.bf16.msra.mxu0 %v3538
    %5261 = vmatprep.subr.bf16.mxu0 %v3549
    %5262 = vmatpush1.bf16.msra.mxu0 %v3548
    %5263 = vmatprep.subr.bf16.mxu0 %v3559
    %5264 = vmatpush1.bf16.msra.mxu0 %v3558
    %5265 = vmatprep.subr.bf16.mxu0 %v3569
    %5266 = vmatpush1.bf16.msra.mxu0 %v3568
    %5267 = vmatprep.subr.bf16.mxu0 %v3579
    %5268 = vmatpush1.bf16.msra.mxu0 %v3578
    %5269 = vmatprep.mubr.bf16.mxu0 %v695
    %5270 = vmatmul.mubr.bf16.gmra.mrb[0].mxu0 %v694
    %v5271 = vpop.f32.mrb[0].mxu0
    %v5272 = vadd.f32 %v5231, %v5271
    %v5273 = vpop.f32.mrb[0].mxu0
    %v5274 = vadd.f32 %v5233, %v5273
    %v5275 = vpop.f32.mrb[0].mxu0
    %v5276 = vpop.f32.mrb[0].mxu0
    %5277 = vdwg.mxu0
    %5278 = vmatprep.subr.bf16.mxu0 %v3589
    %5279 = vmatpush1.bf16.msra.mxu0 %v3588
    %5280 = vmatprep.subr.bf16.mxu0 %v3599
    %5281 = vmatpush1.bf16.msra.mxu0 %v3598
    %5282 = vmatprep.subr.bf16.mxu0 %v3609
    %5283 = vmatpush1.bf16.msra.mxu0 %v3608
    %5284 = vmatprep.subr.bf16.mxu0 %v3619
    %5285 = vmatpush1.bf16.msra.mxu0 %v3618
    %5286 = vmatprep.subr.bf16.mxu0 %v3629
    %5287 = vmatpush1.bf16.msra.mxu0 %v3628
    %5288 = vmatprep.subr.bf16.mxu0 %v3639
    %5289 = vmatpush1.bf16.msra.mxu0 %v3638
    %5290 = vmatprep.subr.bf16.mxu0 %v3649
    %5291 = vmatpush1.bf16.msra.mxu0 %v3648
    %5292 = vmatprep.subr.bf16.mxu0 %v3659
    %5293 = vmatpush1.bf16.msra.mxu0 %v3658
    %5294 = vmatprep.subr.bf16.mxu0 %v3669
    %5295 = vmatpush1.bf16.msra.mxu0 %v3668
    %5296 = vmatprep.subr.bf16.mxu0 %v3679
    %5297 = vmatpush1.bf16.msra.mxu0 %v3678
    %5298 = vmatprep.subr.bf16.mxu0 %v3689
    %5299 = vmatpush1.bf16.msra.mxu0 %v3688
    %5300 = vmatprep.subr.bf16.mxu0 %v3699
    %5301 = vmatpush1.bf16.msra.mxu0 %v3698
    %5302 = vmatprep.subr.bf16.mxu0 %v3709
    %5303 = vmatpush1.bf16.msra.mxu0 %v3708
    %5304 = vmatprep.subr.bf16.mxu0 %v3719
    %5305 = vmatpush1.bf16.msra.mxu0 %v3718
    %5306 = vmatprep.subr.bf16.mxu0 %v3729
    %5307 = vmatpush1.bf16.msra.mxu0 %v3728
    %5308 = vmatprep.subr.bf16.mxu0 %v3739
    %5309 = vmatpush1.bf16.msra.mxu0 %v3738
    %5310 = vmatprep.mubr.bf16.mxu0 %v697
    %5311 = vmatmul.mubr.bf16.gmra.mrb[0].mxu0 %v696
    %v5312 = vpop.f32.mrb[0].mxu0
    %v5313 = vadd.f32 %v5272, %v5312
    %v5314 = vpop.f32.mrb[0].mxu0
    %v5315 = vadd.f32 %v5274, %v5314
    %v5316 = vpop.f32.mrb[0].mxu0
    %v5317 = vpop.f32.mrb[0].mxu0
    %5318 = vdwg.mxu0
    %5319 = vmatprep.subr.bf16.mxu0 %v3749
    %5320 = vmatpush1.bf16.msra.mxu0 %v3748
    %5321 = vmatprep.subr.bf16.mxu0 %v3759
    %5322 = vmatpush1.bf16.msra.mxu0 %v3758
    %5323 = vmatprep.subr.bf16.mxu0 %v3769
    %5324 = vmatpush1.bf16.msra.mxu0 %v3768
    %5325 = vmatprep.subr.bf16.mxu0 %v3779
    %5326 = vmatpush1.bf16.msra.mxu0 %v3778
    %5327 = vmatprep.subr.bf16.mxu0 %v3789
    %5328 = vmatpush1.bf16.msra.mxu0 %v3788
    %5329 = vmatprep.subr.bf16.mxu0 %v3799
    %5330 = vmatpush1.bf16.msra.mxu0 %v3798
    %5331 = vmatprep.subr.bf16.mxu0 %v3809
    %5332 = vmatpush1.bf16.msra.mxu0 %v3808
    %5333 = vmatprep.subr.bf16.mxu0 %v3819
    %5334 = vmatpush1.bf16.msra.mxu0 %v3818
    %5335 = vmatprep.subr.bf16.mxu0 %v3829
    %5336 = vmatpush1.bf16.msra.mxu0 %v3828
    %5337 = vmatprep.subr.bf16.mxu0 %v3839
    %5338 = vmatpush1.bf16.msra.mxu0 %v3838
    %5339 = vmatprep.subr.bf16.mxu0 %v3849
    %5340 = vmatpush1.bf16.msra.mxu0 %v3848
    %5341 = vmatprep.subr.bf16.mxu0 %v3859
    %5342 = vmatpush1.bf16.msra.mxu0 %v3858
    %5343 = vmatprep.subr.bf16.mxu0 %v3869
    %5344 = vmatpush1.bf16.msra.mxu0 %v3868
    %5345 = vmatprep.subr.bf16.mxu0 %v3879
    %5346 = vmatpush1.bf16.msra.mxu0 %v3878
    %5347 = vmatprep.subr.bf16.mxu0 %v3889
    %5348 = vmatpush1.bf16.msra.mxu0 %v3888
    %5349 = vmatprep.subr.bf16.mxu0 %v3899
    %5350 = vmatpush1.bf16.msra.mxu0 %v3898
    %5351 = vmatprep.mubr.bf16.mxu0 %v699
    %5352 = vmatmul.mubr.bf16.gmra.mrb[0].mxu0 %v698
    %v5353 = vpop.f32.mrb[0].mxu0
    %v5354 = vadd.f32 %v5313, %v5353
    %v5355 = vpop.f32.mrb[0].mxu0
    %v5356 = vadd.f32 %v5315, %v5355
    %v5357 = vpop.f32.mrb[0].mxu0
    %v5358 = vpop.f32.mrb[0].mxu0
    %5359 = vdwg.mxu0
    %v5520 = vunpack.c.l.b16 %v532
    %v5521 = vunpack.c.h.b16 %v532
    %v5522 = vunpack.c.l.b16 %v533
    %v5523 = vunpack.c.h.b16 %v533
    %v5524 = vunpack.c.l.b16 %v534
    %v5525 = vunpack.c.h.b16 %v534
    %v5526 = vunpack.c.l.b16 %v535
    %v5527 = vunpack.c.h.b16 %v535
    %v5528 = vunpack.c.l.b16 %v536
    %v5529 = vunpack.c.h.b16 %v536
    %v5530 = vunpack.c.l.b16 %v537
    %v5531 = vunpack.c.h.b16 %v537
    %v5532 = vunpack.c.l.b16 %v538
    %v5533 = vunpack.c.h.b16 %v538
    %v5534 = vunpack.c.l.b16 %v539
    %v5535 = vunpack.c.h.b16 %v539
    %v5536 = vunpack.c.l.b16 %v540
    %v5537 = vunpack.c.h.b16 %v540
    %v5538 = vunpack.c.l.b16 %v541
    %v5539 = vunpack.c.h.b16 %v541
    %v5540 = vunpack.c.l.b16 %v542
    %v5541 = vunpack.c.h.b16 %v542
    %v5542 = vunpack.c.l.b16 %v543
    %v5543 = vunpack.c.h.b16 %v543
    %v5544 = vunpack.c.l.b16 %v544
    %v5545 = vunpack.c.h.b16 %v544
    %v5546 = vunpack.c.l.b16 %v545
    %v5547 = vunpack.c.h.b16 %v545
    %v5548 = vunpack.c.l.b16 %v546
    %v5549 = vunpack.c.h.b16 %v546
    %v5550 = vunpack.c.l.b16 %v547
    %v5551 = vunpack.c.h.b16 %v547
    %v5552 = vunpack.c.l.b16 %v548
    %v5553 = vunpack.c.h.b16 %v548
    %v5554 = vunpack.c.l.b16 %v549
    %v5555 = vunpack.c.h.b16 %v549
    %v5556 = vunpack.c.l.b16 %v550
    %v5557 = vunpack.c.h.b16 %v550
    %v5558 = vunpack.c.l.b16 %v551
    %v5559 = vunpack.c.h.b16 %v551
    %v5560 = vunpack.c.l.b16 %v552
    %v5561 = vunpack.c.h.b16 %v552
    %v5562 = vunpack.c.l.b16 %v553
    %v5563 = vunpack.c.h.b16 %v553
    %v5564 = vunpack.c.l.b16 %v554
    %v5565 = vunpack.c.h.b16 %v554
    %v5566 = vunpack.c.l.b16 %v555
    %v5567 = vunpack.c.h.b16 %v555
    %v5568 = vunpack.c.l.b16 %v556
    %v5569 = vunpack.c.h.b16 %v556
    %v5570 = vunpack.c.l.b16 %v557
    %v5571 = vunpack.c.h.b16 %v557
    %v5572 = vunpack.c.l.b16 %v558
    %v5573 = vunpack.c.h.b16 %v558
    %v5574 = vunpack.c.l.b16 %v559
    %v5575 = vunpack.c.h.b16 %v559
    %v5576 = vunpack.c.l.b16 %v560
    %v5577 = vunpack.c.h.b16 %v560
    %v5578 = vunpack.c.l.b16 %v561
    %v5579 = vunpack.c.h.b16 %v561
    %v5580 = vunpack.c.l.b16 %v562
    %v5581 = vunpack.c.h.b16 %v562
    %v5582 = vunpack.c.l.b16 %v563
    %v5583 = vunpack.c.h.b16 %v563
    %v5584 = vunpack.c.l.b16 %v564
    %v5585 = vunpack.c.h.b16 %v564
    %v5586 = vunpack.c.l.b16 %v565
    %v5587 = vunpack.c.h.b16 %v565
    %v5588 = vunpack.c.l.b16 %v566
    %v5589 = vunpack.c.h.b16 %v566
    %v5590 = vunpack.c.l.b16 %v567
    %v5591 = vunpack.c.h.b16 %v567
    %v5592 = vunpack.c.l.b16 %v568
    %v5593 = vunpack.c.h.b16 %v568
    %v5594 = vunpack.c.l.b16 %v569
    %v5595 = vunpack.c.h.b16 %v569
    %v5596 = vunpack.c.l.b16 %v570
    %v5597 = vunpack.c.h.b16 %v570
    %v5598 = vunpack.c.l.b16 %v571
    %v5599 = vunpack.c.h.b16 %v571
    %v5600 = vunpack.c.l.b16 %v572
    %v5601 = vunpack.c.h.b16 %v572
    %v5602 = vunpack.c.l.b16 %v573
    %v5603 = vunpack.c.h.b16 %v573
    %v5604 = vunpack.c.l.b16 %v574
    %v5605 = vunpack.c.h.b16 %v574
    %v5606 = vunpack.c.l.b16 %v575
    %v5607 = vunpack.c.h.b16 %v575
    %v5608 = vunpack.c.l.b16 %v576
    %v5609 = vunpack.c.h.b16 %v576
    %v5610 = vunpack.c.l.b16 %v577
    %v5611 = vunpack.c.h.b16 %v577
    %v5612 = vunpack.c.l.b16 %v578
    %v5613 = vunpack.c.h.b16 %v578
    %v5614 = vunpack.c.l.b16 %v579
    %v5615 = vunpack.c.h.b16 %v579
    %v5616 = vunpack.c.l.b16 %v580
    %v5617 = vunpack.c.h.b16 %v580
    %v5618 = vunpack.c.l.b16 %v581
    %v5619 = vunpack.c.h.b16 %v581
    %v5620 = vunpack.c.l.b16 %v582
    %v5621 = vunpack.c.h.b16 %v582
    %v5622 = vunpack.c.l.b16 %v583
    %v5623 = vunpack.c.h.b16 %v583
    %v5624 = vunpack.c.l.b16 %v584
    %v5625 = vunpack.c.h.b16 %v584
    %v5626 = vunpack.c.l.b16 %v585
    %v5627 = vunpack.c.h.b16 %v585
    %v5628 = vunpack.c.l.b16 %v586
    %v5629 = vunpack.c.h.b16 %v586
    %v5630 = vunpack.c.l.b16 %v587
    %v5631 = vunpack.c.h.b16 %v587
    %v5632 = vunpack.c.l.b16 %v588
    %v5633 = vunpack.c.h.b16 %v588
    %v5634 = vunpack.c.l.b16 %v589
    %v5635 = vunpack.c.h.b16 %v589
    %v5636 = vunpack.c.l.b16 %v590
    %v5637 = vunpack.c.h.b16 %v590
    %v5638 = vunpack.c.l.b16 %v591
    %v5639 = vunpack.c.h.b16 %v591
    %v5640 = vunpack.c.l.b16 %v592
    %v5641 = vunpack.c.h.b16 %v592
    %v5642 = vunpack.c.l.b16 %v593
    %v5643 = vunpack.c.h.b16 %v593
    %v5644 = vunpack.c.l.b16 %v594
    %v5645 = vunpack.c.h.b16 %v594
    %v5646 = vunpack.c.l.b16 %v595
    %v5647 = vunpack.c.h.b16 %v595
    %v5648 = vunpack.c.l.b16 %v596
    %v5649 = vunpack.c.h.b16 %v596
    %v5650 = vunpack.c.l.b16 %v597
    %v5651 = vunpack.c.h.b16 %v597
    %v5652 = vunpack.c.l.b16 %v598
    %v5653 = vunpack.c.h.b16 %v598
    %v5654 = vunpack.c.l.b16 %v599
    %v5655 = vunpack.c.h.b16 %v599
    %v5656 = vunpack.c.l.b16 %v600
    %v5657 = vunpack.c.h.b16 %v600
    %v5658 = vunpack.c.l.b16 %v601
    %v5659 = vunpack.c.h.b16 %v601
    %v5660 = vunpack.c.l.b16 %v602
    %v5661 = vunpack.c.h.b16 %v602
    %v5662 = vunpack.c.l.b16 %v603
    %v5663 = vunpack.c.h.b16 %v603
    %v5664 = vunpack.c.l.b16 %v604
    %v5665 = vunpack.c.h.b16 %v604
    %v5666 = vunpack.c.l.b16 %v605
    %v5667 = vunpack.c.h.b16 %v605
    %v5668 = vunpack.c.l.b16 %v606
    %v5669 = vunpack.c.h.b16 %v606
    %v5670 = vunpack.c.l.b16 %v607
    %v5671 = vunpack.c.h.b16 %v607
    %v5672 = vunpack.c.l.b16 %v608
    %v5673 = vunpack.c.h.b16 %v608
    %v5674 = vunpack.c.l.b16 %v609
    %v5675 = vunpack.c.h.b16 %v609
    %v5676 = vunpack.c.l.b16 %v610
    %v5677 = vunpack.c.h.b16 %v610
    %v5678 = vunpack.c.l.b16 %v611
    %v5679 = vunpack.c.h.b16 %v611
    %v5680 = vunpack.c.l.b16 %v612
    %v5681 = vunpack.c.h.b16 %v612
    %v5682 = vunpack.c.l.b16 %v613
    %v5683 = vunpack.c.h.b16 %v613
    %v5684 = vunpack.c.l.b16 %v614
    %v5685 = vunpack.c.h.b16 %v614
    %v5686 = vunpack.c.l.b16 %v615
    %v5687 = vunpack.c.h.b16 %v615
    %v5688 = vunpack.c.l.b16 %v616
    %v5689 = vunpack.c.h.b16 %v616
    %v5690 = vunpack.c.l.b16 %v617
    %v5691 = vunpack.c.h.b16 %v617
    %v5692 = vunpack.c.l.b16 %v618
    %v5693 = vunpack.c.h.b16 %v618
    %v5694 = vunpack.c.l.b16 %v619
    %v5695 = vunpack.c.h.b16 %v619
    %v5696 = vunpack.c.l.b16 %v620
    %v5697 = vunpack.c.h.b16 %v620
    %v5698 = vunpack.c.l.b16 %v621
    %v5699 = vunpack.c.h.b16 %v621
    %v5700 = vunpack.c.l.b16 %v622
    %v5701 = vunpack.c.h.b16 %v622
    %v5702 = vunpack.c.l.b16 %v623
    %v5703 = vunpack.c.h.b16 %v623
    %v5704 = vunpack.c.l.b16 %v624
    %v5705 = vunpack.c.h.b16 %v624
    %v5706 = vunpack.c.l.b16 %v625
    %v5707 = vunpack.c.h.b16 %v625
    %v5708 = vunpack.c.l.b16 %v626
    %v5709 = vunpack.c.h.b16 %v626
    %v5710 = vunpack.c.l.b16 %v627
    %v5711 = vunpack.c.h.b16 %v627
    %v5712 = vunpack.c.l.b16 %v628
    %v5713 = vunpack.c.h.b16 %v628
    %v5714 = vunpack.c.l.b16 %v629
    %v5715 = vunpack.c.h.b16 %v629
    %v5716 = vunpack.c.l.b16 %v630
    %v5717 = vunpack.c.h.b16 %v630
    %v5718 = vunpack.c.l.b16 %v631
    %v5719 = vunpack.c.h.b16 %v631
    %v5720 = vunpack.c.l.b16 %v632
    %v5721 = vunpack.c.h.b16 %v632
    %v5722 = vunpack.c.l.b16 %v633
    %v5723 = vunpack.c.h.b16 %v633
    %v5724 = vunpack.c.l.b16 %v634
    %v5725 = vunpack.c.h.b16 %v634
    %v5726 = vunpack.c.l.b16 %v635
    %v5727 = vunpack.c.h.b16 %v635
    %v5728 = vunpack.c.l.b16 %v636
    %v5729 = vunpack.c.h.b16 %v636
    %v5730 = vunpack.c.l.b16 %v637
    %v5731 = vunpack.c.h.b16 %v637
    %v5732 = vunpack.c.l.b16 %v638
    %v5733 = vunpack.c.h.b16 %v638
    %v5734 = vunpack.c.l.b16 %v639
    %v5735 = vunpack.c.h.b16 %v639
    %v5736 = vunpack.c.l.b16 %v640
    %v5737 = vunpack.c.h.b16 %v640
    %v5738 = vunpack.c.l.b16 %v641
    %v5739 = vunpack.c.h.b16 %v641
    %v5740 = vunpack.c.l.b16 %v642
    %v5741 = vunpack.c.h.b16 %v642
    %v5742 = vunpack.c.l.b16 %v643
    %v5743 = vunpack.c.h.b16 %v643
    %v5744 = vunpack.c.l.b16 %v644
    %v5745 = vunpack.c.h.b16 %v644
    %v5746 = vunpack.c.l.b16 %v645
    %v5747 = vunpack.c.h.b16 %v645
    %v5748 = vunpack.c.l.b16 %v646
    %v5749 = vunpack.c.h.b16 %v646
    %v5750 = vunpack.c.l.b16 %v647
    %v5751 = vunpack.c.h.b16 %v647
    %v5752 = vunpack.c.l.b16 %v648
    %v5753 = vunpack.c.h.b16 %v648
    %v5754 = vunpack.c.l.b16 %v649
    %v5755 = vunpack.c.h.b16 %v649
    %v5756 = vunpack.c.l.b16 %v650
    %v5757 = vunpack.c.h.b16 %v650
    %v5758 = vunpack.c.l.b16 %v651
    %v5759 = vunpack.c.h.b16 %v651
    %v5760 = vunpack.c.l.b16 %v652
    %v5761 = vunpack.c.h.b16 %v652
    %v5762 = vunpack.c.l.b16 %v653
    %v5763 = vunpack.c.h.b16 %v653
    %v5764 = vunpack.c.l.b16 %v654
    %v5765 = vunpack.c.h.b16 %v654
    %v5766 = vunpack.c.l.b16 %v655
    %v5767 = vunpack.c.h.b16 %v655
    %v5768 = vunpack.c.l.b16 %v656
    %v5769 = vunpack.c.h.b16 %v656
    %v5770 = vunpack.c.l.b16 %v657
    %v5771 = vunpack.c.h.b16 %v657
    %v5772 = vunpack.c.l.b16 %v658
    %v5773 = vunpack.c.h.b16 %v658
    %v5774 = vunpack.c.l.b16 %v659
    %v5775 = vunpack.c.h.b16 %v659
    %v5776 = vunpack.c.l.b16 %v660
    %v5777 = vunpack.c.h.b16 %v660
    %v5778 = vunpack.c.l.b16 %v661
    %v5779 = vunpack.c.h.b16 %v661
    %v5780 = vunpack.c.l.b16 %v662
    %v5781 = vunpack.c.h.b16 %v662
    %v5782 = vunpack.c.l.b16 %v663
    %v5783 = vunpack.c.h.b16 %v663
    %v5784 = vunpack.c.l.b16 %v664
    %v5785 = vunpack.c.h.b16 %v664
    %v5786 = vunpack.c.l.b16 %v665
    %v5787 = vunpack.c.h.b16 %v665
    %v5788 = vunpack.c.l.b16 %v666
    %v5789 = vunpack.c.h.b16 %v666
    %v5790 = vunpack.c.l.b16 %v667
    %v5791 = vunpack.c.h.b16 %v667
    %v5792 = vunpack.c.l.b16 %v668
    %v5793 = vunpack.c.h.b16 %v668
    %v5794 = vunpack.c.l.b16 %v669
    %v5795 = vunpack.c.h.b16 %v669
    %v5796 = vunpack.c.l.b16 %v670
    %v5797 = vunpack.c.h.b16 %v670
    %v5798 = vunpack.c.l.b16 %v671
    %v5799 = vunpack.c.h.b16 %v671
    %v5800 = vunpack.c.l.b16 %v672
    %v5801 = vunpack.c.h.b16 %v672
    %v5802 = vunpack.c.l.b16 %v673
    %v5803 = vunpack.c.h.b16 %v673
    %v5804 = vunpack.c.l.b16 %v674
    %v5805 = vunpack.c.h.b16 %v674
    %v5806 = vunpack.c.l.b16 %v675
    %v5807 = vunpack.c.h.b16 %v675
    %v5808 = vunpack.c.l.b16 %v676
    %v5809 = vunpack.c.h.b16 %v676
    %v5810 = vunpack.c.l.b16 %v677
    %v5811 = vunpack.c.h.b16 %v677
    %v5812 = vunpack.c.l.b16 %v678
    %v5813 = vunpack.c.h.b16 %v678
    %v5814 = vunpack.c.l.b16 %v679
    %v5815 = vunpack.c.h.b16 %v679
    %v5816 = vunpack.c.l.b16 %v680
    %v5817 = vunpack.c.h.b16 %v680
    %v5818 = vunpack.c.l.b16 %v681
    %v5819 = vunpack.c.h.b16 %v681
    %v5820 = vunpack.c.l.b16 %v682
    %v5821 = vunpack.c.h.b16 %v682
    %v5822 = vunpack.c.l.b16 %v683
    %v5823 = vunpack.c.h.b16 %v683
    %v5824 = vunpack.c.l.b16 %v684
    %v5825 = vunpack.c.h.b16 %v684
    %v5826 = vunpack.c.l.b16 %v685
    %v5827 = vunpack.c.h.b16 %v685
    %v5828 = vunpack.c.l.b16 %v686
    %v5829 = vunpack.c.h.b16 %v686
    %v5830 = vunpack.c.l.b16 %v687
    %v5831 = vunpack.c.h.b16 %v687
    %v5832 = vunpack.c.l.b16 %v688
    %v5833 = vunpack.c.h.b16 %v688
    %v5834 = vunpack.c.l.b16 %v689
    %v5835 = vunpack.c.h.b16 %v689
    %v5836 = vunpack.c.l.b16 %v690
    %v5837 = vunpack.c.h.b16 %v690
    %v5838 = vunpack.c.l.b16 %v691
    %v5839 = vunpack.c.h.b16 %v691
    %v5840 = vpack.c.b16 %v5530, %v5520
    %v5841 = vpack.c.b16 %v5531, %v5521
    %v5842 = vpack.c.b16 %v5532, %v5522
    %v5843 = vpack.c.b16 %v5533, %v5523
    %v5844 = vpack.c.b16 %v5534, %v5524
    %v5845 = vpack.c.b16 %v5535, %v5525
    %v5846 = vpack.c.b16 %v5536, %v5526
    %v5847 = vpack.c.b16 %v5537, %v5527
    %v5848 = vpack.c.b16 %v5538, %v5528
    %v5849 = vpack.c.b16 %v5539, %v5529
    %v5850 = vpack.c.b16 %v5550, %v5540
    %v5851 = vpack.c.b16 %v5551, %v5541
    %v5852 = vpack.c.b16 %v5552, %v5542
    %v5853 = vpack.c.b16 %v5553, %v5543
    %v5854 = vpack.c.b16 %v5554, %v5544
    %v5855 = vpack.c.b16 %v5555, %v5545
    %v5856 = vpack.c.b16 %v5556, %v5546
    %v5857 = vpack.c.b16 %v5557, %v5547
    %v5858 = vpack.c.b16 %v5558, %v5548
    %v5859 = vpack.c.b16 %v5559, %v5549
    %v5860 = vpack.c.b16 %v5570, %v5560
    %v5861 = vpack.c.b16 %v5571, %v5561
    %v5862 = vpack.c.b16 %v5572, %v5562
    %v5863 = vpack.c.b16 %v5573, %v5563
    %v5864 = vpack.c.b16 %v5574, %v5564
    %v5865 = vpack.c.b16 %v5575, %v5565
    %v5866 = vpack.c.b16 %v5576, %v5566
    %v5867 = vpack.c.b16 %v5577, %v5567
    %v5868 = vpack.c.b16 %v5578, %v5568
    %v5869 = vpack.c.b16 %v5579, %v5569
    %v5870 = vpack.c.b16 %v5590, %v5580
    %v5871 = vpack.c.b16 %v5591, %v5581
    %v5872 = vpack.c.b16 %v5592, %v5582
    %v5873 = vpack.c.b16 %v5593, %v5583
    %v5874 = vpack.c.b16 %v5594, %v5584
    %v5875 = vpack.c.b16 %v5595, %v5585
    %v5876 = vpack.c.b16 %v5596, %v5586
    %v5877 = vpack.c.b16 %v5597, %v5587
    %v5878 = vpack.c.b16 %v5598, %v5588
    %v5879 = vpack.c.b16 %v5599, %v5589
    %v5880 = vpack.c.b16 %v5610, %v5600
    %v5881 = vpack.c.b16 %v5611, %v5601
    %v5882 = vpack.c.b16 %v5612, %v5602
    %v5883 = vpack.c.b16 %v5613, %v5603
    %v5884 = vpack.c.b16 %v5614, %v5604
    %v5885 = vpack.c.b16 %v5615, %v5605
    %v5886 = vpack.c.b16 %v5616, %v5606
    %v5887 = vpack.c.b16 %v5617, %v5607
    %v5888 = vpack.c.b16 %v5618, %v5608
    %v5889 = vpack.c.b16 %v5619, %v5609
    %v5890 = vpack.c.b16 %v5630, %v5620
    %v5891 = vpack.c.b16 %v5631, %v5621
    %v5892 = vpack.c.b16 %v5632, %v5622
    %v5893 = vpack.c.b16 %v5633, %v5623
    %v5894 = vpack.c.b16 %v5634, %v5624
    %v5895 = vpack.c.b16 %v5635, %v5625
    %v5896 = vpack.c.b16 %v5636, %v5626
    %v5897 = vpack.c.b16 %v5637, %v5627
    %v5898 = vpack.c.b16 %v5638, %v5628
    %v5899 = vpack.c.b16 %v5639, %v5629
    %v5900 = vpack.c.b16 %v5650, %v5640
    %v5901 = vpack.c.b16 %v5651, %v5641
    %v5902 = vpack.c.b16 %v5652, %v5642
    %v5903 = vpack.c.b16 %v5653, %v5643
    %v5904 = vpack.c.b16 %v5654, %v5644
    %v5905 = vpack.c.b16 %v5655, %v5645
    %v5906 = vpack.c.b16 %v5656, %v5646
    %v5907 = vpack.c.b16 %v5657, %v5647
    %v5908 = vpack.c.b16 %v5658, %v5648
    %v5909 = vpack.c.b16 %v5659, %v5649
    %v5910 = vpack.c.b16 %v5670, %v5660
    %v5911 = vpack.c.b16 %v5671, %v5661
    %v5912 = vpack.c.b16 %v5672, %v5662
    %v5913 = vpack.c.b16 %v5673, %v5663
    %v5914 = vpack.c.b16 %v5674, %v5664
    %v5915 = vpack.c.b16 %v5675, %v5665
    %v5916 = vpack.c.b16 %v5676, %v5666
    %v5917 = vpack.c.b16 %v5677, %v5667
    %v5918 = vpack.c.b16 %v5678, %v5668
    %v5919 = vpack.c.b16 %v5679, %v5669
    %v5920 = vpack.c.b16 %v5690, %v5680
    %v5921 = vpack.c.b16 %v5691, %v5681
    %v5922 = vpack.c.b16 %v5692, %v5682
    %v5923 = vpack.c.b16 %v5693, %v5683
    %v5924 = vpack.c.b16 %v5694, %v5684
    %v5925 = vpack.c.b16 %v5695, %v5685
    %v5926 = vpack.c.b16 %v5696, %v5686
    %v5927 = vpack.c.b16 %v5697, %v5687
    %v5928 = vpack.c.b16 %v5698, %v5688
    %v5929 = vpack.c.b16 %v5699, %v5689
    %v5930 = vpack.c.b16 %v5710, %v5700
    %v5931 = vpack.c.b16 %v5711, %v5701
    %v5932 = vpack.c.b16 %v5712, %v5702
    %v5933 = vpack.c.b16 %v5713, %v5703
    %v5934 = vpack.c.b16 %v5714, %v5704
    %v5935 = vpack.c.b16 %v5715, %v5705
    %v5936 = vpack.c.b16 %v5716, %v5706
    %v5937 = vpack.c.b16 %v5717, %v5707
    %v5938 = vpack.c.b16 %v5718, %v5708
    %v5939 = vpack.c.b16 %v5719, %v5709
    %v5940 = vpack.c.b16 %v5730, %v5720
    %v5941 = vpack.c.b16 %v5731, %v5721
    %v5942 = vpack.c.b16 %v5732, %v5722
    %v5943 = vpack.c.b16 %v5733, %v5723
    %v5944 = vpack.c.b16 %v5734, %v5724
    %v5945 = vpack.c.b16 %v5735, %v5725
    %v5946 = vpack.c.b16 %v5736, %v5726
    %v5947 = vpack.c.b16 %v5737, %v5727
    %v5948 = vpack.c.b16 %v5738, %v5728
    %v5949 = vpack.c.b16 %v5739, %v5729
    %v5950 = vpack.c.b16 %v5750, %v5740
    %v5951 = vpack.c.b16 %v5751, %v5741
    %v5952 = vpack.c.b16 %v5752, %v5742
    %v5953 = vpack.c.b16 %v5753, %v5743
    %v5954 = vpack.c.b16 %v5754, %v5744
    %v5955 = vpack.c.b16 %v5755, %v5745
    %v5956 = vpack.c.b16 %v5756, %v5746
    %v5957 = vpack.c.b16 %v5757, %v5747
    %v5958 = vpack.c.b16 %v5758, %v5748
    %v5959 = vpack.c.b16 %v5759, %v5749
    %v5960 = vpack.c.b16 %v5770, %v5760
    %v5961 = vpack.c.b16 %v5771, %v5761
    %v5962 = vpack.c.b16 %v5772, %v5762
    %v5963 = vpack.c.b16 %v5773, %v5763
    %v5964 = vpack.c.b16 %v5774, %v5764
    %v5965 = vpack.c.b16 %v5775, %v5765
    %v5966 = vpack.c.b16 %v5776, %v5766
    %v5967 = vpack.c.b16 %v5777, %v5767
    %v5968 = vpack.c.b16 %v5778, %v5768
    %v5969 = vpack.c.b16 %v5779, %v5769
    %v5970 = vpack.c.b16 %v5790, %v5780
    %v5971 = vpack.c.b16 %v5791, %v5781
    %v5972 = vpack.c.b16 %v5792, %v5782
    %v5973 = vpack.c.b16 %v5793, %v5783
    %v5974 = vpack.c.b16 %v5794, %v5784
    %v5975 = vpack.c.b16 %v5795, %v5785
    %v5976 = vpack.c.b16 %v5796, %v5786
    %v5977 = vpack.c.b16 %v5797, %v5787
    %v5978 = vpack.c.b16 %v5798, %v5788
    %v5979 = vpack.c.b16 %v5799, %v5789
    %v5980 = vpack.c.b16 %v5810, %v5800
    %v5981 = vpack.c.b16 %v5811, %v5801
    %v5982 = vpack.c.b16 %v5812, %v5802
    %v5983 = vpack.c.b16 %v5813, %v5803
    %v5984 = vpack.c.b16 %v5814, %v5804
    %v5985 = vpack.c.b16 %v5815, %v5805
    %v5986 = vpack.c.b16 %v5816, %v5806
    %v5987 = vpack.c.b16 %v5817, %v5807
    %v5988 = vpack.c.b16 %v5818, %v5808
    %v5989 = vpack.c.b16 %v5819, %v5809
    %v5990 = vpack.c.b16 %v5830, %v5820
    %v5991 = vpack.c.b16 %v5831, %v5821
    %v5992 = vpack.c.b16 %v5832, %v5822
    %v5993 = vpack.c.b16 %v5833, %v5823
    %v5994 = vpack.c.b16 %v5834, %v5824
    %v5995 = vpack.c.b16 %v5835, %v5825
    %v5996 = vpack.c.b16 %v5836, %v5826
    %v5997 = vpack.c.b16 %v5837, %v5827
    %v5998 = vpack.c.b16 %v5838, %v5828
    %v5999 = vpack.c.b16 %v5839, %v5829
    %6160 = vmatprep.subr.bf16.mxu0 %v5841
    %6161 = vmatpush1.bf16.msra.mxu0 %v5840
    %6162 = vmatprep.subr.bf16.mxu0 %v5851
    %6163 = vmatpush1.bf16.msra.mxu0 %v5850
    %6164 = vmatprep.subr.bf16.mxu0 %v5861
    %6165 = vmatpush1.bf16.msra.mxu0 %v5860
    %6166 = vmatprep.subr.bf16.mxu0 %v5871
    %6167 = vmatpush1.bf16.msra.mxu0 %v5870
    %6168 = vmatprep.subr.bf16.mxu0 %v5881
    %6169 = vmatpush1.bf16.msra.mxu0 %v5880
    %6170 = vmatprep.subr.bf16.mxu0 %v5891
    %6171 = vmatpush1.bf16.msra.mxu0 %v5890
    %6172 = vmatprep.subr.bf16.mxu0 %v5901
    %6173 = vmatpush1.bf16.msra.mxu0 %v5900
    %6174 = vmatprep.subr.bf16.mxu0 %v5911
    %6175 = vmatpush1.bf16.msra.mxu0 %v5910
    %6176 = vmatprep.subr.bf16.mxu0 %v5921
    %6177 = vmatpush1.bf16.msra.mxu0 %v5920
    %6178 = vmatprep.subr.bf16.mxu0 %v5931
    %6179 = vmatpush1.bf16.msra.mxu0 %v5930
    %6180 = vmatprep.subr.bf16.mxu0 %v5941
    %6181 = vmatpush1.bf16.msra.mxu0 %v5940
    %6182 = vmatprep.subr.bf16.mxu0 %v5951
    %6183 = vmatpush1.bf16.msra.mxu0 %v5950
    %6184 = vmatprep.subr.bf16.mxu0 %v5961
    %6185 = vmatpush1.bf16.msra.mxu0 %v5960
    %6186 = vmatprep.subr.bf16.mxu0 %v5971
    %6187 = vmatpush1.bf16.msra.mxu0 %v5970
    %6188 = vmatprep.subr.bf16.mxu0 %v5981
    %6189 = vmatpush1.bf16.msra.mxu0 %v5980
    %6190 = vmatprep.subr.bf16.mxu0 %v5991
    %6191 = vmatpush1.bf16.msra.mxu0 %v5990
    %6192 = vmatprep.mubr.bf16.mxu0 %v531
    %6193 = vmatmul.mubr.bf16.gmra.mrb[0].mxu0 %v530
    %v6194 = vpop.f32.mrb[0].mxu0
    %v6195 = vadd.f32 %v4698, %v6194
    %v6196 = vpop.f32.mrb[0].mxu0
    %v6197 = vadd.f32 %v4700, %v6196
    %v6198 = vpop.f32.mrb[0].mxu0
    %v6199 = vpop.f32.mrb[0].mxu0
    %6200 = vdwg.mxu0
    %6201 = vmatprep.subr.bf16.mxu0 %v5843
    %6202 = vmatpush1.bf16.msra.mxu0 %v5842
    %6203 = vmatprep.subr.bf16.mxu0 %v5853
    %6204 = vmatpush1.bf16.msra.mxu0 %v5852
    %6205 = vmatprep.subr.bf16.mxu0 %v5863
    %6206 = vmatpush1.bf16.msra.mxu0 %v5862
    %6207 = vmatprep.subr.bf16.mxu0 %v5873
    %6208 = vmatpush1.bf16.msra.mxu0 %v5872
    %6209 = vmatprep.subr.bf16.mxu0 %v5883
    %6210 = vmatpush1.bf16.msra.mxu0 %v5882
    %6211 = vmatprep.subr.bf16.mxu0 %v5893
    %6212 = vmatpush1.bf16.msra.mxu0 %v5892
    %6213 = vmatprep.subr.bf16.mxu0 %v5903
    %6214 = vmatpush1.bf16.msra.mxu0 %v5902
    %6215 = vmatprep.subr.bf16.mxu0 %v5913
    %6216 = vmatpush1.bf16.msra.mxu0 %v5912
    %6217 = vmatprep.subr.bf16.mxu0 %v5923
    %6218 = vmatpush1.bf16.msra.mxu0 %v5922
    %6219 = vmatprep.subr.bf16.mxu0 %v5933
    %6220 = vmatpush1.bf16.msra.mxu0 %v5932
    %6221 = vmatprep.subr.bf16.mxu0 %v5943
    %6222 = vmatpush1.bf16.msra.mxu0 %v5942
    %6223 = vmatprep.subr.bf16.mxu0 %v5953
    %6224 = vmatpush1.bf16.msra.mxu0 %v5952
    %6225 = vmatprep.subr.bf16.mxu0 %v5963
    %6226 = vmatpush1.bf16.msra.mxu0 %v5962
    %6227 = vmatprep.subr.bf16.mxu0 %v5973
    %6228 = vmatpush1.bf16.msra.mxu0 %v5972
    %6229 = vmatprep.subr.bf16.mxu0 %v5983
    %6230 = vmatpush1.bf16.msra.mxu0 %v5982
    %6231 = vmatprep.subr.bf16.mxu0 %v5993
    %6232 = vmatpush1.bf16.msra.mxu0 %v5992
    %6233 = vmatprep.mubr.bf16.mxu0 %v531
    %6234 = vmatmul.mubr.bf16.gmra.mrb[0].mxu0 %v530
    %v6235 = vpop.f32.mrb[0].mxu0
    %v6236 = vadd.f32 %v4862, %v6235
    %v6237 = vpop.f32.mrb[0].mxu0
    %v6238 = vadd.f32 %v4864, %v6237
    %v6239 = vpop.f32.mrb[0].mxu0
    %v6240 = vpop.f32.mrb[0].mxu0
    %6241 = vdwg.mxu0
    %6242 = vmatprep.subr.bf16.mxu0 %v5845
    %6243 = vmatpush1.bf16.msra.mxu0 %v5844
    %6244 = vmatprep.subr.bf16.mxu0 %v5855
    %6245 = vmatpush1.bf16.msra.mxu0 %v5854
    %6246 = vmatprep.subr.bf16.mxu0 %v5865
    %6247 = vmatpush1.bf16.msra.mxu0 %v5864
    %6248 = vmatprep.subr.bf16.mxu0 %v5875
    %6249 = vmatpush1.bf16.msra.mxu0 %v5874
    %6250 = vmatprep.subr.bf16.mxu0 %v5885
    %6251 = vmatpush1.bf16.msra.mxu0 %v5884
    %6252 = vmatprep.subr.bf16.mxu0 %v5895
    %6253 = vmatpush1.bf16.msra.mxu0 %v5894
    %6254 = vmatprep.subr.bf16.mxu0 %v5905
    %6255 = vmatpush1.bf16.msra.mxu0 %v5904
    %6256 = vmatprep.subr.bf16.mxu0 %v5915
    %6257 = vmatpush1.bf16.msra.mxu0 %v5914
    %6258 = vmatprep.subr.bf16.mxu0 %v5925
    %6259 = vmatpush1.bf16.msra.mxu0 %v5924
    %6260 = vmatprep.subr.bf16.mxu0 %v5935
    %6261 = vmatpush1.bf16.msra.mxu0 %v5934
    %6262 = vmatprep.subr.bf16.mxu0 %v5945
    %6263 = vmatpush1.bf16.msra.mxu0 %v5944
    %6264 = vmatprep.subr.bf16.mxu0 %v5955
    %6265 = vmatpush1.bf16.msra.mxu0 %v5954
    %6266 = vmatprep.subr.bf16.mxu0 %v5965
    %6267 = vmatpush1.bf16.msra.mxu0 %v5964
    %6268 = vmatprep.subr.bf16.mxu0 %v5975
    %6269 = vmatpush1.bf16.msra.mxu0 %v5974
    %6270 = vmatprep.subr.bf16.mxu0 %v5985
    %6271 = vmatpush1.bf16.msra.mxu0 %v5984
    %6272 = vmatprep.subr.bf16.mxu0 %v5995
    %6273 = vmatpush1.bf16.msra.mxu0 %v5994
    %6274 = vmatprep.mubr.bf16.mxu0 %v531
    %6275 = vmatmul.mubr.bf16.gmra.mrb[0].mxu0 %v530
    %v6276 = vpop.f32.mrb[0].mxu0
    %v6277 = vadd.f32 %v5026, %v6276
    %v6278 = vpop.f32.mrb[0].mxu0
    %v6279 = vadd.f32 %v5028, %v6278
    %v6280 = vpop.f32.mrb[0].mxu0
    %v6281 = vpop.f32.mrb[0].mxu0
    %6282 = vdwg.mxu0
    %6283 = vmatprep.subr.bf16.mxu0 %v5847
    %6284 = vmatpush1.bf16.msra.mxu0 %v5846
    %6285 = vmatprep.subr.bf16.mxu0 %v5857
    %6286 = vmatpush1.bf16.msra.mxu0 %v5856
    %6287 = vmatprep.subr.bf16.mxu0 %v5867
    %6288 = vmatpush1.bf16.msra.mxu0 %v5866
    %6289 = vmatprep.subr.bf16.mxu0 %v5877
    %6290 = vmatpush1.bf16.msra.mxu0 %v5876
    %6291 = vmatprep.subr.bf16.mxu0 %v5887
    %6292 = vmatpush1.bf16.msra.mxu0 %v5886
    %6293 = vmatprep.subr.bf16.mxu0 %v5897
    %6294 = vmatpush1.bf16.msra.mxu0 %v5896
    %6295 = vmatprep.subr.bf16.mxu0 %v5907
    %6296 = vmatpush1.bf16.msra.mxu0 %v5906
    %6297 = vmatprep.subr.bf16.mxu0 %v5917
    %6298 = vmatpush1.bf16.msra.mxu0 %v5916
    %6299 = vmatprep.subr.bf16.mxu0 %v5927
    %6300 = vmatpush1.bf16.msra.mxu0 %v5926
    %6301 = vmatprep.subr.bf16.mxu0 %v5937
    %6302 = vmatpush1.bf16.msra.mxu0 %v5936
    %6303 = vmatprep.subr.bf16.mxu0 %v5947
    %6304 = vmatpush1.bf16.msra.mxu0 %v5946
    %6305 = vmatprep.subr.bf16.mxu0 %v5957
    %6306 = vmatpush1.bf16.msra.mxu0 %v5956
    %6307 = vmatprep.subr.bf16.mxu0 %v5967
    %6308 = vmatpush1.bf16.msra.mxu0 %v5966
    %6309 = vmatprep.subr.bf16.mxu0 %v5977
    %6310 = vmatpush1.bf16.msra.mxu0 %v5976
    %6311 = vmatprep.subr.bf16.mxu0 %v5987
    %6312 = vmatpush1.bf16.msra.mxu0 %v5986
    %6313 = vmatprep.subr.bf16.mxu0 %v5997
    %6314 = vmatpush1.bf16.msra.mxu0 %v5996
    %6315 = vmatprep.mubr.bf16.mxu0 %v531
    %6316 = vmatmul.mubr.bf16.gmra.mrb[0].mxu0 %v530
    %v6317 = vpop.f32.mrb[0].mxu0
    %v6318 = vadd.f32 %v5190, %v6317
    %v6319 = vpop.f32.mrb[0].mxu0
    %v6320 = vadd.f32 %v5192, %v6319
    %v6321 = vpop.f32.mrb[0].mxu0
    %v6322 = vpop.f32.mrb[0].mxu0
    %6323 = vdwg.mxu0
    %6324 = vmatprep.subr.bf16.mxu0 %v5849
    %6325 = vmatpush1.bf16.msra.mxu0 %v5848
    %6326 = vmatprep.subr.bf16.mxu0 %v5859
    %6327 = vmatpush1.bf16.msra.mxu0 %v5858
    %6328 = vmatprep.subr.bf16.mxu0 %v5869
    %6329 = vmatpush1.bf16.msra.mxu0 %v5868
    %6330 = vmatprep.subr.bf16.mxu0 %v5879
    %6331 = vmatpush1.bf16.msra.mxu0 %v5878
    %6332 = vmatprep.subr.bf16.mxu0 %v5889
    %6333 = vmatpush1.bf16.msra.mxu0 %v5888
    %6334 = vmatprep.subr.bf16.mxu0 %v5899
    %6335 = vmatpush1.bf16.msra.mxu0 %v5898
    %6336 = vmatprep.subr.bf16.mxu0 %v5909
    %6337 = vmatpush1.bf16.msra.mxu0 %v5908
    %6338 = vmatprep.subr.bf16.mxu0 %v5919
    %6339 = vmatpush1.bf16.msra.mxu0 %v5918
    %6340 = vmatprep.subr.bf16.mxu0 %v5929
    %6341 = vmatpush1.bf16.msra.mxu0 %v5928
    %6342 = vmatprep.subr.bf16.mxu0 %v5939
    %6343 = vmatpush1.bf16.msra.mxu0 %v5938
    %6344 = vmatprep.subr.bf16.mxu0 %v5949
    %6345 = vmatpush1.bf16.msra.mxu0 %v5948
    %6346 = vmatprep.subr.bf16.mxu0 %v5959
    %6347 = vmatpush1.bf16.msra.mxu0 %v5958
    %6348 = vmatprep.subr.bf16.mxu0 %v5969
    %6349 = vmatpush1.bf16.msra.mxu0 %v5968
    %6350 = vmatprep.subr.bf16.mxu0 %v5979
    %6351 = vmatpush1.bf16.msra.mxu0 %v5978
    %6352 = vmatprep.subr.bf16.mxu0 %v5989
    %6353 = vmatpush1.bf16.msra.mxu0 %v5988
    %6354 = vmatprep.subr.bf16.mxu0 %v5999
    %6355 = vmatpush1.bf16.msra.mxu0 %v5998
    %6356 = vmatprep.mubr.bf16.mxu0 %v531
    %6357 = vmatmul.mubr.bf16.gmra.mrb[0].mxu0 %v530
    %v6358 = vpop.f32.mrb[0].mxu0
    %v6359 = vadd.f32 %v5354, %v6358
    %v6360 = vpop.f32.mrb[0].mxu0
    %v6361 = vadd.f32 %v5356, %v6360
    %v6362 = vpop.f32.mrb[0].mxu0
    %v6363 = vpop.f32.mrb[0].mxu0
    %6364 = vdwg.mxu0
    %v6365 = vld [vmem:[#allocation16] sm:$0xff]
    %v6366 = vld [vmem:[#allocation16 + $0x8] sm:$0x3]
    %v6369 = vlaneseq
    %v6370 = vshrl.u32 %v6369, 7
    %v6371 = vsub.s32 0, %v6370
    %v6372 = vrot.slane %v6365, %v6371
    %v6373 = vlaneseq
    %v6374 = vshrl.u32 %v6373, 7
    %v6375 = vsub.s32 1, %v6374
    %v6376 = vrot.slane %v6365, %v6375
    %v6377 = vlaneseq
    %v6378 = vshrl.u32 %v6377, 7
    %v6379 = vsub.s32 2, %v6378
    %v6380 = vrot.slane %v6365, %v6379
    %v6381 = vlaneseq
    %v6382 = vshrl.u32 %v6381, 7
    %v6383 = vsub.s32 3, %v6382
    %v6384 = vrot.slane %v6365, %v6383
    %v6385 = vlaneseq
    %v6386 = vshrl.u32 %v6385, 7
    %v6387 = vsub.s32 4, %v6386
    %v6388 = vrot.slane %v6365, %v6387
    %v6389 = vlaneseq
    %v6390 = vshrl.u32 %v6389, 7
    %v6391 = vsub.s32 5, %v6390
    %v6392 = vrot.slane %v6365, %v6391
    %v6393 = vlaneseq
    %v6394 = vshrl.u32 %v6393, 7
    %v6395 = vsub.s32 6, %v6394
    %v6396 = vrot.slane %v6365, %v6395
    %v6397 = vlaneseq
    %v6398 = vshrl.u32 %v6397, 7
    %v6399 = vsub.s32 7, %v6398
    %v6400 = vrot.slane %v6365, %v6399
    %v6401 = vlaneseq
    %v6402 = vshrl.u32 %v6401, 7
    %v6403 = vsub.s32 0, %v6402
    %v6404 = vrot.slane %v6366, %v6403
    %v6405 = vlaneseq
    %v6406 = vshrl.u32 %v6405, 7
    %v6407 = vsub.s32 1, %v6406
    %v6408 = vrot.slane %v6366, %v6407
    %v6419 = vadd.f32 %v6195, %v6372
    %v6420 = vadd.f32 %v6197, %v6376
    %v6421 = vadd.f32 %v6236, %v6380
    %v6422 = vadd.f32 %v6238, %v6384
    %v6423 = vadd.f32 %v6277, %v6388
    %v6424 = vadd.f32 %v6279, %v6392
    %v6425 = vadd.f32 %v6318, %v6396
    %v6426 = vadd.f32 %v6320, %v6400
    %v6427 = vadd.f32 %v6359, %v6404
    %v6428 = vadd.f32 %v6361, %v6408
    %v6429 = vmax.f32 %v6419, 0.0
    %v6430 = vmax.f32 %v6420, 0.0
    %v6431 = vmax.f32 %v6421, 0.0
    %v6432 = vmax.f32 %v6422, 0.0
    %v6433 = vmax.f32 %v6423, 0.0
    %v6434 = vmax.f32 %v6424, 0.0
    %v6435 = vmax.f32 %v6425, 0.0
    %v6436 = vmax.f32 %v6426, 0.0
    %v6437 = vmax.f32 %v6427, 0.0
    %v6438 = vmax.f32 %v6428, 0.0
    %v6439 = vpack.c.bf16 %v6429, %v6429
    %v6440 = vpack.c.bf16 %v6430, %v6430
    %v6441 = vpack.c.bf16 %v6431, %v6431
    %v6442 = vpack.c.bf16 %v6432, %v6432
    %v6443 = vpack.c.bf16 %v6433, %v6433
    %v6444 = vpack.c.bf16 %v6434, %v6434
    %v6445 = vpack.c.bf16 %v6435, %v6435
    %v6446 = vpack.c.bf16 %v6436, %v6436
    %v6447 = vpack.c.bf16 %v6437, %v6437
    %v6448 = vpack.c.bf16 %v6438, %v6438
    %v6449 = vld [vmem:[#allocation17] sm:$0xf]
    %v6450 = vld [vmem:[#allocation17 + $0x4] sm:$0xf]
    %v6451 = vld [vmem:[#allocation17 + $0x8] sm:$0xf]
    %v6452 = vld [vmem:[#allocation17 + $0xc] sm:$0xf]
    %v6453 = vld [vmem:[#allocation17 + $0x10] sm:$0xf]
    %v6454 = vld [vmem:[#allocation17 + $0x14] sm:$0xf]
    %v6455 = vld [vmem:[#allocation17 + $0x18] sm:$0xf]
    %v6456 = vld [vmem:[#allocation17 + $0x1c] sm:$0xf]
    %v6457 = vld [vmem:[#allocation17 + $0x20] sm:$0xf]
    %v6458 = vld [vmem:[#allocation17 + $0x24] sm:$0xf]
    %v6459 = vld [vmem:[#allocation17 + $0x28] sm:$0xf]
    %v6460 = vld [vmem:[#allocation17 + $0x2c] sm:$0xf]
    %v6461 = vld [vmem:[#allocation17 + $0x30] sm:$0xf]
    %v6462 = vld [vmem:[#allocation17 + $0x34] sm:$0xf]
    %v6463 = vld [vmem:[#allocation17 + $0x38] sm:$0xf]
    %v6464 = vld [vmem:[#allocation17 + $0x3c] sm:$0xf]
    %v6465 = vld [vmem:[#allocation17 + $0x40] sm:$0xf]
    %v6466 = vld [vmem:[#allocation17 + $0x44] sm:$0xf]
    %v6467 = vld [vmem:[#allocation17 + $0x48] sm:$0xf]
    %v6468 = vld [vmem:[#allocation17 + $0x4c] sm:$0xf]
    %v6469 = vld [vmem:[#allocation17 + $0x50] sm:$0xf]
    %v6470 = vld [vmem:[#allocation17 + $0x54] sm:$0xf]
    %v6471 = vld [vmem:[#allocation17 + $0x58] sm:$0xf]
    %v6472 = vld [vmem:[#allocation17 + $0x5c] sm:$0xf]
    %v6473 = vld [vmem:[#allocation17 + $0x60] sm:$0xf]
    %v6474 = vld [vmem:[#allocation17 + $0x64] sm:$0xf]
    %v6475 = vld [vmem:[#allocation17 + $0x68] sm:$0xf]
    %v6476 = vld [vmem:[#allocation17 + $0x6c] sm:$0xf]
    %v6477 = vld [vmem:[#allocation17 + $0x70] sm:$0xf]
    %v6478 = vld [vmem:[#allocation17 + $0x74] sm:$0xf]
    %v6479 = vld [vmem:[#allocation17 + $0x78] sm:$0xf]
    %v6480 = vld [vmem:[#allocation17 + $0x7c] sm:$0xf]
    %v6481 = vld [vmem:[#allocation17 + $0x80] sm:$0xf]
    %v6482 = vld [vmem:[#allocation17 + $0x84] sm:$0xf]
    %v6483 = vld [vmem:[#allocation17 + $0x88] sm:$0xf]
    %v6484 = vld [vmem:[#allocation17 + $0x8c] sm:$0xf]
    %v6485 = vld [vmem:[#allocation17 + $0x90] sm:$0xf]
    %v6486 = vld [vmem:[#allocation17 + $0x94] sm:$0xf]
    %v6487 = vld [vmem:[#allocation17 + $0x98] sm:$0xf]
    %v6488 = vld [vmem:[#allocation17 + $0x9c] sm:$0xf]
    %v6489 = vld [vmem:[#allocation17 + $0xa0] sm:$0xf]
    %v6490 = vld [vmem:[#allocation17 + $0xa4] sm:$0xf]
    %v6491 = vld [vmem:[#allocation17 + $0xa8] sm:$0xf]
    %v6492 = vld [vmem:[#allocation17 + $0xac] sm:$0xf]
    %v6493 = vld [vmem:[#allocation17 + $0xb0] sm:$0xf]
    %v6494 = vld [vmem:[#allocation17 + $0xb4] sm:$0xf]
    %v6495 = vld [vmem:[#allocation17 + $0xb8] sm:$0xf]
    %v6496 = vld [vmem:[#allocation17 + $0xbc] sm:$0xf]
    %v6497 = vld [vmem:[#allocation17 + $0xc0] sm:$0xf]
    %v6498 = vld [vmem:[#allocation17 + $0xc4] sm:$0xf]
    %v6499 = vld [vmem:[#allocation17 + $0xc8] sm:$0xf]
    %v6500 = vld [vmem:[#allocation17 + $0xcc] sm:$0xf]
    %v6501 = vld [vmem:[#allocation17 + $0xd0] sm:$0xf]
    %v6502 = vld [vmem:[#allocation17 + $0xd4] sm:$0xf]
    %v6503 = vld [vmem:[#allocation17 + $0xd8] sm:$0xf]
    %v6504 = vld [vmem:[#allocation17 + $0xdc] sm:$0xf]
    %v6505 = vld [vmem:[#allocation17 + $0xe0] sm:$0xf]
    %v6506 = vld [vmem:[#allocation17 + $0xe4] sm:$0xf]
    %v6507 = vld [vmem:[#allocation17 + $0xe8] sm:$0xf]
    %v6508 = vld [vmem:[#allocation17 + $0xec] sm:$0xf]
    %v6509 = vld [vmem:[#allocation17 + $0xf0] sm:$0xf]
    %v6510 = vld [vmem:[#allocation17 + $0xf4] sm:$0xf]
    %v6511 = vld [vmem:[#allocation17 + $0xf8] sm:$0xf]
    %v6512 = vld [vmem:[#allocation17 + $0xfc] sm:$0xf]
    %v6513 = vld [vmem:[#allocation17 + $0x100] sm:$0xf]
    %v6514 = vld [vmem:[#allocation17 + $0x104] sm:$0xf]
    %v6515 = vld [vmem:[#allocation17 + $0x108] sm:$0xf]
    %v6516 = vld [vmem:[#allocation17 + $0x10c] sm:$0xf]
    %v6517 = vld [vmem:[#allocation17 + $0x110] sm:$0xf]
    %v6518 = vld [vmem:[#allocation17 + $0x114] sm:$0xf]
    %v6519 = vld [vmem:[#allocation17 + $0x118] sm:$0xf]
    %v6520 = vld [vmem:[#allocation17 + $0x11c] sm:$0xf]
    %v6521 = vld [vmem:[#allocation17 + $0x120] sm:$0xf]
    %v6522 = vld [vmem:[#allocation17 + $0x124] sm:$0xf]
    %v6523 = vld [vmem:[#allocation17 + $0x128] sm:$0xf]
    %v6524 = vld [vmem:[#allocation17 + $0x12c] sm:$0xf]
    %v6525 = vld [vmem:[#allocation17 + $0x130] sm:$0xf]
    %v6526 = vld [vmem:[#allocation17 + $0x134] sm:$0xf]
    %v6527 = vld [vmem:[#allocation17 + $0x138] sm:$0xf]
    %v6528 = vld [vmem:[#allocation17 + $0x13c] sm:$0xf]
    %v6529 = vld [vmem:[#allocation17 + $0x140] sm:$0xf]
    %v6530 = vld [vmem:[#allocation17 + $0x144] sm:$0xf]
    %v6531 = vld [vmem:[#allocation17 + $0x148] sm:$0xf]
    %v6532 = vld [vmem:[#allocation17 + $0x14c] sm:$0xf]
    %v6533 = vld [vmem:[#allocation17 + $0x150] sm:$0xf]
    %v6534 = vld [vmem:[#allocation17 + $0x154] sm:$0xf]
    %v6535 = vld [vmem:[#allocation17 + $0x158] sm:$0xf]
    %v6536 = vld [vmem:[#allocation17 + $0x15c] sm:$0xf]
    %v6537 = vld [vmem:[#allocation17 + $0x160] sm:$0xf]
    %v6538 = vld [vmem:[#allocation17 + $0x164] sm:$0xf]
    %v6539 = vld [vmem:[#allocation17 + $0x168] sm:$0xf]
    %v6540 = vld [vmem:[#allocation17 + $0x16c] sm:$0xf]
    %v6541 = vld [vmem:[#allocation17 + $0x170] sm:$0xf]
    %v6542 = vld [vmem:[#allocation17 + $0x174] sm:$0xf]
    %v6543 = vld [vmem:[#allocation17 + $0x178] sm:$0xf]
    %v6544 = vld [vmem:[#allocation17 + $0x17c] sm:$0xf]
    %v6545 = vld [vmem:[#allocation17 + $0x180] sm:$0xf]
    %v6546 = vld [vmem:[#allocation17 + $0x184] sm:$0xf]
    %v6547 = vld [vmem:[#allocation17 + $0x188] sm:$0xf]
    %v6548 = vld [vmem:[#allocation17 + $0x18c] sm:$0xf]
    %v6549 = vld [vmem:[#allocation17 + $0x190] sm:$0xf]
    %v6550 = vld [vmem:[#allocation17 + $0x194] sm:$0xf]
    %v6551 = vld [vmem:[#allocation17 + $0x198] sm:$0xf]
    %v6552 = vld [vmem:[#allocation17 + $0x19c] sm:$0xf]
    %v6553 = vld [vmem:[#allocation17 + $0x1a0] sm:$0xf]
    %v6554 = vld [vmem:[#allocation17 + $0x1a4] sm:$0xf]
    %v6555 = vld [vmem:[#allocation17 + $0x1a8] sm:$0xf]
    %v6556 = vld [vmem:[#allocation17 + $0x1ac] sm:$0xf]
    %v6557 = vld [vmem:[#allocation17 + $0x1b0] sm:$0xf]
    %v6558 = vld [vmem:[#allocation17 + $0x1b4] sm:$0xf]
    %v6559 = vld [vmem:[#allocation17 + $0x1b8] sm:$0xf]
    %v6560 = vld [vmem:[#allocation17 + $0x1bc] sm:$0xf]
    %v6561 = vld [vmem:[#allocation17 + $0x1c0] sm:$0xf]
    %v6562 = vld [vmem:[#allocation17 + $0x1c4] sm:$0xf]
    %v6563 = vld [vmem:[#allocation17 + $0x1c8] sm:$0xf]
    %v6564 = vld [vmem:[#allocation17 + $0x1cc] sm:$0xf]
    %v6565 = vld [vmem:[#allocation17 + $0x1d0] sm:$0xf]
    %v6566 = vld [vmem:[#allocation17 + $0x1d4] sm:$0xf]
    %v6567 = vld [vmem:[#allocation17 + $0x1d8] sm:$0xf]
    %v6568 = vld [vmem:[#allocation17 + $0x1dc] sm:$0xf]
    %v6569 = vld [vmem:[#allocation17 + $0x1e0] sm:$0xf]
    %v6570 = vld [vmem:[#allocation17 + $0x1e4] sm:$0xf]
    %v6571 = vld [vmem:[#allocation17 + $0x1e8] sm:$0xf]
    %v6572 = vld [vmem:[#allocation17 + $0x1ec] sm:$0xf]
    %v6573 = vld [vmem:[#allocation17 + $0x1f0] sm:$0xf]
    %v6574 = vld [vmem:[#allocation17 + $0x1f4] sm:$0xf]
    %v6575 = vld [vmem:[#allocation17 + $0x1f8] sm:$0xf]
    %v6576 = vld [vmem:[#allocation17 + $0x1fc] sm:$0xf]
    %v6577 = vld [vmem:[#allocation17 + $0x200] sm:$0xf]
    %v6578 = vld [vmem:[#allocation17 + $0x204] sm:$0xf]
    %v6579 = vld [vmem:[#allocation17 + $0x208] sm:$0xf]
    %v6580 = vld [vmem:[#allocation17 + $0x20c] sm:$0xf]
    %v6581 = vld [vmem:[#allocation17 + $0x210] sm:$0xf]
    %v6582 = vld [vmem:[#allocation17 + $0x214] sm:$0xf]
    %v6583 = vld [vmem:[#allocation17 + $0x218] sm:$0xf]
    %v6584 = vld [vmem:[#allocation17 + $0x21c] sm:$0xf]
    %v6585 = vld [vmem:[#allocation17 + $0x220] sm:$0xf]
    %v6586 = vld [vmem:[#allocation17 + $0x224] sm:$0xf]
    %v6587 = vld [vmem:[#allocation17 + $0x228] sm:$0xf]
    %v6588 = vld [vmem:[#allocation17 + $0x22c] sm:$0xf]
    %v6589 = vld [vmem:[#allocation17 + $0x230] sm:$0xf]
    %v6590 = vld [vmem:[#allocation17 + $0x234] sm:$0xf]
    %v6591 = vld [vmem:[#allocation17 + $0x238] sm:$0xf]
    %v6592 = vld [vmem:[#allocation17 + $0x23c] sm:$0xf]
    %v6593 = vld [vmem:[#allocation17 + $0x240] sm:$0xf]
    %v6594 = vld [vmem:[#allocation17 + $0x244] sm:$0xf]
    %v6595 = vld [vmem:[#allocation17 + $0x248] sm:$0xf]
    %v6596 = vld [vmem:[#allocation17 + $0x24c] sm:$0xf]
    %v6597 = vld [vmem:[#allocation17 + $0x250] sm:$0xf]
    %v6598 = vld [vmem:[#allocation17 + $0x254] sm:$0xf]
    %v6599 = vld [vmem:[#allocation17 + $0x258] sm:$0xf]
    %v6600 = vld [vmem:[#allocation17 + $0x25c] sm:$0xf]
    %v6601 = vld [vmem:[#allocation17 + $0x260] sm:$0xf]
    %v6602 = vld [vmem:[#allocation17 + $0x264] sm:$0xf]
    %v6603 = vld [vmem:[#allocation17 + $0x268] sm:$0xf]
    %v6604 = vld [vmem:[#allocation17 + $0x26c] sm:$0xf]
    %v6605 = vld [vmem:[#allocation17 + $0x270] sm:$0xf]
    %v6606 = vld [vmem:[#allocation17 + $0x274] sm:$0xf]
    %v6607 = vld [vmem:[#allocation17 + $0x278] sm:$0xf]
    %v6608 = vld [vmem:[#allocation17 + $0x27c] sm:$0xf]
    %v6609 = vld [vmem:[#allocation19] sm:$0x1]
    %v6611 = vlaneseq
    %v6612 = vshrl.u32 %v6611, 7
    %v6613 = vsub.s32 0, %v6612
    %v6614 = vrot.slane %v6609, %v6613
    %v6776 = vunpack.c.l.b16 %v6449
    %v6777 = vunpack.c.l.b16 %v6450
    %v6778 = vunpack.c.l.b16 %v6451
    %v6779 = vunpack.c.l.b16 %v6452
    %v6780 = vunpack.c.l.b16 %v6453
    %v6781 = vunpack.c.l.b16 %v6454
    %v6782 = vunpack.c.l.b16 %v6455
    %v6783 = vunpack.c.l.b16 %v6456
    %v6784 = vunpack.c.l.b16 %v6457
    %v6785 = vunpack.c.l.b16 %v6458
    %v6786 = vunpack.c.l.b16 %v6459
    %v6787 = vunpack.c.l.b16 %v6460
    %v6788 = vunpack.c.l.b16 %v6461
    %v6789 = vunpack.c.l.b16 %v6462
    %v6790 = vunpack.c.l.b16 %v6463
    %v6791 = vunpack.c.l.b16 %v6464
    %v6792 = vunpack.c.l.b16 %v6465
    %v6793 = vunpack.c.l.b16 %v6466
    %v6794 = vunpack.c.l.b16 %v6467
    %v6795 = vunpack.c.l.b16 %v6468
    %v6796 = vunpack.c.l.b16 %v6469
    %v6797 = vunpack.c.l.b16 %v6470
    %v6798 = vunpack.c.l.b16 %v6471
    %v6799 = vunpack.c.l.b16 %v6472
    %v6800 = vunpack.c.l.b16 %v6473
    %v6801 = vunpack.c.l.b16 %v6474
    %v6802 = vunpack.c.l.b16 %v6475
    %v6803 = vunpack.c.l.b16 %v6476
    %v6804 = vunpack.c.l.b16 %v6477
    %v6805 = vunpack.c.l.b16 %v6478
    %v6806 = vunpack.c.l.b16 %v6479
    %v6807 = vunpack.c.l.b16 %v6480
    %v6808 = vunpack.c.l.b16 %v6481
    %v6809 = vunpack.c.l.b16 %v6482
    %v6810 = vunpack.c.l.b16 %v6483
    %v6811 = vunpack.c.l.b16 %v6484
    %v6812 = vunpack.c.l.b16 %v6485
    %v6813 = vunpack.c.l.b16 %v6486
    %v6814 = vunpack.c.l.b16 %v6487
    %v6815 = vunpack.c.l.b16 %v6488
    %v6816 = vunpack.c.l.b16 %v6489
    %v6817 = vunpack.c.l.b16 %v6490
    %v6818 = vunpack.c.l.b16 %v6491
    %v6819 = vunpack.c.l.b16 %v6492
    %v6820 = vunpack.c.l.b16 %v6493
    %v6821 = vunpack.c.l.b16 %v6494
    %v6822 = vunpack.c.l.b16 %v6495
    %v6823 = vunpack.c.l.b16 %v6496
    %v6824 = vunpack.c.l.b16 %v6497
    %v6825 = vunpack.c.l.b16 %v6498
    %v6826 = vunpack.c.l.b16 %v6499
    %v6827 = vunpack.c.l.b16 %v6500
    %v6828 = vunpack.c.l.b16 %v6501
    %v6829 = vunpack.c.l.b16 %v6502
    %v6830 = vunpack.c.l.b16 %v6503
    %v6831 = vunpack.c.l.b16 %v6504
    %v6832 = vunpack.c.l.b16 %v6505
    %v6833 = vunpack.c.l.b16 %v6506
    %v6834 = vunpack.c.l.b16 %v6507
    %v6835 = vunpack.c.l.b16 %v6508
    %v6836 = vunpack.c.l.b16 %v6509
    %v6837 = vunpack.c.l.b16 %v6510
    %v6838 = vunpack.c.l.b16 %v6511
    %v6839 = vunpack.c.l.b16 %v6512
    %v6840 = vunpack.c.l.b16 %v6513
    %v6841 = vunpack.c.l.b16 %v6514
    %v6842 = vunpack.c.l.b16 %v6515
    %v6843 = vunpack.c.l.b16 %v6516
    %v6844 = vunpack.c.l.b16 %v6517
    %v6845 = vunpack.c.l.b16 %v6518
    %v6846 = vunpack.c.l.b16 %v6519
    %v6847 = vunpack.c.l.b16 %v6520
    %v6848 = vunpack.c.l.b16 %v6521
    %v6849 = vunpack.c.l.b16 %v6522
    %v6850 = vunpack.c.l.b16 %v6523
    %v6851 = vunpack.c.l.b16 %v6524
    %v6852 = vunpack.c.l.b16 %v6525
    %v6853 = vunpack.c.l.b16 %v6526
    %v6854 = vunpack.c.l.b16 %v6527
    %v6855 = vunpack.c.l.b16 %v6528
    %v6856 = vunpack.c.l.b16 %v6529
    %v6857 = vunpack.c.l.b16 %v6530
    %v6858 = vunpack.c.l.b16 %v6531
    %v6859 = vunpack.c.l.b16 %v6532
    %v6860 = vunpack.c.l.b16 %v6533
    %v6861 = vunpack.c.l.b16 %v6534
    %v6862 = vunpack.c.l.b16 %v6535
    %v6863 = vunpack.c.l.b16 %v6536
    %v6864 = vunpack.c.l.b16 %v6537
    %v6865 = vunpack.c.l.b16 %v6538
    %v6866 = vunpack.c.l.b16 %v6539
    %v6867 = vunpack.c.l.b16 %v6540
    %v6868 = vunpack.c.l.b16 %v6541
    %v6869 = vunpack.c.l.b16 %v6542
    %v6870 = vunpack.c.l.b16 %v6543
    %v6871 = vunpack.c.l.b16 %v6544
    %v6872 = vunpack.c.l.b16 %v6545
    %v6873 = vunpack.c.l.b16 %v6546
    %v6874 = vunpack.c.l.b16 %v6547
    %v6875 = vunpack.c.l.b16 %v6548
    %v6876 = vunpack.c.l.b16 %v6549
    %v6877 = vunpack.c.l.b16 %v6550
    %v6878 = vunpack.c.l.b16 %v6551
    %v6879 = vunpack.c.l.b16 %v6552
    %v6880 = vunpack.c.l.b16 %v6553
    %v6881 = vunpack.c.l.b16 %v6554
    %v6882 = vunpack.c.l.b16 %v6555
    %v6883 = vunpack.c.l.b16 %v6556
    %v6884 = vunpack.c.l.b16 %v6557
    %v6885 = vunpack.c.l.b16 %v6558
    %v6886 = vunpack.c.l.b16 %v6559
    %v6887 = vunpack.c.l.b16 %v6560
    %v6888 = vunpack.c.l.b16 %v6561
    %v6889 = vunpack.c.l.b16 %v6562
    %v6890 = vunpack.c.l.b16 %v6563
    %v6891 = vunpack.c.l.b16 %v6564
    %v6892 = vunpack.c.l.b16 %v6565
    %v6893 = vunpack.c.l.b16 %v6566
    %v6894 = vunpack.c.l.b16 %v6567
    %v6895 = vunpack.c.l.b16 %v6568
    %v6896 = vunpack.c.l.b16 %v6569
    %v6897 = vunpack.c.l.b16 %v6570
    %v6898 = vunpack.c.l.b16 %v6571
    %v6899 = vunpack.c.l.b16 %v6572
    %v6900 = vunpack.c.l.b16 %v6573
    %v6901 = vunpack.c.l.b16 %v6574
    %v6902 = vunpack.c.l.b16 %v6575
    %v6903 = vunpack.c.l.b16 %v6576
    %v6904 = vunpack.c.l.b16 %v6577
    %v6905 = vunpack.c.l.b16 %v6578
    %v6906 = vunpack.c.l.b16 %v6579
    %v6907 = vunpack.c.l.b16 %v6580
    %v6908 = vunpack.c.l.b16 %v6581
    %v6909 = vunpack.c.l.b16 %v6582
    %v6910 = vunpack.c.l.b16 %v6583
    %v6911 = vunpack.c.l.b16 %v6584
    %v6912 = vunpack.c.l.b16 %v6585
    %v6913 = vunpack.c.l.b16 %v6586
    %v6914 = vunpack.c.l.b16 %v6587
    %v6915 = vunpack.c.l.b16 %v6588
    %v6916 = vunpack.c.l.b16 %v6589
    %v6917 = vunpack.c.l.b16 %v6590
    %v6918 = vunpack.c.l.b16 %v6591
    %v6919 = vunpack.c.l.b16 %v6592
    %v6920 = vunpack.c.l.b16 %v6593
    %v6921 = vunpack.c.l.b16 %v6594
    %v6922 = vunpack.c.l.b16 %v6595
    %v6923 = vunpack.c.l.b16 %v6596
    %v6924 = vunpack.c.l.b16 %v6597
    %v6925 = vunpack.c.l.b16 %v6598
    %v6926 = vunpack.c.l.b16 %v6599
    %v6927 = vunpack.c.l.b16 %v6600
    %v6928 = vunpack.c.l.b16 %v6601
    %v6929 = vunpack.c.l.b16 %v6602
    %v6930 = vunpack.c.l.b16 %v6603
    %v6931 = vunpack.c.l.b16 %v6604
    %v6932 = vunpack.c.l.b16 %v6605
    %v6933 = vunpack.c.l.b16 %v6606
    %v6934 = vunpack.c.l.b16 %v6607
    %v6935 = vunpack.c.l.b16 %v6608
    %v6936 = vpack.c.b16 %v6777, %v6776
    %v6937 = vpack.c.b16 %v6779, %v6778
    %v6938 = vpack.c.b16 %v6781, %v6780
    %v6939 = vpack.c.b16 %v6783, %v6782
    %v6940 = vpack.c.b16 %v6785, %v6784
    %v6941 = vpack.c.b16 %v6787, %v6786
    %v6942 = vpack.c.b16 %v6789, %v6788
    %v6943 = vpack.c.b16 %v6791, %v6790
    %v6944 = vpack.c.b16 %v6793, %v6792
    %v6945 = vpack.c.b16 %v6795, %v6794
    %v6946 = vpack.c.b16 %v6797, %v6796
    %v6947 = vpack.c.b16 %v6799, %v6798
    %v6948 = vpack.c.b16 %v6801, %v6800
    %v6949 = vpack.c.b16 %v6803, %v6802
    %v6950 = vpack.c.b16 %v6805, %v6804
    %v6951 = vpack.c.b16 %v6807, %v6806
    %v6952 = vpack.c.b16 %v6809, %v6808
    %v6953 = vpack.c.b16 %v6811, %v6810
    %v6954 = vpack.c.b16 %v6813, %v6812
    %v6955 = vpack.c.b16 %v6815, %v6814
    %v6956 = vpack.c.b16 %v6817, %v6816
    %v6957 = vpack.c.b16 %v6819, %v6818
    %v6958 = vpack.c.b16 %v6821, %v6820
    %v6959 = vpack.c.b16 %v6823, %v6822
    %v6960 = vpack.c.b16 %v6825, %v6824
    %v6961 = vpack.c.b16 %v6827, %v6826
    %v6962 = vpack.c.b16 %v6829, %v6828
    %v6963 = vpack.c.b16 %v6831, %v6830
    %v6964 = vpack.c.b16 %v6833, %v6832
    %v6965 = vpack.c.b16 %v6835, %v6834
    %v6966 = vpack.c.b16 %v6837, %v6836
    %v6967 = vpack.c.b16 %v6839, %v6838
    %v6968 = vpack.c.b16 %v6841, %v6840
    %v6969 = vpack.c.b16 %v6843, %v6842
    %v6970 = vpack.c.b16 %v6845, %v6844
    %v6971 = vpack.c.b16 %v6847, %v6846
    %v6972 = vpack.c.b16 %v6849, %v6848
    %v6973 = vpack.c.b16 %v6851, %v6850
    %v6974 = vpack.c.b16 %v6853, %v6852
    %v6975 = vpack.c.b16 %v6855, %v6854
    %v6976 = vpack.c.b16 %v6857, %v6856
    %v6977 = vpack.c.b16 %v6859, %v6858
    %v6978 = vpack.c.b16 %v6861, %v6860
    %v6979 = vpack.c.b16 %v6863, %v6862
    %v6980 = vpack.c.b16 %v6865, %v6864
    %v6981 = vpack.c.b16 %v6867, %v6866
    %v6982 = vpack.c.b16 %v6869, %v6868
    %v6983 = vpack.c.b16 %v6871, %v6870
    %v6984 = vpack.c.b16 %v6873, %v6872
    %v6985 = vpack.c.b16 %v6875, %v6874
    %v6986 = vpack.c.b16 %v6877, %v6876
    %v6987 = vpack.c.b16 %v6879, %v6878
    %v6988 = vpack.c.b16 %v6881, %v6880
    %v6989 = vpack.c.b16 %v6883, %v6882
    %v6990 = vpack.c.b16 %v6885, %v6884
    %v6991 = vpack.c.b16 %v6887, %v6886
    %v6992 = vpack.c.b16 %v6889, %v6888
    %v6993 = vpack.c.b16 %v6891, %v6890
    %v6994 = vpack.c.b16 %v6893, %v6892
    %v6995 = vpack.c.b16 %v6895, %v6894
    %v6996 = vpack.c.b16 %v6897, %v6896
    %v6997 = vpack.c.b16 %v6899, %v6898
    %v6998 = vpack.c.b16 %v6901, %v6900
    %v6999 = vpack.c.b16 %v6903, %v6902
    %v7000 = vpack.c.b16 %v6905, %v6904
    %v7001 = vpack.c.b16 %v6907, %v6906
    %v7002 = vpack.c.b16 %v6909, %v6908
    %v7003 = vpack.c.b16 %v6911, %v6910
    %v7004 = vpack.c.b16 %v6913, %v6912
    %v7005 = vpack.c.b16 %v6915, %v6914
    %v7006 = vpack.c.b16 %v6917, %v6916
    %v7007 = vpack.c.b16 %v6919, %v6918
    %v7008 = vpack.c.b16 %v6921, %v6920
    %v7009 = vpack.c.b16 %v6923, %v6922
    %v7010 = vpack.c.b16 %v6925, %v6924
    %v7011 = vpack.c.b16 %v6927, %v6926
    %v7012 = vpack.c.b16 %v6929, %v6928
    %v7013 = vpack.c.b16 %v6931, %v6930
    %v7014 = vpack.c.b16 %v6933, %v6932
    %v7015 = vpack.c.b16 %v6935, %v6934
    %7096 = vmatprep.subr.bf16.mxu0 0
    %7097 = vmatpush1.bf16.msra.mxu0 %v6936
    %7098 = vmatprep.subr.bf16.mxu0 0
    %7099 = vmatpush1.bf16.msra.mxu0 %v6937
    %7100 = vmatprep.subr.bf16.mxu0 0
    %7101 = vmatpush1.bf16.msra.mxu0 %v6938
    %7102 = vmatprep.subr.bf16.mxu0 0
    %7103 = vmatpush1.bf16.msra.mxu0 %v6939
    %7104 = vmatprep.subr.bf16.mxu0 0
    %7105 = vmatpush1.bf16.msra.mxu0 %v6940
    %7106 = vmatprep.subr.bf16.mxu0 0
    %7107 = vmatpush1.bf16.msra.mxu0 %v6941
    %7108 = vmatprep.subr.bf16.mxu0 0
    %7109 = vmatpush1.bf16.msra.mxu0 %v6942
    %7110 = vmatprep.subr.bf16.mxu0 0
    %7111 = vmatpush1.bf16.msra.mxu0 %v6943
    %7112 = vmatprep.subr.bf16.mxu0 0
    %7113 = vmatpush1.bf16.msra.mxu0 %v6944
    %7114 = vmatprep.subr.bf16.mxu0 0
    %7115 = vmatpush1.bf16.msra.mxu0 %v6945
    %7116 = vmatprep.subr.bf16.mxu0 0
    %7117 = vmatpush1.bf16.msra.mxu0 %v6946
    %7118 = vmatprep.subr.bf16.mxu0 0
    %7119 = vmatpush1.bf16.msra.mxu0 %v6947
    %7120 = vmatprep.subr.bf16.mxu0 0
    %7121 = vmatpush1.bf16.msra.mxu0 %v6948
    %7122 = vmatprep.subr.bf16.mxu0 0
    %7123 = vmatpush1.bf16.msra.mxu0 %v6949
    %7124 = vmatprep.subr.bf16.mxu0 0
    %7125 = vmatpush1.bf16.msra.mxu0 %v6950
    %7126 = vmatprep.subr.bf16.mxu0 0
    %7127 = vmatpush1.bf16.msra.mxu0 %v6951
    %7128 = vmatprep.mubr.bf16.mxu0 %v6440
    %7129 = vmatmul.mubr.bf16.gmra.mrb[0].mxu0 %v6439
    %v7130 = vpop.f32.mrb[0].mxu0
    %v7131 = vadd.f32 %v6614, %v7130
    %v7132 = vpop.f32.mrb[0].mxu0
    %v7133 = vpop.f32.mrb[0].mxu0
    %v7134 = vpop.f32.mrb[0].mxu0
    %7135 = vdwg.mxu0
    %7136 = vmatprep.subr.bf16.mxu0 0
    %7137 = vmatpush1.bf16.msra.mxu0 %v6952
    %7138 = vmatprep.subr.bf16.mxu0 0
    %7139 = vmatpush1.bf16.msra.mxu0 %v6953
    %7140 = vmatprep.subr.bf16.mxu0 0
    %7141 = vmatpush1.bf16.msra.mxu0 %v6954
    %7142 = vmatprep.subr.bf16.mxu0 0
    %7143 = vmatpush1.bf16.msra.mxu0 %v6955
    %7144 = vmatprep.subr.bf16.mxu0 0
    %7145 = vmatpush1.bf16.msra.mxu0 %v6956
    %7146 = vmatprep.subr.bf16.mxu0 0
    %7147 = vmatpush1.bf16.msra.mxu0 %v6957
    %7148 = vmatprep.subr.bf16.mxu0 0
    %7149 = vmatpush1.bf16.msra.mxu0 %v6958
    %7150 = vmatprep.subr.bf16.mxu0 0
    %7151 = vmatpush1.bf16.msra.mxu0 %v6959
    %7152 = vmatprep.subr.bf16.mxu0 0
    %7153 = vmatpush1.bf16.msra.mxu0 %v6960
    %7154 = vmatprep.subr.bf16.mxu0 0
    %7155 = vmatpush1.bf16.msra.mxu0 %v6961
    %7156 = vmatprep.subr.bf16.mxu0 0
    %7157 = vmatpush1.bf16.msra.mxu0 %v6962
    %7158 = vmatprep.subr.bf16.mxu0 0
    %7159 = vmatpush1.bf16.msra.mxu0 %v6963
    %7160 = vmatprep.subr.bf16.mxu0 0
    %7161 = vmatpush1.bf16.msra.mxu0 %v6964
    %7162 = vmatprep.subr.bf16.mxu0 0
    %7163 = vmatpush1.bf16.msra.mxu0 %v6965
    %7164 = vmatprep.subr.bf16.mxu0 0
    %7165 = vmatpush1.bf16.msra.mxu0 %v6966
    %7166 = vmatprep.subr.bf16.mxu0 0
    %7167 = vmatpush1.bf16.msra.mxu0 %v6967
    %7168 = vmatprep.mubr.bf16.mxu0 %v6442
    %7169 = vmatmul.mubr.bf16.gmra.mrb[0].mxu0 %v6441
    %v7170 = vpop.f32.mrb[0].mxu0
    %v7171 = vadd.f32 %v7131, %v7170
    %v7172 = vpop.f32.mrb[0].mxu0
    %v7173 = vpop.f32.mrb[0].mxu0
    %v7174 = vpop.f32.mrb[0].mxu0
    %7175 = vdwg.mxu0
    %7176 = vmatprep.subr.bf16.mxu0 0
    %7177 = vmatpush1.bf16.msra.mxu0 %v6968
    %7178 = vmatprep.subr.bf16.mxu0 0
    %7179 = vmatpush1.bf16.msra.mxu0 %v6969
    %7180 = vmatprep.subr.bf16.mxu0 0
    %7181 = vmatpush1.bf16.msra.mxu0 %v6970
    %7182 = vmatprep.subr.bf16.mxu0 0
    %7183 = vmatpush1.bf16.msra.mxu0 %v6971
    %7184 = vmatprep.subr.bf16.mxu0 0
    %7185 = vmatpush1.bf16.msra.mxu0 %v6972
    %7186 = vmatprep.subr.bf16.mxu0 0
    %7187 = vmatpush1.bf16.msra.mxu0 %v6973
    %7188 = vmatprep.subr.bf16.mxu0 0
    %7189 = vmatpush1.bf16.msra.mxu0 %v6974
    %7190 = vmatprep.subr.bf16.mxu0 0
    %7191 = vmatpush1.bf16.msra.mxu0 %v6975
    %7192 = vmatprep.subr.bf16.mxu0 0
    %7193 = vmatpush1.bf16.msra.mxu0 %v6976
    %7194 = vmatprep.subr.bf16.mxu0 0
    %7195 = vmatpush1.bf16.msra.mxu0 %v6977
    %7196 = vmatprep.subr.bf16.mxu0 0
    %7197 = vmatpush1.bf16.msra.mxu0 %v6978
    %7198 = vmatprep.subr.bf16.mxu0 0
    %7199 = vmatpush1.bf16.msra.mxu0 %v6979
    %7200 = vmatprep.subr.bf16.mxu0 0
    %7201 = vmatpush1.bf16.msra.mxu0 %v6980
    %7202 = vmatprep.subr.bf16.mxu0 0
    %7203 = vmatpush1.bf16.msra.mxu0 %v6981
    %7204 = vmatprep.subr.bf16.mxu0 0
    %7205 = vmatpush1.bf16.msra.mxu0 %v6982
    %7206 = vmatprep.subr.bf16.mxu0 0
    %7207 = vmatpush1.bf16.msra.mxu0 %v6983
    %7208 = vmatprep.mubr.bf16.mxu0 %v6444
    %7209 = vmatmul.mubr.bf16.gmra.mrb[0].mxu0 %v6443
    %v7210 = vpop.f32.mrb[0].mxu0
    %v7211 = vadd.f32 %v7171, %v7210
    %v7212 = vpop.f32.mrb[0].mxu0
    %v7213 = vpop.f32.mrb[0].mxu0
    %v7214 = vpop.f32.mrb[0].mxu0
    %7215 = vdwg.mxu0
    %7216 = vmatprep.subr.bf16.mxu0 0
    %7217 = vmatpush1.bf16.msra.mxu0 %v6984
    %7218 = vmatprep.subr.bf16.mxu0 0
    %7219 = vmatpush1.bf16.msra.mxu0 %v6985
    %7220 = vmatprep.subr.bf16.mxu0 0
    %7221 = vmatpush1.bf16.msra.mxu0 %v6986
    %7222 = vmatprep.subr.bf16.mxu0 0
    %7223 = vmatpush1.bf16.msra.mxu0 %v6987
    %7224 = vmatprep.subr.bf16.mxu0 0
    %7225 = vmatpush1.bf16.msra.mxu0 %v6988
    %7226 = vmatprep.subr.bf16.mxu0 0
    %7227 = vmatpush1.bf16.msra.mxu0 %v6989
    %7228 = vmatprep.subr.bf16.mxu0 0
    %7229 = vmatpush1.bf16.msra.mxu0 %v6990
    %7230 = vmatprep.subr.bf16.mxu0 0
    %7231 = vmatpush1.bf16.msra.mxu0 %v6991
    %7232 = vmatprep.subr.bf16.mxu0 0
    %7233 = vmatpush1.bf16.msra.mxu0 %v6992
    %7234 = vmatprep.subr.bf16.mxu0 0
    %7235 = vmatpush1.bf16.msra.mxu0 %v6993
    %7236 = vmatprep.subr.bf16.mxu0 0
    %7237 = vmatpush1.bf16.msra.mxu0 %v6994
    %7238 = vmatprep.subr.bf16.mxu0 0
    %7239 = vmatpush1.bf16.msra.mxu0 %v6995
    %7240 = vmatprep.subr.bf16.mxu0 0
    %7241 = vmatpush1.bf16.msra.mxu0 %v6996
    %7242 = vmatprep.subr.bf16.mxu0 0
    %7243 = vmatpush1.bf16.msra.mxu0 %v6997
    %7244 = vmatprep.subr.bf16.mxu0 0
    %7245 = vmatpush1.bf16.msra.mxu0 %v6998
    %7246 = vmatprep.subr.bf16.mxu0 0
    %7247 = vmatpush1.bf16.msra.mxu0 %v6999
    %7248 = vmatprep.mubr.bf16.mxu0 %v6446
    %7249 = vmatmul.mubr.bf16.gmra.mrb[0].mxu0 %v6445
    %v7250 = vpop.f32.mrb[0].mxu0
    %v7251 = vadd.f32 %v7211, %v7250
    %v7252 = vpop.f32.mrb[0].mxu0
    %v7253 = vpop.f32.mrb[0].mxu0
    %v7254 = vpop.f32.mrb[0].mxu0
    %7255 = vdwg.mxu0
    %7256 = vmatprep.subr.bf16.mxu0 0
    %7257 = vmatpush1.bf16.msra.mxu0 %v7000
    %7258 = vmatprep.subr.bf16.mxu0 0
    %7259 = vmatpush1.bf16.msra.mxu0 %v7001
    %7260 = vmatprep.subr.bf16.mxu0 0
    %7261 = vmatpush1.bf16.msra.mxu0 %v7002
    %7262 = vmatprep.subr.bf16.mxu0 0
    %7263 = vmatpush1.bf16.msra.mxu0 %v7003
    %7264 = vmatprep.subr.bf16.mxu0 0
    %7265 = vmatpush1.bf16.msra.mxu0 %v7004
    %7266 = vmatprep.subr.bf16.mxu0 0
    %7267 = vmatpush1.bf16.msra.mxu0 %v7005
    %7268 = vmatprep.subr.bf16.mxu0 0
    %7269 = vmatpush1.bf16.msra.mxu0 %v7006
    %7270 = vmatprep.subr.bf16.mxu0 0
    %7271 = vmatpush1.bf16.msra.mxu0 %v7007
    %7272 = vmatprep.subr.bf16.mxu0 0
    %7273 = vmatpush1.bf16.msra.mxu0 %v7008
    %7274 = vmatprep.subr.bf16.mxu0 0
    %7275 = vmatpush1.bf16.msra.mxu0 %v7009
    %7276 = vmatprep.subr.bf16.mxu0 0
    %7277 = vmatpush1.bf16.msra.mxu0 %v7010
    %7278 = vmatprep.subr.bf16.mxu0 0
    %7279 = vmatpush1.bf16.msra.mxu0 %v7011
    %7280 = vmatprep.subr.bf16.mxu0 0
    %7281 = vmatpush1.bf16.msra.mxu0 %v7012
    %7282 = vmatprep.subr.bf16.mxu0 0
    %7283 = vmatpush1.bf16.msra.mxu0 %v7013
    %7284 = vmatprep.subr.bf16.mxu0 0
    %7285 = vmatpush1.bf16.msra.mxu0 %v7014
    %7286 = vmatprep.subr.bf16.mxu0 0
    %7287 = vmatpush1.bf16.msra.mxu0 %v7015
    %7288 = vmatprep.mubr.bf16.mxu0 %v6448
    %7289 = vmatmul.mubr.bf16.gmra.mrb[0].mxu0 %v6447
    %v7290 = vpop.f32.mrb[0].mxu0
    %v7291 = vadd.f32 %v7251, %v7290
    %v7292 = vpop.f32.mrb[0].mxu0
    %v7293 = vpop.f32.mrb[0].mxu0
    %v7294 = vpop.f32.mrb[0].mxu0
    %7295 = vdwg.mxu0
    %v7296 = vxor.u32 %v7291, 2147483648
    %v7297 = vmul.f32 %v7296, 1.442695
    %v7298 = vpow.pop %v7297
    %v7299 = vadd.f32 %v7298, 1.0
    %v7300 = vrcp.pop %v7299
    %v7301 = vmul.f32 1.0, %v7300
    %7302 = vst [vmem:[#allocation20] sm:$0xff] %v7301
    // Predicated region
    $region90: #{tpu_custom_call.1} parent=1 // pred_check
      _
    $region91: #{tpu_custom_call.1} parent=1 // pred_check_branch
      %7304 = sbr.rel (0) target = $region93
    $region92: #{tpu_custom_call.1} parent=1 // pred_region
      %s7306 = ssub.s32 128, 128
      %7307 = vsyncadd [#allocation4], %s7306
      %s7309 = sshll.u32 [#allocation20], 4
      %s7310 = int_to_ptr.vmem [resolvable:$true] %s7309
      %7312 = dma.vmem_to_hbm [thread:$0]  %s7310, 128, %s11, [#allocation4]
    $region93: #{tpu_custom_call.1} parent=1 // pred_fallthru
      _
    // Predicated region
    $region94: #{tpu_custom_call.1} parent=1 // pred_check
      _
    $region95: #{tpu_custom_call.1} parent=1 // pred_check_branch
      %7314 = sbr.rel (0) target = $region97
    $region96: #{tpu_custom_call.1} parent=1 // pred_region
      %7315 = dma.done [#allocation4], 128
    $region97: #{tpu_custom_call.1} parent=1 // pred_fallthru
      _
    %7316 = vsyncpa [#allocation3], 1
    %7317 = vsyncpa [#allocation6], 1
    %7318 = vsyncpa [#allocation9], 1
    %7319 = vsyncpa [#allocation12], 1
    %7320 = vsyncpa [#allocation15], 1
    %7321 = vsyncpa [#allocation18], 1
    %7322 = vsyncpa [#allocation4], 1

</llo_original>
